<compile_context>
chip_gen: v7x
topology: tpu7x:2x2x1
jax: 0.10.0
libtpu: 0.0.40
codegen_flags: <defaults>
</compile_context>

<pallas_src>
import functools

import jax
import jax.numpy as jnp
from jax.experimental import pallas as pl
from jax.experimental.pallas import tpu as pltpu

BN_EPS = 0.0                       # nn.BatchNorm2d(C, False) -> eps == 0.0
MXU_INPUT_DTYPE = jnp.float32      # jnp.bfloat16 recommended on v6e/v7x (see header)


def _elu(x):
    return jnp.where(x > 0.0, x, jnp.exp(jnp.minimum(x, 0.0)) - 1.0)


def _dot(a, b):
    """MXU matmul with optional bf16 operand cast, f32 accumulation."""
    return jnp.dot(a.astype(MXU_INPUT_DTYPE), b.astype(MXU_INPUT_DTYPE),
                   preferred_element_type=jnp.float32)


def _dims(N, T):
    W2 = T + 2                         # conv2 output width
    Wp2 = T // 4 + 1                   # pool2 output width (== conv3 output width)
    Wp3 = (Wp2 - 4) // 4 + 1           # pool3 output width
    fc_in = 4 * 2 * Wp3                # flattened feature size
    return dict(
        NT=N * T, W2=W2, Wp2=Wp2, Wp3=Wp3, fc_in=fc_in,
        SELW=2 * N * 128,              # pool-selected conv2 cols (128-padded/sample)
        FULLW=N * 4 * W2,              # all conv2 cols (BN2 statistics)
        POOLW=8 * fc_in,               # pool-friendly conv3 cols
        FULL3W=4 * 4 * Wp2,            # all conv3 cols (BN3 statistics)
    )


# ---------------------------------------------------------------------------
# The single fused kernel (no scratch; everything stays in vregs/VMEM values)
# ---------------------------------------------------------------------------
def _eegnet_kernel(xt_ref, w1_ref, b1_ref, bank2_ref, b2vec_ref, m2_ref,
                   vg2_ref, g3_ref, b3vec_ref, m3_ref, wfc_ref, bfc_ref,
                   out_ref, *, N, T):
    f32 = jnp.float32
    d = _dims(N, T)
    NT, SELW, fc_in, POOLW = d["NT"], d["SELW"], d["fc_in"], d["POOLW"]

    # -------- Stage 1: conv1 (1 x D) + ELU + BN1, lane-dense (16, N*T) -------
    y1 = _dot(w1_ref[...], xt_ref[...]) + b1_ref[...]
    y1 = _elu(y1)
    m1 = jnp.mean(y1, axis=1, keepdims=True)
    v1 = jnp.maximum(jnp.mean(y1 * y1, axis=1, keepdims=True) - m1 * m1, 0.0)
    y1 = (y1 - m1) * jax.lax.rsqrt(v1 + BN_EPS)
    # TODO(synk): F.dropout(p=0.25) -> identity (see header).

    # -------- Stage 2: conv2 (2 x 32); padding1 is folded into the bank ------
    # dh=1 operand = rows shifted up by one, appended zero row (bottom pad).
    # Stacking it along lanes makes conv2 ONE matmul with K = 2*N*T.
    y1_dn = jnp.concatenate([y1[1:, :], jnp.zeros((1, NT), f32)], axis=0)
    l2 = jnp.concatenate([y1, y1_dn], axis=1)                    # (16, 2*N*T)
    y2 = _dot(l2, bank2_ref[...]) + b2vec_ref[...]               # (16, SELW+FULLW)

    # BN2 statistics from the full (all output positions) columns.
    y2f = _elu(y2[:, SELW:])
    stats2 = jnp.concatenate([jnp.sum(y2f, axis=0, keepdims=True),
                              jnp.sum(y2f * y2f, axis=0, keepdims=True)], axis=0)
    sm2 = jnp.dot(stats2, m2_ref[...], preferred_element_type=f32)  # (2, 128)
    mean2 = sm2[0:1, :]
    inv2 = jax.lax.rsqrt(
        jnp.maximum(sm2[1:2, :] - mean2 * mean2, 0.0) + vg2_ref[...])

    # MaxPool2d(2, 4) on the selected columns (raw conv output; ELU and the
    # positive-scale BN are monotone so pooling first is exact), then assemble
    # the conv3 input U fully in registers: U[n, ho*128 + ci*Wp2 + wo].
    rows = []
    for n in range(N):
        r0 = y2[:, n * 128:(n + 1) * 128]                 # w = 4*wo      (16, 128)
        r1 = y2[:, (N + n) * 128:(N + n + 1) * 128]       # w = 4*wo + 1
        mw = jnp.maximum(r0, r1)
        rows.append(jnp.concatenate(
            [jnp.maximum(mw[4 * ho:4 * ho + 1, :], mw[4 * ho + 1:4 * ho + 2, :])
             for ho in range(4)], axis=1))                # (1, 512)
    u_raw = jnp.concatenate(rows, axis=0)                 # (N, 512)
    mean2t = jnp.concatenate([mean2] * 4, axis=1)
    inv2t = jnp.concatenate([inv2] * 4, axis=1)
    u = (_elu(u_raw) - mean2t) * inv2t                    # BN2; pad lanes stay 0

    # -------- Stage 3: conv3 (4 x 8 x 4); padding2 folded into the bank ------
    y3 = _dot(u, g3_ref[...]) + b3vec_ref[...]            # (N, POOLW+FULL3W)
    y3f = _elu(y3[:, POOLW:])
    stats3 = jnp.concatenate([jnp.sum(y3f, axis=0, keepdims=True),
                              jnp.sum(y3f * y3f, axis=0, keepdims=True)], axis=0)
    sm3 = jnp.dot(stats3, m3_ref[...], preferred_element_type=f32)  # (2, fc_in)
    mean3 = sm3[0:1, :]
    inv3 = jax.lax.rsqrt(jnp.maximum(sm3[1:2, :] - mean3 * mean3, 0.0) + BN_EPS)

    pooled3 = y3[:, 0:fc_in]                              # MaxPool2d((2, 4))
    for k in range(1, 8):
        pooled3 = jnp.maximum(pooled3, y3[:, k * fc_in:(k + 1) * fc_in])
    flat = (_elu(pooled3) - mean3) * inv3                 # (N, fc_in)

    # -------- fc1 -------------------------------------------------------------
    out_ref[...] = _dot(flat, wfc_ref[...]) + bfc_ref[...]


# ---------------------------------------------------------------------------
# Host-side (weight-only) operand preparation: padding baked into the banks
# ---------------------------------------------------------------------------
def _build_operands(params, N, T, D):
    f32 = jnp.float32
    d = _dims(N, T)
    NT, W2, Wp2, Wp3 = d["NT"], d["W2"], d["Wp2"], d["Wp3"]
    fc_in, SELW, FULLW = d["fc_in"], d["SELW"], d["FULLW"]
    POOLW, FULL3W = d["POOLW"], d["FULL3W"]

    # conv1
    w1 = params["w1"].reshape(16, D).astype(f32)
    b1 = params["b1"].reshape(16, 1).astype(f32)

    # ---- conv2 bank: rows s*NT + n*T + t  (s = kernel row dh, block-diag in n)
    w2 = params["w2"][:, 0].astype(f32)                     # (co, dh, dw)
    b2 = params["b2"].astype(f32)
    rr = jnp.arange(2 * NT)
    s_r, n_r, t_r = rr // NT, (rr % NT) // T, rr % T

    # pool-selected columns: r*(N*128) + n*128 + co*Wp2 + wo   (lanes>=4*Wp2 pad)
    cs = jnp.arange(SELW)
    r_c = cs // (N * 128)
    n_c = (cs % (N * 128)) // 128
    lane = cs % 128
    co_c = jnp.clip(lane // Wp2, 0, 3)
    wo_c = lane % Wp2
    lane_ok = lane < 4 * Wp2
    w_pos = 4 * wo_c + r_c                                   # conv2 output w
    dwS = 16 + t_r[:, None] - w_pos[None, :]
    okS = (dwS >= 0) & (dwS < 32) & (n_r[:, None] == n_c[None, :]) & lane_ok[None, :]
    bank_sel = jnp.where(okS, w2[co_c[None, :], s_r[:, None],
                                 jnp.clip(dwS, 0, 31)], 0.0)

    # full columns: n*(4*W2) + co*W2 + w   (BN2 statistics)
    cf = jnp.arange(FULLW)
    n_f, co_f, w_f = cf // (4 * W2), (cf % (4 * W2)) // W2, cf % W2
    dwF = 16 + t_r[:, None] - w_f[None, :]
    okF = (dwF >= 0) & (dwF < 32) & (n_r[:, None] == n_f[None, :])
    bank_full = jnp.where(okF, w2[co_f[None, :], s_r[:, None],
                                  jnp.clip(dwF, 0, 31)], 0.0)

    bank2 = jnp.concatenate([bank_sel, bank_full], axis=1).astype(f32)
    b2vec = jnp.concatenate([jnp.where(lane_ok, b2[co_c], 0.0),
                             b2[co_f]])[None, :].astype(f32)

    # per-channel averaging for BN2 stats on the 128-lane pooled layout; pad
    # lanes get mean 0 and an rsqrt guard of 1.0 so they stay exactly zero.
    jl = jnp.arange(128)
    co_j = jnp.where(jl < 4 * Wp2, jl // Wp2, -1)
    m2 = (co_f[:, None] == co_j[None, :]).astype(f32) / (N * 16 * W2)
    vg2 = jnp.where(jl < 4 * Wp2, BN_EPS, 1.0)[None, :].astype(f32)

    # ---- conv3 bank: rows = U index ho*128 + ci*Wp2 + wo ---------------------
    w3 = params["w3"].astype(f32)                            # (c3, ci, kh, kw)
    b3 = params["b3"].astype(f32)
    ur = jnp.arange(4 * 128)
    ho_r, ulane = ur // 128, ur % 128
    ci_r = jnp.clip(ulane // Wp2, 0, 3)
    wo_r = ulane % Wp2
    urow_ok = ulane < 4 * Wp2

    # pool-friendly columns: (dh*4+dw)*fc_in + c3*(2*Wp3) + po*Wp3 + qo
    cp = jnp.arange(POOLW)
    blk, rem = cp // fc_in, cp % fc_in
    dh_p, dw_p = blk // 4, blk % 4
    c3_p = rem // (2 * Wp3)
    po, qo = (rem % (2 * Wp3)) // Wp3, rem % Wp3
    h3_p, w3_p = 2 * po + dh_p, 4 * qo + dw_p
    khP = ho_r[:, None] + 4 - h3_p[None, :]
    kwP = wo_r[:, None] + 2 - w3_p[None, :]
    okP = (khP >= 0) & (khP < 8) & (kwP >= 0) & (kwP < 4) & urow_ok[:, None]
    g3_pool = jnp.where(okP, w3[c3_p[None, :], ci_r[:, None],
                                jnp.clip(khP, 0, 7), jnp.clip(kwP, 0, 3)], 0.0)

    # full columns: c3*(4*Wp2) + h3*Wp2 + w3   (BN3 statistics)
    cf3 = jnp.arange(FULL3W)
    c3_f = cf3 // (4 * Wp2)
    h3_f = (cf3 % (4 * Wp2)) // Wp2
    w3_f = cf3 % Wp2
    khF = ho_r[:, None] + 4 - h3_f[None, :]
    kwF = wo_r[:, None] + 2 - w3_f[None, :]
    okF3 = (khF >= 0) & (khF < 8) & (kwF >= 0) & (kwF < 4) & urow_ok[:, None]
    g3_full = jnp.where(okF3, w3[c3_f[None, :], ci_r[:, None],
                                 jnp.clip(khF, 0, 7), jnp.clip(kwF, 0, 3)], 0.0)

    g3 = jnp.concatenate([g3_pool, g3_full], axis=1).astype(f32)
    b3vec = jnp.concatenate([b3[c3_p], b3[c3_f]])[None, :].astype(f32)
    m3 = (c3_f[:, None] == (jnp.arange(fc_in) // (2 * Wp3))[None, :]
          ).astype(f32) / (N * 4 * Wp2)

    wfc = params["wfc"].T.astype(f32)
    bfc = params["bfc"][None, :].astype(f32)

    return (w1, b1, bank2, b2vec, m2, vg2, g3, b3vec, m3, wfc, bfc)


def _full_spec(shape):
    nd = len(shape)
    return pl.BlockSpec(shape, lambda i, _nd=nd: (0,) * _nd)


# ---------------------------------------------------------------------------
# Full EEGNet forward: one pallas_call, no scratch
# ---------------------------------------------------------------------------
def eegnet_forward(x, params):
    N, T, D = x.shape
    out_dim = params["bfc"].shape[0]
    d = _dims(N, T)
    assert 4 * d["Wp2"] <= 128, "pooled conv2 row must fit in one 128-lane block"

    # Lane-dense kernel input: XT[d, n*T + t] = x[n, t, d].
    xt = jnp.transpose(x, (2, 0, 1)).reshape(D, N * T).astype(jnp.float32)
    ops = (xt,) + _build_operands(params, N, T, D)

    c2 = d["SELW"] + d["FULLW"]
    c3 = d["POOLW"] + d["FULL3W"]
    flops = 2 * (16 * D * d["NT"] + 16 * 2 * d["NT"] * c2
                 + 2 * d["FULLW"] * 128 + N * 512 * c3
                 + 2 * d["FULL3W"] * d["fc_in"] + N * d["fc_in"] * out_dim)
    transcendentals = (16 * d["NT"] + 16 * d["FULLW"]
                       + N * (512 + d["FULL3W"] + d["fc_in"]))
    bytes_accessed = int(sum(int(o.size) * o.dtype.itemsize for o in ops)
                         + N * out_dim * 4)

    kernel = functools.partial(_eegnet_kernel, N=N, T=T)
    return pl.pallas_call(
        kernel,
        out_shape=jax.ShapeDtypeStruct((N, out_dim), jnp.float32),
        grid=(1,),
        in_specs=[_full_spec(o.shape) for o in ops],
        out_specs=_full_spec((N, out_dim)),
        compiler_params=pltpu.CompilerParams(
            dimension_semantics=("arbitrary",)),
        cost_estimate=pl.CostEstimate(
            flops=int(flops), transcendentals=int(transcendentals),
            bytes_accessed=bytes_accessed),
    )(*ops)


# ---------------------------------------------------------------------------
# Pure-JAX reference (same semantics; dropout == identity) for validation
# ---------------------------------------------------------------------------
def _reference_forward(x, params):
    N = x.shape[0]
    hp = jax.lax.Precision.HIGHEST

    def bn(y):  # train-mode BN, biased var, eps=0, identity affine
        m = y.mean(axis=(0, 2, 3), keepdims=True)
        v = ((y - m) ** 2).mean(axis=(0, 2, 3), keepdims=True)
        return (y - m) / jnp.sqrt(v + BN_EPS)

    def conv(y, w, b):
        o = jax.lax.conv_general_dilated(
            y, w, (1, 1), "VALID",
            dimension_numbers=("NCHW", "OIHW", "NCHW"), precision=hp)
        return o + b[None, :, None, None]

    def maxpool(y, kh, kw, sh, sw):
        return jax.lax.reduce_window(y, -jnp.inf, jax.lax.max,
                                     (1, 1, kh, kw), (1, 1, sh, sw), "VALID")

    y = x[:, None, :, :]
    y = bn(_elu(conv(y, params["w1"], params["b1"])))
    y = jnp.transpose(y, (0, 3, 1, 2))
    y = jnp.pad(y, ((0, 0), (0, 0), (0, 1), (16, 17)))
    y = bn(_elu(conv(y, params["w2"], params["b2"])))
    y = maxpool(y, 2, 2, 4, 4)
    y = jnp.pad(y, ((0, 0), (0, 0), (4, 3), (2, 1)))
    y = bn(_elu(conv(y, params["w3"], params["b3"])))
    y = maxpool(y, 2, 4, 2, 4)
    flat = y.reshape(N, -1)
    return jnp.dot(flat, params["wfc"].T, precision=hp) + params["bfc"][None, :]


# ---------------------------------------------------------------------------
# Deterministic parameter init (PyTorch-native layouts)
# ---------------------------------------------------------------------------
def init_params(key, input_dim, T, out_dim):
    ks = jax.random.split(key, 8)
    fc_in = 4 * 2 * (T // 16)
    return {
        "w1": jax.random.normal(ks[0], (16, 1, 1, input_dim), jnp.float32) * 0.1,
        "b1": jax.random.normal(ks[1], (16,), jnp.float32) * 0.1,
        "w2": jax.random.normal(ks[2], (4, 1, 2, 32), jnp.float32) * 0.1,
        "b2": jax.random.normal(ks[3], (4,), jnp.float32) * 0.1,
        "w3": jax.random.normal(ks[4], (4, 4, 8, 4), jnp.float32) * 0.1,
        "b3": jax.random.normal(ks[5], (4,), jnp.float32) * 0.1,
        "wfc": jax.random.normal(ks[6], (out_dim, fc_in), jnp.float32) * 0.1,
        "bfc": jax.random.normal(ks[7], (out_dim,), jnp.float32) * 0.1,
    }


if __name__ == "__main__":
    N, T, INPUT_DIM, OUT_DIM = 2, 64, 16, 4  # config.T=64, input_dim=16, out_dim=4

    key = jax.random.PRNGKey(0)
    xk, pk = jax.random.split(key)
    x = jax.random.normal(xk, (N, T, INPUT_DIM), jnp.float32)
    params = init_params(pk, INPUT_DIM, T, OUT_DIM)

    fwd = jax.jit(eegnet_forward)
    out = fwd(x, params)
    jax.block_until_ready(out)

    assert out.shape == (N, OUT_DIM), out.shape
    assert bool(jnp.all(jnp.isfinite(out)))

    # Validate against the plain-JAX reference.  Bound reflects worst-case
    # default-precision MXU operand rounding (genuine indexing/semantic bugs
    # produce O(1) errors, far above this); bf16 operand mode gets a looser
    # bound since BN renormalizes but rounding accumulates across stages.
    ref = jax.jit(_reference_forward)(x, params)
    tol = 2e-2 if MXU_INPUT_DTYPE == jnp.float32 else 5e-2
    max_err = float(jnp.max(jnp.abs(out - ref)))
    assert max_err < tol, f"mismatch vs reference: {max_err}"

    print("KERNEL_OK")
</pallas_src>

<mosaic_0001>
module attributes {stable_mosaic.version = 11 : i64} {
  func.func @_eegnet_kernel(%arg0: i32, %arg1: memref<16x128xf32, #tpu.memory_space<vmem>>, %arg2: memref<16x16xf32, #tpu.memory_space<vmem>>, %arg3: memref<16x1xf32, #tpu.memory_space<vmem>>, %arg4: memref<256x1040xf32, #tpu.memory_space<vmem>>, %arg5: memref<1x1040xf32, #tpu.memory_space<vmem>>, %arg6: memref<528x128xf32, #tpu.memory_space<vmem>>, %arg7: memref<1x128xf32, #tpu.memory_space<vmem>>, %arg8: memref<512x528xf32, #tpu.memory_space<vmem>>, %arg9: memref<1x528xf32, #tpu.memory_space<vmem>>, %arg10: memref<272x32xf32, #tpu.memory_space<vmem>>, %arg11: memref<32x4xf32, #tpu.memory_space<vmem>>, %arg12: memref<1x4xf32, #tpu.memory_space<vmem>>, %arg13: memref<2x4xf32, #tpu.memory_space<vmem>>) attributes {dimension_semantics = [#tpu.dimension_semantics<arbitrary>], iteration_bounds = array<i64: 1>, scalar_prefetch = 0 : i64, scratch_operands = 0 : i64, tpu.core_type = #tpu.core_type<tc>, window_params = [{pipeline_mode = #tpu.pipeline_mode<synchronous>, transform_indices = @transform_0, window_bounds = array<i64: 16, 128>}, {pipeline_mode = #tpu.pipeline_mode<synchronous>, transform_indices = @transform_1, window_bounds = array<i64: 16, 16>}, {pipeline_mode = #tpu.pipeline_mode<synchronous>, transform_indices = @transform_2, window_bounds = array<i64: 16, 1>}, {pipeline_mode = #tpu.pipeline_mode<synchronous>, transform_indices = @transform_3, window_bounds = array<i64: 256, 1040>}, {pipeline_mode = #tpu.pipeline_mode<synchronous>, transform_indices = @transform_4, window_bounds = array<i64: 1, 1040>}, {pipeline_mode = #tpu.pipeline_mode<synchronous>, transform_indices = @transform_5, window_bounds = array<i64: 528, 128>}, {pipeline_mode = #tpu.pipeline_mode<synchronous>, transform_indices = @transform_6, window_bounds = array<i64: 1, 128>}, {pipeline_mode = #tpu.pipeline_mode<synchronous>, transform_indices = @transform_7, window_bounds = array<i64: 512, 528>}, {pipeline_mode = #tpu.pipeline_mode<synchronous>, transform_indices = @transform_8, window_bounds = array<i64: 1, 528>}, {pipeline_mode = #tpu.pipeline_mode<synchronous>, transform_indices = @transform_9, window_bounds = array<i64: 272, 32>}, {pipeline_mode = #tpu.pipeline_mode<synchronous>, transform_indices = @transform_10, window_bounds = array<i64: 32, 4>}, {pipeline_mode = #tpu.pipeline_mode<synchronous>, transform_indices = @transform_11, window_bounds = array<i64: 1, 4>}, {pipeline_mode = #tpu.pipeline_mode<synchronous>, transform_indices = @transform_12, window_bounds = array<i64: 2, 4>}]} {
    %c0 = arith.constant 0 : index
    %c0_0 = arith.constant 0 : index
    %0 = vector.load %arg2[%c0, %c0_0] : memref<16x16xf32, #tpu.memory_space<vmem>>, vector<16x16xf32>
    %c0_1 = arith.constant 0 : index
    %c0_2 = arith.constant 0 : index
    %1 = vector.load %arg1[%c0_1, %c0_2] : memref<16x128xf32, #tpu.memory_space<vmem>>, vector<16x128xf32>
    %cst = arith.constant dense<0.000000e+00> : vector<16x128xf32>
    %2 = tpu.matmul %0, %1, %cst {dimension_numbers = #tpu.dot_dimension_numbers<[1], [0], [0], [1], [0, 0, 1, 1], [], []>} : vector<16x16xf32>, vector<16x128xf32>, vector<16x128xf32> -> vector<16x128xf32>
    %c0_3 = arith.constant 0 : index
    %c0_4 = arith.constant 0 : index
    %3 = vector.load %arg3[%c0_3, %c0_4] : memref<16x1xf32, #tpu.memory_space<vmem>>, vector<16x1xf32>
    %4 = vector.broadcast %3 : vector<16x1xf32> to vector<16x128xf32>
    %5 = arith.addf %2, %4 : vector<16x128xf32>
    %cst_5 = arith.constant 0.000000e+00 : f32
    %6 = vector.broadcast %cst_5 : f32 to vector<16x128xf32>
    %7 = arith.cmpf ogt, %5, %6 : vector<16x128xf32>
    %cst_6 = arith.constant 0.000000e+00 : f32
    %8 = vector.broadcast %cst_6 : f32 to vector<16x128xf32>
    %9 = arith.minimumf %5, %8 : vector<16x128xf32>
    %10 = math.exp %9 : vector<16x128xf32>
    %cst_7 = arith.constant 1.000000e+00 : f32
    %11 = vector.broadcast %cst_7 : f32 to vector<16x128xf32>
    %12 = arith.subf %10, %11 : vector<16x128xf32>
    %13 = arith.select %7, %5, %12 : vector<16x128xi1>, vector<16x128xf32>
    %cst_8 = arith.constant dense<0.000000e+00> : vector<16xf32>
    %14 = vector.multi_reduction <add>, %13, %cst_8 [1] : vector<16x128xf32> to vector<16xf32>
    %15 = vector.shape_cast %14 : vector<16xf32> to vector<16x1xf32>
    %cst_9 = arith.constant 1.280000e+02 : f32
    %16 = vector.broadcast %cst_9 : f32 to vector<16x1xf32>
    %17 = arith.divf %15, %16 : vector<16x1xf32>
    %18 = arith.mulf %13, %13 : vector<16x128xf32>
    %cst_10 = arith.constant dense<0.000000e+00> : vector<16xf32>
    %19 = vector.multi_reduction <add>, %18, %cst_10 [1] : vector<16x128xf32> to vector<16xf32>
    %20 = vector.shape_cast %19 : vector<16xf32> to vector<16x1xf32>
    %cst_11 = arith.constant 1.280000e+02 : f32
    %21 = vector.broadcast %cst_11 : f32 to vector<16x1xf32>
    %22 = arith.divf %20, %21 : vector<16x1xf32>
    %23 = arith.mulf %17, %17 : vector<16x1xf32>
    %24 = arith.subf %22, %23 : vector<16x1xf32>
    %cst_12 = arith.constant 0.000000e+00 : f32
    %25 = vector.broadcast %cst_12 : f32 to vector<16x1xf32>
    %26 = arith.maximumf %24, %25 : vector<16x1xf32>
    %27 = vector.broadcast %17 : vector<16x1xf32> to vector<16x128xf32>
    %28 = arith.subf %13, %27 : vector<16x128xf32>
    %cst_13 = arith.constant 0.000000e+00 : f32
    %29 = vector.broadcast %cst_13 : f32 to vector<16x1xf32>
    %30 = arith.addf %26, %29 : vector<16x1xf32>
    %31 = math.rsqrt %30 : vector<16x1xf32>
    %32 = vector.broadcast %31 : vector<16x1xf32> to vector<16x128xf32>
    %33 = arith.mulf %28, %32 : vector<16x128xf32>
    %34 = vector.extract_strided_slice %33 {offsets = [1, 0], sizes = [15, 128], strides = [1, 1]} : vector<16x128xf32> to vector<15x128xf32>
    %cst_14 = arith.constant 0.000000e+00 : f32
    %35 = vector.broadcast %cst_14 : f32 to vector<1x128xf32>
    %36 = tpu.concatenate %34, %35 in 0 : vector<15x128xf32>, vector<1x128xf32> -> vector<16x128xf32>
    %37 = tpu.concatenate %33, %36 in 1 : vector<16x128xf32>, vector<16x128xf32> -> vector<16x256xf32>
    %c0_15 = arith.constant 0 : index
    %c0_16 = arith.constant 0 : index
    %38 = vector.load %arg4[%c0_15, %c0_16] : memref<256x1040xf32, #tpu.memory_space<vmem>>, vector<256x1040xf32>
    %cst_17 = arith.constant dense<0.000000e+00> : vector<16x1040xf32>
    %39 = tpu.matmul %37, %38, %cst_17 {dimension_numbers = #tpu.dot_dimension_numbers<[1], [0], [0], [1], [0, 0, 1, 1], [], []>} : vector<16x256xf32>, vector<256x1040xf32>, vector<16x1040xf32> -> vector<16x1040xf32>
    %c0_18 = arith.constant 0 : index
    %c0_19 = arith.constant 0 : index
    %40 = vector.load %arg5[%c0_18, %c0_19] : memref<1x1040xf32, #tpu.memory_space<vmem>>, vector<1x1040xf32>
    %41 = vector.broadcast %40 : vector<1x1040xf32> to vector<16x1040xf32>
    %42 = arith.addf %39, %41 : vector<16x1040xf32>
    %43 = vector.extract_strided_slice %42 {offsets = [0, 512], sizes = [16, 528], strides = [1, 1]} : vector<16x1040xf32> to vector<16x528xf32>
    %cst_20 = arith.constant 0.000000e+00 : f32
    %44 = vector.broadcast %cst_20 : f32 to vector<16x528xf32>
    %45 = arith.cmpf ogt, %43, %44 : vector<16x528xf32>
    %cst_21 = arith.constant 0.000000e+00 : f32
    %46 = vector.broadcast %cst_21 : f32 to vector<16x528xf32>
    %47 = arith.minimumf %43, %46 : vector<16x528xf32>
    %48 = math.exp %47 : vector<16x528xf32>
    %cst_22 = arith.constant 1.000000e+00 : f32
    %49 = vector.broadcast %cst_22 : f32 to vector<16x528xf32>
    %50 = arith.subf %48, %49 : vector<16x528xf32>
    %51 = arith.select %45, %43, %50 : vector<16x528xi1>, vector<16x528xf32>
    %cst_23 = arith.constant dense<0.000000e+00> : vector<528xf32>
    %52 = vector.multi_reduction <add>, %51, %cst_23 [0] : vector<16x528xf32> to vector<528xf32>
    %53 = vector.shape_cast %52 : vector<528xf32> to vector<1x528xf32>
    %54 = arith.mulf %51, %51 : vector<16x528xf32>
    %cst_24 = arith.constant dense<0.000000e+00> : vector<528xf32>
    %55 = vector.multi_reduction <add>, %54, %cst_24 [0] : vector<16x528xf32> to vector<528xf32>
    %56 = vector.shape_cast %55 : vector<528xf32> to vector<1x528xf32>
    %57 = tpu.concatenate %53, %56 in 0 : vector<1x528xf32>, vector<1x528xf32> -> vector<2x528xf32>
    %c0_25 = arith.constant 0 : index
    %c0_26 = arith.constant 0 : index
    %58 = vector.load %arg6[%c0_25, %c0_26] : memref<528x128xf32, #tpu.memory_space<vmem>>, vector<528x128xf32>
    %cst_27 = arith.constant dense<0.000000e+00> : vector<2x128xf32>
    %59 = tpu.matmul %57, %58, %cst_27 {dimension_numbers = #tpu.dot_dimension_numbers<[1], [0], [0], [1], [0, 0, 1, 1], [], []>} : vector<2x528xf32>, vector<528x128xf32>, vector<2x128xf32> -> vector<2x128xf32>
    %60 = vector.extract_strided_slice %59 {offsets = [0, 0], sizes = [1, 128], strides = [1, 1]} : vector<2x128xf32> to vector<1x128xf32>
    %61 = vector.extract_strided_slice %59 {offsets = [1, 0], sizes = [1, 128], strides = [1, 1]} : vector<2x128xf32> to vector<1x128xf32>
    %62 = arith.mulf %60, %60 : vector<1x128xf32>
    %63 = arith.subf %61, %62 : vector<1x128xf32>
    %cst_28 = arith.constant 0.000000e+00 : f32
    %64 = vector.broadcast %cst_28 : f32 to vector<1x128xf32>
    %65 = arith.maximumf %63, %64 : vector<1x128xf32>
    %c0_29 = arith.constant 0 : index
    %c0_30 = arith.constant 0 : index
    %66 = vector.load %arg7[%c0_29, %c0_30] : memref<1x128xf32, #tpu.memory_space<vmem>>, vector<1x128xf32>
    %67 = arith.addf %65, %66 : vector<1x128xf32>
    %68 = math.rsqrt %67 : vector<1x128xf32>
    %69 = vector.extract_strided_slice %42 {offsets = [0, 0], sizes = [16, 128], strides = [1, 1]} : vector<16x1040xf32> to vector<16x128xf32>
    %70 = vector.extract_strided_slice %42 {offsets = [0, 256], sizes = [16, 128], strides = [1, 1]} : vector<16x1040xf32> to vector<16x128xf32>
    %71 = arith.maximumf %69, %70 : vector<16x128xf32>
    %72 = vector.extract_strided_slice %71 {offsets = [0, 0], sizes = [1, 128], strides = [1, 1]} : vector<16x128xf32> to vector<1x128xf32>
    %73 = vector.extract_strided_slice %71 {offsets = [1, 0], sizes = [1, 128], strides = [1, 1]} : vector<16x128xf32> to vector<1x128xf32>
    %74 = arith.maximumf %72, %73 : vector<1x128xf32>
    %75 = vector.extract_strided_slice %71 {offsets = [4, 0], sizes = [1, 128], strides = [1, 1]} : vector<16x128xf32> to vector<1x128xf32>
    %76 = vector.extract_strided_slice %71 {offsets = [5, 0], sizes = [1, 128], strides = [1, 1]} : vector<16x128xf32> to vector<1x128xf32>
    %77 = arith.maximumf %75, %76 : vector<1x128xf32>
    %78 = vector.extract_strided_slice %71 {offsets = [8, 0], sizes = [1, 128], strides = [1, 1]} : vector<16x128xf32> to vector<1x128xf32>
    %79 = vector.extract_strided_slice %71 {offsets = [9, 0], sizes = [1, 128], strides = [1, 1]} : vector<16x128xf32> to vector<1x128xf32>
    %80 = arith.maximumf %78, %79 : vector<1x128xf32>
    %81 = vector.extract_strided_slice %71 {offsets = [12, 0], sizes = [1, 128], strides = [1, 1]} : vector<16x128xf32> to vector<1x128xf32>
    %82 = vector.extract_strided_slice %71 {offsets = [13, 0], sizes = [1, 128], strides = [1, 1]} : vector<16x128xf32> to vector<1x128xf32>
    %83 = arith.maximumf %81, %82 : vector<1x128xf32>
    %84 = tpu.concatenate %74, %77, %80, %83 in 1 : vector<1x128xf32>, vector<1x128xf32>, vector<1x128xf32>, vector<1x128xf32> -> vector<1x512xf32>
    %85 = vector.extract_strided_slice %42 {offsets = [0, 128], sizes = [16, 128], strides = [1, 1]} : vector<16x1040xf32> to vector<16x128xf32>
    %86 = vector.extract_strided_slice %42 {offsets = [0, 384], sizes = [16, 128], strides = [1, 1]} : vector<16x1040xf32> to vector<16x128xf32>
    %87 = arith.maximumf %85, %86 : vector<16x128xf32>
    %88 = vector.extract_strided_slice %87 {offsets = [0, 0], sizes = [1, 128], strides = [1, 1]} : vector<16x128xf32> to vector<1x128xf32>
    %89 = vector.extract_strided_slice %87 {offsets = [1, 0], sizes = [1, 128], strides = [1, 1]} : vector<16x128xf32> to vector<1x128xf32>
    %90 = arith.maximumf %88, %89 : vector<1x128xf32>
    %91 = vector.extract_strided_slice %87 {offsets = [4, 0], sizes = [1, 128], strides = [1, 1]} : vector<16x128xf32> to vector<1x128xf32>
    %92 = vector.extract_strided_slice %87 {offsets = [5, 0], sizes = [1, 128], strides = [1, 1]} : vector<16x128xf32> to vector<1x128xf32>
    %93 = arith.maximumf %91, %92 : vector<1x128xf32>
    %94 = vector.extract_strided_slice %87 {offsets = [8, 0], sizes = [1, 128], strides = [1, 1]} : vector<16x128xf32> to vector<1x128xf32>
    %95 = vector.extract_strided_slice %87 {offsets = [9, 0], sizes = [1, 128], strides = [1, 1]} : vector<16x128xf32> to vector<1x128xf32>
    %96 = arith.maximumf %94, %95 : vector<1x128xf32>
    %97 = vector.extract_strided_slice %87 {offsets = [12, 0], sizes = [1, 128], strides = [1, 1]} : vector<16x128xf32> to vector<1x128xf32>
    %98 = vector.extract_strided_slice %87 {offsets = [13, 0], sizes = [1, 128], strides = [1, 1]} : vector<16x128xf32> to vector<1x128xf32>
    %99 = arith.maximumf %97, %98 : vector<1x128xf32>
    %100 = tpu.concatenate %90, %93, %96, %99 in 1 : vector<1x128xf32>, vector<1x128xf32>, vector<1x128xf32>, vector<1x128xf32> -> vector<1x512xf32>
    %101 = tpu.concatenate %84, %100 in 0 : vector<1x512xf32>, vector<1x512xf32> -> vector<2x512xf32>
    %102 = tpu.concatenate %60, %60, %60, %60 in 1 : vector<1x128xf32>, vector<1x128xf32>, vector<1x128xf32>, vector<1x128xf32> -> vector<1x512xf32>
    %103 = tpu.concatenate %68, %68, %68, %68 in 1 : vector<1x128xf32>, vector<1x128xf32>, vector<1x128xf32>, vector<1x128xf32> -> vector<1x512xf32>
    %cst_31 = arith.constant 0.000000e+00 : f32
    %104 = vector.broadcast %cst_31 : f32 to vector<2x512xf32>
    %105 = arith.cmpf ogt, %101, %104 : vector<2x512xf32>
    %cst_32 = arith.constant 0.000000e+00 : f32
    %106 = vector.broadcast %cst_32 : f32 to vector<2x512xf32>
    %107 = arith.minimumf %101, %106 : vector<2x512xf32>
    %108 = math.exp %107 : vector<2x512xf32>
    %cst_33 = arith.constant 1.000000e+00 : f32
    %109 = vector.broadcast %cst_33 : f32 to vector<2x512xf32>
    %110 = arith.subf %108, %109 : vector<2x512xf32>
    %111 = arith.select %105, %101, %110 : vector<2x512xi1>, vector<2x512xf32>
    %112 = vector.broadcast %102 : vector<1x512xf32> to vector<2x512xf32>
    %113 = arith.subf %111, %112 : vector<2x512xf32>
    %114 = vector.broadcast %103 : vector<1x512xf32> to vector<2x512xf32>
    %115 = arith.mulf %113, %114 : vector<2x512xf32>
    %c0_34 = arith.constant 0 : index
    %c0_35 = arith.constant 0 : index
    %116 = vector.load %arg8[%c0_34, %c0_35] : memref<512x528xf32, #tpu.memory_space<vmem>>, vector<512x528xf32>
    %cst_36 = arith.constant dense<0.000000e+00> : vector<2x528xf32>
    %117 = tpu.matmul %115, %116, %cst_36 {dimension_numbers = #tpu.dot_dimension_numbers<[1], [0], [0], [1], [0, 0, 1, 1], [], []>} : vector<2x512xf32>, vector<512x528xf32>, vector<2x528xf32> -> vector<2x528xf32>
    %c0_37 = arith.constant 0 : index
    %c0_38 = arith.constant 0 : index
    %118 = vector.load %arg9[%c0_37, %c0_38] : memref<1x528xf32, #tpu.memory_space<vmem>>, vector<1x528xf32>
    %119 = vector.broadcast %118 : vector<1x528xf32> to vector<2x528xf32>
    %120 = arith.addf %117, %119 : vector<2x528xf32>
    %121 = vector.extract_strided_slice %120 {offsets = [0, 256], sizes = [2, 272], strides = [1, 1]} : vector<2x528xf32> to vector<2x272xf32>
    %cst_39 = arith.constant 0.000000e+00 : f32
    %122 = vector.broadcast %cst_39 : f32 to vector<2x272xf32>
    %123 = arith.cmpf ogt, %121, %122 : vector<2x272xf32>
    %cst_40 = arith.constant 0.000000e+00 : f32
    %124 = vector.broadcast %cst_40 : f32 to vector<2x272xf32>
    %125 = arith.minimumf %121, %124 : vector<2x272xf32>
    %126 = math.exp %125 : vector<2x272xf32>
    %cst_41 = arith.constant 1.000000e+00 : f32
    %127 = vector.broadcast %cst_41 : f32 to vector<2x272xf32>
    %128 = arith.subf %126, %127 : vector<2x272xf32>
    %129 = arith.select %123, %121, %128 : vector<2x272xi1>, vector<2x272xf32>
    %cst_42 = arith.constant dense<0.000000e+00> : vector<272xf32>
    %130 = vector.multi_reduction <add>, %129, %cst_42 [0] : vector<2x272xf32> to vector<272xf32>
    %131 = vector.shape_cast %130 : vector<272xf32> to vector<1x272xf32>
    %132 = arith.mulf %129, %129 : vector<2x272xf32>
    %cst_43 = arith.constant dense<0.000000e+00> : vector<272xf32>
    %133 = vector.multi_reduction <add>, %132, %cst_43 [0] : vector<2x272xf32> to vector<272xf32>
    %134 = vector.shape_cast %133 : vector<272xf32> to vector<1x272xf32>
    %135 = tpu.concatenate %131, %134 in 0 : vector<1x272xf32>, vector<1x272xf32> -> vector<2x272xf32>
    %c0_44 = arith.constant 0 : index
    %c0_45 = arith.constant 0 : index
    %136 = vector.load %arg10[%c0_44, %c0_45] : memref<272x32xf32, #tpu.memory_space<vmem>>, vector<272x32xf32>
    %cst_46 = arith.constant dense<0.000000e+00> : vector<2x32xf32>
    %137 = tpu.matmul %135, %136, %cst_46 {dimension_numbers = #tpu.dot_dimension_numbers<[1], [0], [0], [1], [0, 0, 1, 1], [], []>} : vector<2x272xf32>, vector<272x32xf32>, vector<2x32xf32> -> vector<2x32xf32>
    %138 = vector.extract_strided_slice %137 {offsets = [0, 0], sizes = [1, 32], strides = [1, 1]} : vector<2x32xf32> to vector<1x32xf32>
    %139 = vector.extract_strided_slice %137 {offsets = [1, 0], sizes = [1, 32], strides = [1, 1]} : vector<2x32xf32> to vector<1x32xf32>
    %140 = arith.mulf %138, %138 : vector<1x32xf32>
    %141 = arith.subf %139, %140 : vector<1x32xf32>
    %cst_47 = arith.constant 0.000000e+00 : f32
    %142 = vector.broadcast %cst_47 : f32 to vector<1x32xf32>
    %143 = arith.maximumf %141, %142 : vector<1x32xf32>
    %cst_48 = arith.constant 0.000000e+00 : f32
    %144 = vector.broadcast %cst_48 : f32 to vector<1x32xf32>
    %145 = arith.addf %143, %144 : vector<1x32xf32>
    %146 = math.rsqrt %145 : vector<1x32xf32>
    %147 = vector.extract_strided_slice %120 {offsets = [0, 0], sizes = [2, 32], strides = [1, 1]} : vector<2x528xf32> to vector<2x32xf32>
    %148 = vector.extract_strided_slice %120 {offsets = [0, 32], sizes = [2, 32], strides = [1, 1]} : vector<2x528xf32> to vector<2x32xf32>
    %149 = arith.maximumf %147, %148 : vector<2x32xf32>
    %150 = vector.extract_strided_slice %120 {offsets = [0, 64], sizes = [2, 32], strides = [1, 1]} : vector<2x528xf32> to vector<2x32xf32>
    %151 = arith.maximumf %149, %150 : vector<2x32xf32>
    %152 = vector.extract_strided_slice %120 {offsets = [0, 96], sizes = [2, 32], strides = [1, 1]} : vector<2x528xf32> to vector<2x32xf32>
    %153 = arith.maximumf %151, %152 : vector<2x32xf32>
    %154 = vector.extract_strided_slice %120 {offsets = [0, 128], sizes = [2, 32], strides = [1, 1]} : vector<2x528xf32> to vector<2x32xf32>
    %155 = arith.maximumf %153, %154 : vector<2x32xf32>
    %156 = vector.extract_strided_slice %120 {offsets = [0, 160], sizes = [2, 32], strides = [1, 1]} : vector<2x528xf32> to vector<2x32xf32>
    %157 = arith.maximumf %155, %156 : vector<2x32xf32>
    %158 = vector.extract_strided_slice %120 {offsets = [0, 192], sizes = [2, 32], strides = [1, 1]} : vector<2x528xf32> to vector<2x32xf32>
    %159 = arith.maximumf %157, %158 : vector<2x32xf32>
    %160 = vector.extract_strided_slice %120 {offsets = [0, 224], sizes = [2, 32], strides = [1, 1]} : vector<2x528xf32> to vector<2x32xf32>
    %161 = arith.maximumf %159, %160 : vector<2x32xf32>
    %cst_49 = arith.constant 0.000000e+00 : f32
    %162 = vector.broadcast %cst_49 : f32 to vector<2x32xf32>
    %163 = arith.cmpf ogt, %161, %162 : vector<2x32xf32>
    %cst_50 = arith.constant 0.000000e+00 : f32
    %164 = vector.broadcast %cst_50 : f32 to vector<2x32xf32>
    %165 = arith.minimumf %161, %164 : vector<2x32xf32>
    %166 = math.exp %165 : vector<2x32xf32>
    %cst_51 = arith.constant 1.000000e+00 : f32
    %167 = vector.broadcast %cst_51 : f32 to vector<2x32xf32>
    %168 = arith.subf %166, %167 : vector<2x32xf32>
    %169 = arith.select %163, %161, %168 : vector<2x32xi1>, vector<2x32xf32>
    %170 = vector.broadcast %138 : vector<1x32xf32> to vector<2x32xf32>
    %171 = arith.subf %169, %170 : vector<2x32xf32>
    %172 = vector.broadcast %146 : vector<1x32xf32> to vector<2x32xf32>
    %173 = arith.mulf %171, %172 : vector<2x32xf32>
    %c0_52 = arith.constant 0 : index
    %c0_53 = arith.constant 0 : index
    %174 = vector.load %arg11[%c0_52, %c0_53] : memref<32x4xf32, #tpu.memory_space<vmem>>, vector<32x4xf32>
    %cst_54 = arith.constant dense<0.000000e+00> : vector<2x4xf32>
    %175 = tpu.matmul %173, %174, %cst_54 {dimension_numbers = #tpu.dot_dimension_numbers<[1], [0], [0], [1], [0, 0, 1, 1], [], []>} : vector<2x32xf32>, vector<32x4xf32>, vector<2x4xf32> -> vector<2x4xf32>
    %c0_55 = arith.constant 0 : index
    %c0_56 = arith.constant 0 : index
    %176 = vector.load %arg12[%c0_55, %c0_56] : memref<1x4xf32, #tpu.memory_space<vmem>>, vector<1x4xf32>
    %177 = vector.broadcast %176 : vector<1x4xf32> to vector<2x4xf32>
    %178 = arith.addf %175, %177 : vector<2x4xf32>
    %c0_57 = arith.constant 0 : index
    %c0_58 = arith.constant 0 : index
    %179 = vector.load %arg13[%c0_57, %c0_58] : memref<2x4xf32, #tpu.memory_space<vmem>>, vector<2x4xf32>
    tpu.vector_store %arg13[%c0_57, %c0_58], %178 {strides = array<i32>} : memref<2x4xf32, #tpu.memory_space<vmem>>, vector<2x4xf32>,
    return
  }
  func.func @transform_0(%arg0: i32) -> (i32, i32) {
    %c0_i32 = arith.constant 0 : i32
    %c0_i32_0 = arith.constant 0 : i32
    %c0_i32_1 = arith.constant 0 : i32
    return %c0_i32, %c0_i32_0 : i32, i32
  }
  func.func @transform_1(%arg0: i32) -> (i32, i32) {
    %c0_i32 = arith.constant 0 : i32
    %c0_i32_0 = arith.constant 0 : i32
    %c0_i32_1 = arith.constant 0 : i32
    return %c0_i32, %c0_i32_0 : i32, i32
  }
  func.func @transform_2(%arg0: i32) -> (i32, i32) {
    %c0_i32 = arith.constant 0 : i32
    %c0_i32_0 = arith.constant 0 : i32
    %c0_i32_1 = arith.constant 0 : i32
    return %c0_i32, %c0_i32_0 : i32, i32
  }
  func.func @transform_3(%arg0: i32) -> (i32, i32) {
    %c0_i32 = arith.constant 0 : i32
    %c0_i32_0 = arith.constant 0 : i32
    %c0_i32_1 = arith.constant 0 : i32
    return %c0_i32, %c0_i32_0 : i32, i32
  }
  func.func @transform_4(%arg0: i32) -> (i32, i32) {
    %c0_i32 = arith.constant 0 : i32
    %c0_i32_0 = arith.constant 0 : i32
    %c0_i32_1 = arith.constant 0 : i32
    return %c0_i32, %c0_i32_0 : i32, i32
  }
  func.func @transform_5(%arg0: i32) -> (i32, i32) {
    %c0_i32 = arith.constant 0 : i32
    %c0_i32_0 = arith.constant 0 : i32
    %c0_i32_1 = arith.constant 0 : i32
    return %c0_i32, %c0_i32_0 : i32, i32
  }
  func.func @transform_6(%arg0: i32) -> (i32, i32) {
    %c0_i32 = arith.constant 0 : i32
    %c0_i32_0 = arith.constant 0 : i32
    %c0_i32_1 = arith.constant 0 : i32
    return %c0_i32, %c0_i32_0 : i32, i32
  }
  func.func @transform_7(%arg0: i32) -> (i32, i32) {
    %c0_i32 = arith.constant 0 : i32
    %c0_i32_0 = arith.constant 0 : i32
    %c0_i32_1 = arith.constant 0 : i32
    return %c0_i32, %c0_i32_0 : i32, i32
  }
  func.func @transform_8(%arg0: i32) -> (i32, i32) {
    %c0_i32 = arith.constant 0 : i32
    %c0_i32_0 = arith.constant 0 : i32
    %c0_i32_1 = arith.constant 0 : i32
    return %c0_i32, %c0_i32_0 : i32, i32
  }
  func.func @transform_9(%arg0: i32) -> (i32, i32) {
    %c0_i32 = arith.constant 0 : i32
    %c0_i32_0 = arith.constant 0 : i32
    %c0_i32_1 = arith.constant 0 : i32
    return %c0_i32, %c0_i32_0 : i32, i32
  }
  func.func @transform_10(%arg0: i32) -> (i32, i32) {
    %c0_i32 = arith.constant 0 : i32
    %c0_i32_0 = arith.constant 0 : i32
    %c0_i32_1 = arith.constant 0 : i32
    return %c0_i32, %c0_i32_0 : i32, i32
  }
  func.func @transform_11(%arg0: i32) -> (i32, i32) {
    %c0_i32 = arith.constant 0 : i32
    %c0_i32_0 = arith.constant 0 : i32
    %c0_i32_1 = arith.constant 0 : i32
    return %c0_i32, %c0_i32_0 : i32, i32
  }
  func.func @transform_12(%arg0: i32) -> (i32, i32) {
    %c0_i32 = arith.constant 0 : i32
    %c0_i32_0 = arith.constant 0 : i32
    %c0_i32_1 = arith.constant 0 : i32
    return %c0_i32, %c0_i32_0 : i32, i32
  }
}

</mosaic_0001>

<llo_original>
// kernel: eegnet_forward.1
$region0: #{eegnet_forward.1}
  #allocation0 [shape = 'u32[]', space=smem, size = 0x4, offset = 0x4, fixed_abs, tag = 'smem constant byte address 0x4 - core index']
  #allocation1 [shape = 'u32[144,128]{1,0:T(1,128)}', space=vmem, size = 0x12000, scoped, tag = 'internal scratch']
  %s0 = inlined_call_operand.vmem [shape: f32[16,128], index: 0, kind: input, shape index: {}]
  %s1 = inlined_call_operand.vmem [shape: f32[16,16], index: 1, kind: input, shape index: {}]
  %s2 = inlined_call_operand.vmem [shape: f32[16,1], index: 2, kind: input, shape index: {}]
  %s3 = inlined_call_operand.vmem [shape: f32[256,1040], index: 3, kind: input, shape index: {}]
  %s4 = inlined_call_operand.vmem [shape: f32[1,1040], index: 4, kind: input, shape index: {}]
  %s5 = inlined_call_operand.vmem [shape: f32[528,128], index: 5, kind: input, shape index: {}]
  %s6 = inlined_call_operand.vmem [shape: f32[1,128], index: 6, kind: input, shape index: {}]
  %s7 = inlined_call_operand.vmem [shape: f32[512,528], index: 7, kind: input, shape index: {}]
  %s8 = inlined_call_operand.vmem [shape: f32[1,528], index: 8, kind: input, shape index: {}]
  %s9 = inlined_call_operand.vmem [shape: f32[272,32], index: 9, kind: input, shape index: {}]
  %s10 = inlined_call_operand.vmem [shape: f32[32,4], index: 10, kind: input, shape index: {}]
  %s11 = inlined_call_operand.vmem [shape: f32[1,4], index: 11, kind: input, shape index: {}]
  %s12 = inlined_call_operand.hbm [shape: f32[2,4], index: 12, kind: output, shape index: {}]
  %s13 = sld [smem:[#allocation0]]
  $region58: #{eegnet_forward.1} parent=0
    _
  %s15 = ssub.s32 1, %s13
  %s16 = scalar_select 0, %s15, %s13
  $region1: #{eegnet_forward.1} parent=0
    #allocation2 [shape = 'u8[1024]{0}', space=vmem, size = 0x400, scoped, tag = 'output window, operand 0, single buffered']
    #allocation3 [shape = 's32[1]{0}', space=sflag, size = 0x4, scoped, tag = 'scoped memory for eegnet_forward.1']
    %17 = vsyncpa [#allocation3], 0
    // Predicated region
    $region2: #{eegnet_forward.1} parent=1 // pred_check
      _
    $region3: #{eegnet_forward.1} parent=1 // pred_check_branch
      %19 = sbr.rel (0) target = $region5
    $region4: #{eegnet_forward.1} parent=1 // pred_region
      _
    $region5: #{eegnet_forward.1} parent=1 // pred_fallthru
      _
    // Predicated region
    $region6: #{eegnet_forward.1} parent=1 // pred_check
      _
    $region7: #{eegnet_forward.1} parent=1 // pred_check_branch
      %21 = sbr.rel (0) target = $region9
    $region8: #{eegnet_forward.1} parent=1 // pred_region
      _
    $region9: #{eegnet_forward.1} parent=1 // pred_fallthru
      _
    // Predicated region
    $region10: #{eegnet_forward.1} parent=1 // pred_check
      _
    $region11: #{eegnet_forward.1} parent=1 // pred_check_branch
      %23 = sbr.rel (0) target = $region13
    $region12: #{eegnet_forward.1} parent=1 // pred_region
      _
    $region13: #{eegnet_forward.1} parent=1 // pred_fallthru
      _
    // Predicated region
    $region14: #{eegnet_forward.1} parent=1 // pred_check
      _
    $region15: #{eegnet_forward.1} parent=1 // pred_check_branch
      %25 = sbr.rel (0) target = $region17
    $region16: #{eegnet_forward.1} parent=1 // pred_region
      _
    $region17: #{eegnet_forward.1} parent=1 // pred_fallthru
      _
    // Predicated region
    $region18: #{eegnet_forward.1} parent=1 // pred_check
      _
    $region19: #{eegnet_forward.1} parent=1 // pred_check_branch
      %27 = sbr.rel (0) target = $region21
    $region20: #{eegnet_forward.1} parent=1 // pred_region
      _
    $region21: #{eegnet_forward.1} parent=1 // pred_fallthru
      _
    // Predicated region
    $region22: #{eegnet_forward.1} parent=1 // pred_check
      _
    $region23: #{eegnet_forward.1} parent=1 // pred_check_branch
      %29 = sbr.rel (0) target = $region25
    $region24: #{eegnet_forward.1} parent=1 // pred_region
      _
    $region25: #{eegnet_forward.1} parent=1 // pred_fallthru
      _
    // Predicated region
    $region26: #{eegnet_forward.1} parent=1 // pred_check
      _
    $region27: #{eegnet_forward.1} parent=1 // pred_check_branch
      %31 = sbr.rel (0) target = $region29
    $region28: #{eegnet_forward.1} parent=1 // pred_region
      _
    $region29: #{eegnet_forward.1} parent=1 // pred_fallthru
      _
    // Predicated region
    $region30: #{eegnet_forward.1} parent=1 // pred_check
      _
    $region31: #{eegnet_forward.1} parent=1 // pred_check_branch
      %33 = sbr.rel (0) target = $region33
    $region32: #{eegnet_forward.1} parent=1 // pred_region
      _
    $region33: #{eegnet_forward.1} parent=1 // pred_fallthru
      _
    // Predicated region
    $region34: #{eegnet_forward.1} parent=1 // pred_check
      _
    $region35: #{eegnet_forward.1} parent=1 // pred_check_branch
      %35 = sbr.rel (0) target = $region37
    $region36: #{eegnet_forward.1} parent=1 // pred_region
      _
    $region37: #{eegnet_forward.1} parent=1 // pred_fallthru
      _
    // Predicated region
    $region38: #{eegnet_forward.1} parent=1 // pred_check
      _
    $region39: #{eegnet_forward.1} parent=1 // pred_check_branch
      %37 = sbr.rel (0) target = $region41
    $region40: #{eegnet_forward.1} parent=1 // pred_region
      _
    $region41: #{eegnet_forward.1} parent=1 // pred_fallthru
      _
    // Predicated region
    $region42: #{eegnet_forward.1} parent=1 // pred_check
      _
    $region43: #{eegnet_forward.1} parent=1 // pred_check_branch
      %39 = sbr.rel (0) target = $region45
    $region44: #{eegnet_forward.1} parent=1 // pred_region
      _
    $region45: #{eegnet_forward.1} parent=1 // pred_fallthru
      _
    // Predicated region
    $region46: #{eegnet_forward.1} parent=1 // pred_check
      _
    $region47: #{eegnet_forward.1} parent=1 // pred_check_branch
      %41 = sbr.rel (0) target = $region49
    $region48: #{eegnet_forward.1} parent=1 // pred_region
      _
    $region49: #{eegnet_forward.1} parent=1 // pred_fallthru
      _
    %v42 = vld [vmem:[%s1] sm:$0xff]
    %v43 = vld [vmem:[%s1 + $0x8] sm:$0xff]
    %v44 = vld [vmem:[%s0] sm:$0xff]
    %v45 = vld [vmem:[%s0 + $0x8] sm:$0xff]
    %v46 = vld [vmem:[%s2] sm:$0xff]
    %v47 = vld [vmem:[%s2 + $0x8] sm:$0xff]
    %49 = vset.pattern.permute.xlu0 0
    %50 = vperm.xlu0 %49, %v46
    %v51 = vpop.permute.xlu0 %50
    %54 = vset.pattern.permute.xlu0 0
    %55 = vperm.xlu0 %54, %v47
    %v56 = vpop.permute.xlu0 %55
    %vm58 = vcmask 130048
    %v60 = vsel %vm58, %v42, 0
    %v63 = vsel %vm58, %v43, 0
    %65 = vmatprep.subr.mxu0 0.0
    %66 = vmatpush1.msra.mxu0 %v44
    %67 = vmatprep.subr.mxu0 0.0
    %68 = vmatpush1.msra.mxu0 %v45
    %69 = vmatprep.subr.mxu0 0.0
    %70 = vmatpush1.msra.mxu0 0.0
    %71 = vmatprep.subr.mxu0 0.0
    %72 = vmatpush1.msra.mxu0 0.0
    %73 = vmatprep.subr.mxu0 0.0
    %74 = vmatpush1.msra.mxu0 0.0
    %75 = vmatprep.subr.mxu0 0.0
    %76 = vmatpush1.msra.mxu0 0.0
    %77 = vmatprep.subr.mxu0 0.0
    %78 = vmatpush1.msra.mxu0 0.0
    %79 = vmatprep.subr.mxu0 0.0
    %80 = vmatpush1.msra.mxu0 0.0
    %81 = vmatprep.subr.mxu0 0.0
    %82 = vmatpush1.msra.mxu0 0.0
    %83 = vmatprep.subr.mxu0 0.0
    %84 = vmatpush1.msra.mxu0 0.0
    %85 = vmatprep.subr.mxu0 0.0
    %86 = vmatpush1.msra.mxu0 0.0
    %87 = vmatprep.subr.mxu0 0.0
    %88 = vmatpush1.msra.mxu0 0.0
    %89 = vmatprep.subr.mxu0 0.0
    %90 = vmatpush1.msra.mxu0 0.0
    %91 = vmatprep.subr.mxu0 0.0
    %92 = vmatpush1.msra.mxu0 0.0
    %93 = vmatprep.subr.mxu0 0.0
    %94 = vmatpush1.msra.mxu0 0.0
    %95 = vmatprep.subr.mxu0 0.0
    %96 = vmatpush1.msra.mxu0 0.0
    %97 = vmatprep.subr.mxu0 0.0
    %98 = vmatpush1.msra.mxu0 0.0
    %99 = vmatprep.subr.mxu0 0.0
    %100 = vmatpush1.msra.mxu0 0.0
    %101 = vmatprep.subr.mxu0 0.0
    %102 = vmatpush1.msra.mxu0 0.0
    %103 = vmatprep.subr.mxu0 0.0
    %104 = vmatpush1.msra.mxu0 0.0
    %105 = vmatprep.subr.mxu0 0.0
    %106 = vmatpush1.msra.mxu0 0.0
    %107 = vmatprep.subr.mxu0 0.0
    %108 = vmatpush1.msra.mxu0 0.0
    %109 = vmatprep.subr.mxu0 0.0
    %110 = vmatpush1.msra.mxu0 0.0
    %111 = vmatprep.subr.mxu0 0.0
    %112 = vmatpush1.msra.mxu0 0.0
    %113 = vmatprep.subr.mxu0 0.0
    %114 = vmatpush1.msra.mxu0 0.0
    %115 = vmatprep.subr.mxu0 0.0
    %116 = vmatpush1.msra.mxu0 0.0
    %117 = vmatprep.subr.mxu0 0.0
    %118 = vmatpush1.msra.mxu0 0.0
    %119 = vmatprep.subr.mxu0 0.0
    %120 = vmatpush1.msra.mxu0 0.0
    %121 = vmatprep.subr.mxu0 0.0
    %122 = vmatpush1.msra.mxu0 0.0
    %123 = vmatprep.subr.mxu0 0.0
    %124 = vmatpush1.msra.mxu0 0.0
    %125 = vmatprep.subr.mxu0 0.0
    %126 = vmatpush1.msra.mxu0 0.0
    %127 = vmatprep.subr.mxu0 0.0
    %128 = vmatpush1.msra.mxu0 0.0
    %129 = vmatprep.mubr.f32.mxu0 0.0
    %130 = vmatmul.mubr.f32.gmra.mrb[0].mxu0 %v60
    %v131 = vpop.f32.mrb[0].mxu0
    %v132 = vadd.f32 %v51, %v131
    %v133 = vpop.f32.mrb[0].mxu0
    %134 = vmatprep.mubr.f32.mxu0 0.0
    %135 = vmatmul.mubr.f32.gmra.mrb[0].mxu0 %v63
    %v136 = vpop.f32.mrb[0].mxu0
    %v137 = vadd.f32 %v56, %v136
    %v138 = vpop.f32.mrb[0].mxu0
    %139 = vdwg.mxu0
    %vm140 = vcmp.gt.f32.partialorder %v132, 0.0
    %vm141 = vcmp.gt.f32.partialorder %v137, 0.0
    %v142 = vmin.f32 %v132, 0.0
    %v143 = vmin.f32 %v137, 0.0
    %v144 = vmul.f32 %v142, 1.442695
    %v145 = vpow.pop %v144
    %v146 = vmul.f32 %v143, 1.442695
    %v147 = vpow.pop %v146
    %v148 = vsub.f32 %v145, 1.0
    %v149 = vsub.f32 %v147, 1.0
    %v150 = vsel %vm140, %v132, %v148
    %v151 = vsel %vm141, %v137, %v149
    %152 = vadd.xlane.f32.xlu0 %v150
    %v153 = vpop.xlane.xlu0 %152
    %154 = vadd.xlane.f32.xlu0 %v151
    %v155 = vpop.xlane.xlu0 %154
    %v156 = vrcp.pop 128.0
    %v157 = vmul.f32 %v153, %v156
    %v158 = vmul.f32 %v155, %v156
    %v159 = vmul.f32 %v150, %v150
    %v160 = vmul.f32 %v151, %v151
    %161 = vadd.xlane.f32.xlu0 %v159
    %v162 = vpop.xlane.xlu0 %161
    %163 = vadd.xlane.f32.xlu0 %v160
    %v164 = vpop.xlane.xlu0 %163
    %v165 = vmul.f32 %v162, %v156
    %v166 = vmul.f32 %v164, %v156
    %v167 = vmul.f32 %v157, %v157
    %v168 = vmul.f32 %v158, %v158
    %v169 = vsub.f32 %v165, %v167
    %v170 = vsub.f32 %v166, %v168
    %v171 = vmax.f32 %v169, 0.0
    %v172 = vmax.f32 %v170, 0.0
    %v173 = vsub.f32 %v150, %v157
    %v174 = vsub.f32 %v151, %v158
    %v175 = vadd.f32 %v171, 0.0
    %v176 = vadd.f32 %v172, 0.0
    %v177 = vrsqrt.pop %v175
    %v178 = vrsqrt.pop %v176
    %v179 = vmul.f32 %v173, %v177
    %v180 = vmul.f32 %v174, %v178
    %vm183 = vcmask 1046528
    %v184 = vrot.slane %v179, 1
    %v185 = vrot.slane %v180, 1
    %v186 = vsel %vm183, %v184, %v185
    %v189 = vsel %vm183, %v185, 0.0
    %v190 = vld [vmem:[%s3] sm:$0xff]
    %v191 = vld [vmem:[%s3 + $0x8] sm:$0xff]
    %v192 = vld [vmem:[%s3 + $0x10] sm:$0xff]
    %v193 = vld [vmem:[%s3 + $0x18] sm:$0xff]
    %v194 = vld [vmem:[%s3 + $0x20] sm:$0xff]
    %v195 = vld [vmem:[%s3 + $0x28] sm:$0xff]
    %v196 = vld [vmem:[%s3 + $0x30] sm:$0xff]
    %v197 = vld [vmem:[%s3 + $0x38] sm:$0xff]
    %v198 = vld [vmem:[%s3 + $0x40] sm:$0xff]
    %v199 = vld [vmem:[%s3 + $0x48] sm:$0xff]
    %v200 = vld [vmem:[%s3 + $0x50] sm:$0xff]
    %v201 = vld [vmem:[%s3 + $0x58] sm:$0xff]
    %v202 = vld [vmem:[%s3 + $0x60] sm:$0xff]
    %v203 = vld [vmem:[%s3 + $0x68] sm:$0xff]
    %v204 = vld [vmem:[%s3 + $0x70] sm:$0xff]
    %v205 = vld [vmem:[%s3 + $0x78] sm:$0xff]
    %v206 = vld [vmem:[%s3 + $0x80] sm:$0xff]
    %v207 = vld [vmem:[%s3 + $0x88] sm:$0xff]
    %v208 = vld [vmem:[%s3 + $0x90] sm:$0xff]
    %v209 = vld [vmem:[%s3 + $0x98] sm:$0xff]
    %v210 = vld [vmem:[%s3 + $0xa0] sm:$0xff]
    %v211 = vld [vmem:[%s3 + $0xa8] sm:$0xff]
    %v212 = vld [vmem:[%s3 + $0xb0] sm:$0xff]
    %v213 = vld [vmem:[%s3 + $0xb8] sm:$0xff]
    %v214 = vld [vmem:[%s3 + $0xc0] sm:$0xff]
    %v215 = vld [vmem:[%s3 + $0xc8] sm:$0xff]
    %v216 = vld [vmem:[%s3 + $0xd0] sm:$0xff]
    %v217 = vld [vmem:[%s3 + $0xd8] sm:$0xff]
    %v218 = vld [vmem:[%s3 + $0xe0] sm:$0xff]
    %v219 = vld [vmem:[%s3 + $0xe8] sm:$0xff]
    %v220 = vld [vmem:[%s3 + $0xf0] sm:$0xff]
    %v221 = vld [vmem:[%s3 + $0xf8] sm:$0xff]
    %v222 = vld [vmem:[%s3 + $0x100] sm:$0xff]
    %v223 = vld [vmem:[%s3 + $0x108] sm:$0xff]
    %v224 = vld [vmem:[%s3 + $0x110] sm:$0xff]
    %v225 = vld [vmem:[%s3 + $0x118] sm:$0xff]
    %v226 = vld [vmem:[%s3 + $0x120] sm:$0xff]
    %v227 = vld [vmem:[%s3 + $0x128] sm:$0xff]
    %v228 = vld [vmem:[%s3 + $0x130] sm:$0xff]
    %v229 = vld [vmem:[%s3 + $0x138] sm:$0xff]
    %v230 = vld [vmem:[%s3 + $0x140] sm:$0xff]
    %v231 = vld [vmem:[%s3 + $0x148] sm:$0xff]
    %v232 = vld [vmem:[%s3 + $0x150] sm:$0xff]
    %v233 = vld [vmem:[%s3 + $0x158] sm:$0xff]
    %v234 = vld [vmem:[%s3 + $0x160] sm:$0xff]
    %v235 = vld [vmem:[%s3 + $0x168] sm:$0xff]
    %v236 = vld [vmem:[%s3 + $0x170] sm:$0xff]
    %v237 = vld [vmem:[%s3 + $0x178] sm:$0xff]
    %v238 = vld [vmem:[%s3 + $0x180] sm:$0xff]
    %v239 = vld [vmem:[%s3 + $0x188] sm:$0xff]
    %v240 = vld [vmem:[%s3 + $0x190] sm:$0xff]
    %v241 = vld [vmem:[%s3 + $0x198] sm:$0xff]
    %v242 = vld [vmem:[%s3 + $0x1a0] sm:$0xff]
    %v243 = vld [vmem:[%s3 + $0x1a8] sm:$0xff]
    %v244 = vld [vmem:[%s3 + $0x1b0] sm:$0xff]
    %v245 = vld [vmem:[%s3 + $0x1b8] sm:$0xff]
    %v246 = vld [vmem:[%s3 + $0x1c0] sm:$0xff]
    %v247 = vld [vmem:[%s3 + $0x1c8] sm:$0xff]
    %v248 = vld [vmem:[%s3 + $0x1d0] sm:$0xff]
    %v249 = vld [vmem:[%s3 + $0x1d8] sm:$0xff]
    %v250 = vld [vmem:[%s3 + $0x1e0] sm:$0xff]
    %v251 = vld [vmem:[%s3 + $0x1e8] sm:$0xff]
    %v252 = vld [vmem:[%s3 + $0x1f0] sm:$0xff]
    %v253 = vld [vmem:[%s3 + $0x1f8] sm:$0xff]
    %v254 = vld [vmem:[%s3 + $0x200] sm:$0xff]
    %v255 = vld [vmem:[%s3 + $0x208] sm:$0xff]
    %v256 = vld [vmem:[%s3 + $0x210] sm:$0xff]
    %v257 = vld [vmem:[%s3 + $0x218] sm:$0xff]
    %v258 = vld [vmem:[%s3 + $0x220] sm:$0xff]
    %v259 = vld [vmem:[%s3 + $0x228] sm:$0xff]
    %v260 = vld [vmem:[%s3 + $0x230] sm:$0xff]
    %v261 = vld [vmem:[%s3 + $0x238] sm:$0xff]
    %v262 = vld [vmem:[%s3 + $0x240] sm:$0xff]
    %v263 = vld [vmem:[%s3 + $0x248] sm:$0xff]
    %v264 = vld [vmem:[%s3 + $0x250] sm:$0xff]
    %v265 = vld [vmem:[%s3 + $0x258] sm:$0xff]
    %v266 = vld [vmem:[%s3 + $0x260] sm:$0xff]
    %v267 = vld [vmem:[%s3 + $0x268] sm:$0xff]
    %v268 = vld [vmem:[%s3 + $0x270] sm:$0xff]
    %v269 = vld [vmem:[%s3 + $0x278] sm:$0xff]
    %v270 = vld [vmem:[%s3 + $0x280] sm:$0xff]
    %v271 = vld [vmem:[%s3 + $0x288] sm:$0xff]
    %v272 = vld [vmem:[%s3 + $0x290] sm:$0xff]
    %v273 = vld [vmem:[%s3 + $0x298] sm:$0xff]
    %v274 = vld [vmem:[%s3 + $0x2a0] sm:$0xff]
    %v275 = vld [vmem:[%s3 + $0x2a8] sm:$0xff]
    %v276 = vld [vmem:[%s3 + $0x2b0] sm:$0xff]
    %v277 = vld [vmem:[%s3 + $0x2b8] sm:$0xff]
    %v278 = vld [vmem:[%s3 + $0x2c0] sm:$0xff]
    %v279 = vld [vmem:[%s3 + $0x2c8] sm:$0xff]
    %v280 = vld [vmem:[%s3 + $0x2d0] sm:$0xff]
    %v281 = vld [vmem:[%s3 + $0x2d8] sm:$0xff]
    %v282 = vld [vmem:[%s3 + $0x2e0] sm:$0xff]
    %v283 = vld [vmem:[%s3 + $0x2e8] sm:$0xff]
    %v284 = vld [vmem:[%s3 + $0x2f0] sm:$0xff]
    %v285 = vld [vmem:[%s3 + $0x2f8] sm:$0xff]
    %v286 = vld [vmem:[%s3 + $0x300] sm:$0xff]
    %v287 = vld [vmem:[%s3 + $0x308] sm:$0xff]
    %v288 = vld [vmem:[%s3 + $0x310] sm:$0xff]
    %v289 = vld [vmem:[%s3 + $0x318] sm:$0xff]
    %v290 = vld [vmem:[%s3 + $0x320] sm:$0xff]
    %v291 = vld [vmem:[%s3 + $0x328] sm:$0xff]
    %v292 = vld [vmem:[%s3 + $0x330] sm:$0xff]
    %v293 = vld [vmem:[%s3 + $0x338] sm:$0xff]
    %v294 = vld [vmem:[%s3 + $0x340] sm:$0xff]
    %v295 = vld [vmem:[%s3 + $0x348] sm:$0xff]
    %v296 = vld [vmem:[%s3 + $0x350] sm:$0xff]
    %v297 = vld [vmem:[%s3 + $0x358] sm:$0xff]
    %v298 = vld [vmem:[%s3 + $0x360] sm:$0xff]
    %v299 = vld [vmem:[%s3 + $0x368] sm:$0xff]
    %v300 = vld [vmem:[%s3 + $0x370] sm:$0xff]
    %v301 = vld [vmem:[%s3 + $0x378] sm:$0xff]
    %v302 = vld [vmem:[%s3 + $0x380] sm:$0xff]
    %v303 = vld [vmem:[%s3 + $0x388] sm:$0xff]
    %v304 = vld [vmem:[%s3 + $0x390] sm:$0xff]
    %v305 = vld [vmem:[%s3 + $0x398] sm:$0xff]
    %v306 = vld [vmem:[%s3 + $0x3a0] sm:$0xff]
    %v307 = vld [vmem:[%s3 + $0x3a8] sm:$0xff]
    %v308 = vld [vmem:[%s3 + $0x3b0] sm:$0xff]
    %v309 = vld [vmem:[%s3 + $0x3b8] sm:$0xff]
    %v310 = vld [vmem:[%s3 + $0x3c0] sm:$0xff]
    %v311 = vld [vmem:[%s3 + $0x3c8] sm:$0xff]
    %v312 = vld [vmem:[%s3 + $0x3d0] sm:$0xff]
    %v313 = vld [vmem:[%s3 + $0x3d8] sm:$0xff]
    %v314 = vld [vmem:[%s3 + $0x3e0] sm:$0xff]
    %v315 = vld [vmem:[%s3 + $0x3e8] sm:$0xff]
    %v316 = vld [vmem:[%s3 + $0x3f0] sm:$0xff]
    %v317 = vld [vmem:[%s3 + $0x3f8] sm:$0xff]
    %v318 = vld [vmem:[%s3 + $0x400] sm:$0xff]
    %v319 = vld [vmem:[%s3 + $0x408] sm:$0xff]
    %v320 = vld [vmem:[%s3 + $0x410] sm:$0xff]
    %v321 = vld [vmem:[%s3 + $0x418] sm:$0xff]
    %v322 = vld [vmem:[%s3 + $0x420] sm:$0xff]
    %v323 = vld [vmem:[%s3 + $0x428] sm:$0xff]
    %v324 = vld [vmem:[%s3 + $0x430] sm:$0xff]
    %v325 = vld [vmem:[%s3 + $0x438] sm:$0xff]
    %v326 = vld [vmem:[%s3 + $0x440] sm:$0xff]
    %v327 = vld [vmem:[%s3 + $0x448] sm:$0xff]
    %v328 = vld [vmem:[%s3 + $0x450] sm:$0xff]
    %v329 = vld [vmem:[%s3 + $0x458] sm:$0xff]
    %v330 = vld [vmem:[%s3 + $0x460] sm:$0xff]
    %v331 = vld [vmem:[%s3 + $0x468] sm:$0xff]
    %v332 = vld [vmem:[%s3 + $0x470] sm:$0xff]
    %v333 = vld [vmem:[%s3 + $0x478] sm:$0xff]
    %v334 = vld [vmem:[%s3 + $0x480] sm:$0xff]
    %v335 = vld [vmem:[%s3 + $0x488] sm:$0xff]
    %v336 = vld [vmem:[%s3 + $0x490] sm:$0xff]
    %v337 = vld [vmem:[%s3 + $0x498] sm:$0xff]
    %v338 = vld [vmem:[%s3 + $0x4a0] sm:$0xff]
    %v339 = vld [vmem:[%s3 + $0x4a8] sm:$0xff]
    %v340 = vld [vmem:[%s3 + $0x4b0] sm:$0xff]
    %v341 = vld [vmem:[%s3 + $0x4b8] sm:$0xff]
    %v342 = vld [vmem:[%s3 + $0x4c0] sm:$0xff]
    %v343 = vld [vmem:[%s3 + $0x4c8] sm:$0xff]
    %v344 = vld [vmem:[%s3 + $0x4d0] sm:$0xff]
    %v345 = vld [vmem:[%s3 + $0x4d8] sm:$0xff]
    %v346 = vld [vmem:[%s3 + $0x4e0] sm:$0xff]
    %v347 = vld [vmem:[%s3 + $0x4e8] sm:$0xff]
    %v348 = vld [vmem:[%s3 + $0x4f0] sm:$0xff]
    %v349 = vld [vmem:[%s3 + $0x4f8] sm:$0xff]
    %v350 = vld [vmem:[%s3 + $0x500] sm:$0xff]
    %v351 = vld [vmem:[%s3 + $0x508] sm:$0xff]
    %v352 = vld [vmem:[%s3 + $0x510] sm:$0xff]
    %v353 = vld [vmem:[%s3 + $0x518] sm:$0xff]
    %v354 = vld [vmem:[%s3 + $0x520] sm:$0xff]
    %v355 = vld [vmem:[%s3 + $0x528] sm:$0xff]
    %v356 = vld [vmem:[%s3 + $0x530] sm:$0xff]
    %v357 = vld [vmem:[%s3 + $0x538] sm:$0xff]
    %v358 = vld [vmem:[%s3 + $0x540] sm:$0xff]
    %v359 = vld [vmem:[%s3 + $0x548] sm:$0xff]
    %v360 = vld [vmem:[%s3 + $0x550] sm:$0xff]
    %v361 = vld [vmem:[%s3 + $0x558] sm:$0xff]
    %v362 = vld [vmem:[%s3 + $0x560] sm:$0xff]
    %v363 = vld [vmem:[%s3 + $0x568] sm:$0xff]
    %v364 = vld [vmem:[%s3 + $0x570] sm:$0xff]
    %v365 = vld [vmem:[%s3 + $0x578] sm:$0xff]
    %v366 = vld [vmem:[%s3 + $0x580] sm:$0xff]
    %v367 = vld [vmem:[%s3 + $0x588] sm:$0xff]
    %v368 = vld [vmem:[%s3 + $0x590] sm:$0xff]
    %v369 = vld [vmem:[%s3 + $0x598] sm:$0xff]
    %v370 = vld [vmem:[%s3 + $0x5a0] sm:$0xff]
    %v371 = vld [vmem:[%s3 + $0x5a8] sm:$0xff]
    %v372 = vld [vmem:[%s3 + $0x5b0] sm:$0xff]
    %v373 = vld [vmem:[%s3 + $0x5b8] sm:$0xff]
    %v374 = vld [vmem:[%s3 + $0x5c0] sm:$0xff]
    %v375 = vld [vmem:[%s3 + $0x5c8] sm:$0xff]
    %v376 = vld [vmem:[%s3 + $0x5d0] sm:$0xff]
    %v377 = vld [vmem:[%s3 + $0x5d8] sm:$0xff]
    %v378 = vld [vmem:[%s3 + $0x5e0] sm:$0xff]
    %v379 = vld [vmem:[%s3 + $0x5e8] sm:$0xff]
    %v380 = vld [vmem:[%s3 + $0x5f0] sm:$0xff]
    %v381 = vld [vmem:[%s3 + $0x5f8] sm:$0xff]
    %v382 = vld [vmem:[%s3 + $0x600] sm:$0xff]
    %v383 = vld [vmem:[%s3 + $0x608] sm:$0xff]
    %v384 = vld [vmem:[%s3 + $0x610] sm:$0xff]
    %v385 = vld [vmem:[%s3 + $0x618] sm:$0xff]
    %v386 = vld [vmem:[%s3 + $0x620] sm:$0xff]
    %v387 = vld [vmem:[%s3 + $0x628] sm:$0xff]
    %v388 = vld [vmem:[%s3 + $0x630] sm:$0xff]
    %v389 = vld [vmem:[%s3 + $0x638] sm:$0xff]
    %v390 = vld [vmem:[%s3 + $0x640] sm:$0xff]
    %v391 = vld [vmem:[%s3 + $0x648] sm:$0xff]
    %v392 = vld [vmem:[%s3 + $0x650] sm:$0xff]
    %v393 = vld [vmem:[%s3 + $0x658] sm:$0xff]
    %v394 = vld [vmem:[%s3 + $0x660] sm:$0xff]
    %v395 = vld [vmem:[%s3 + $0x668] sm:$0xff]
    %v396 = vld [vmem:[%s3 + $0x670] sm:$0xff]
    %v397 = vld [vmem:[%s3 + $0x678] sm:$0xff]
    %v398 = vld [vmem:[%s3 + $0x680] sm:$0xff]
    %v399 = vld [vmem:[%s3 + $0x688] sm:$0xff]
    %v400 = vld [vmem:[%s3 + $0x690] sm:$0xff]
    %v401 = vld [vmem:[%s3 + $0x698] sm:$0xff]
    %v402 = vld [vmem:[%s3 + $0x6a0] sm:$0xff]
    %v403 = vld [vmem:[%s3 + $0x6a8] sm:$0xff]
    %v404 = vld [vmem:[%s3 + $0x6b0] sm:$0xff]
    %v405 = vld [vmem:[%s3 + $0x6b8] sm:$0xff]
    %v406 = vld [vmem:[%s3 + $0x6c0] sm:$0xff]
    %v407 = vld [vmem:[%s3 + $0x6c8] sm:$0xff]
    %v408 = vld [vmem:[%s3 + $0x6d0] sm:$0xff]
    %v409 = vld [vmem:[%s3 + $0x6d8] sm:$0xff]
    %v410 = vld [vmem:[%s3 + $0x6e0] sm:$0xff]
    %v411 = vld [vmem:[%s3 + $0x6e8] sm:$0xff]
    %v412 = vld [vmem:[%s3 + $0x6f0] sm:$0xff]
    %v413 = vld [vmem:[%s3 + $0x6f8] sm:$0xff]
    %v414 = vld [vmem:[%s3 + $0x700] sm:$0xff]
    %v415 = vld [vmem:[%s3 + $0x708] sm:$0xff]
    %v416 = vld [vmem:[%s3 + $0x710] sm:$0xff]
    %v417 = vld [vmem:[%s3 + $0x718] sm:$0xff]
    %v418 = vld [vmem:[%s3 + $0x720] sm:$0xff]
    %v419 = vld [vmem:[%s3 + $0x728] sm:$0xff]
    %v420 = vld [vmem:[%s3 + $0x730] sm:$0xff]
    %v421 = vld [vmem:[%s3 + $0x738] sm:$0xff]
    %v422 = vld [vmem:[%s3 + $0x740] sm:$0xff]
    %v423 = vld [vmem:[%s3 + $0x748] sm:$0xff]
    %v424 = vld [vmem:[%s3 + $0x750] sm:$0xff]
    %v425 = vld [vmem:[%s3 + $0x758] sm:$0xff]
    %v426 = vld [vmem:[%s3 + $0x760] sm:$0xff]
    %v427 = vld [vmem:[%s3 + $0x768] sm:$0xff]
    %v428 = vld [vmem:[%s3 + $0x770] sm:$0xff]
    %v429 = vld [vmem:[%s3 + $0x778] sm:$0xff]
    %v430 = vld [vmem:[%s3 + $0x780] sm:$0xff]
    %v431 = vld [vmem:[%s3 + $0x788] sm:$0xff]
    %v432 = vld [vmem:[%s3 + $0x790] sm:$0xff]
    %v433 = vld [vmem:[%s3 + $0x798] sm:$0xff]
    %v434 = vld [vmem:[%s3 + $0x7a0] sm:$0xff]
    %v435 = vld [vmem:[%s3 + $0x7a8] sm:$0xff]
    %v436 = vld [vmem:[%s3 + $0x7b0] sm:$0xff]
    %v437 = vld [vmem:[%s3 + $0x7b8] sm:$0xff]
    %v438 = vld [vmem:[%s3 + $0x7c0] sm:$0xff]
    %v439 = vld [vmem:[%s3 + $0x7c8] sm:$0xff]
    %v440 = vld [vmem:[%s3 + $0x7d0] sm:$0xff]
    %v441 = vld [vmem:[%s3 + $0x7d8] sm:$0xff]
    %v442 = vld [vmem:[%s3 + $0x7e0] sm:$0xff]
    %v443 = vld [vmem:[%s3 + $0x7e8] sm:$0xff]
    %v444 = vld [vmem:[%s3 + $0x7f0] sm:$0xff]
    %v445 = vld [vmem:[%s3 + $0x7f8] sm:$0xff]
    %v446 = vld [vmem:[%s3 + $0x800] sm:$0xff]
    %v447 = vld [vmem:[%s3 + $0x808] sm:$0xff]
    %v448 = vld [vmem:[%s3 + $0x810] sm:$0xff]
    %v449 = vld [vmem:[%s3 + $0x818] sm:$0xff]
    %v450 = vld [vmem:[%s3 + $0x820] sm:$0xff]
    %v451 = vld [vmem:[%s3 + $0x828] sm:$0xff]
    %v452 = vld [vmem:[%s3 + $0x830] sm:$0xff]
    %v453 = vld [vmem:[%s3 + $0x838] sm:$0xff]
    %v454 = vld [vmem:[%s3 + $0x840] sm:$0xff]
    %v455 = vld [vmem:[%s3 + $0x848] sm:$0xff]
    %v456 = vld [vmem:[%s3 + $0x850] sm:$0xff]
    %v457 = vld [vmem:[%s3 + $0x858] sm:$0xff]
    %v458 = vld [vmem:[%s3 + $0x860] sm:$0xff]
    %v459 = vld [vmem:[%s3 + $0x868] sm:$0xff]
    %v460 = vld [vmem:[%s3 + $0x870] sm:$0xff]
    %v461 = vld [vmem:[%s3 + $0x878] sm:$0xff]
    %v462 = vld [vmem:[%s3 + $0x880] sm:$0xff]
    %v463 = vld [vmem:[%s3 + $0x888] sm:$0xff]
    %v464 = vld [vmem:[%s3 + $0x890] sm:$0xff]
    %v465 = vld [vmem:[%s3 + $0x898] sm:$0xff]
    %v466 = vld [vmem:[%s3 + $0x8a0] sm:$0xff]
    %v467 = vld [vmem:[%s3 + $0x8a8] sm:$0xff]
    %v468 = vld [vmem:[%s3 + $0x8b0] sm:$0xff]
    %v469 = vld [vmem:[%s3 + $0x8b8] sm:$0xff]
    %v470 = vld [vmem:[%s3 + $0x8c0] sm:$0xff]
    %v471 = vld [vmem:[%s3 + $0x8c8] sm:$0xff]
    %v472 = vld [vmem:[%s3 + $0x8d0] sm:$0xff]
    %v473 = vld [vmem:[%s3 + $0x8d8] sm:$0xff]
    %v474 = vld [vmem:[%s3 + $0x8e0] sm:$0xff]
    %v475 = vld [vmem:[%s3 + $0x8e8] sm:$0xff]
    %v476 = vld [vmem:[%s3 + $0x8f0] sm:$0xff]
    %v477 = vld [vmem:[%s3 + $0x8f8] sm:$0xff]
    %v478 = vld [vmem:[%s4] sm:$0xff]
    %v479 = vld [vmem:[%s4 + $0x8] sm:$0x1]
    %v482 = vlaneseq
    %v483 = vshrl.u32 %v482, 7
    %v484 = vsub.s32 0, %v483
    %v485 = vrot.slane %v478, %v484
    %v486 = vlaneseq
    %v487 = vshrl.u32 %v486, 7
    %v488 = vsub.s32 1, %v487
    %v489 = vrot.slane %v478, %v488
    %v490 = vlaneseq
    %v491 = vshrl.u32 %v490, 7
    %v492 = vsub.s32 2, %v491
    %v493 = vrot.slane %v478, %v492
    %v494 = vlaneseq
    %v495 = vshrl.u32 %v494, 7
    %v496 = vsub.s32 3, %v495
    %v497 = vrot.slane %v478, %v496
    %v498 = vlaneseq
    %v499 = vshrl.u32 %v498, 7
    %v500 = vsub.s32 4, %v499
    %v501 = vrot.slane %v478, %v500
    %v502 = vlaneseq
    %v503 = vshrl.u32 %v502, 7
    %v504 = vsub.s32 5, %v503
    %v505 = vrot.slane %v478, %v504
    %v506 = vlaneseq
    %v507 = vshrl.u32 %v506, 7
    %v508 = vsub.s32 6, %v507
    %v509 = vrot.slane %v478, %v508
    %v510 = vlaneseq
    %v511 = vshrl.u32 %v510, 7
    %v512 = vsub.s32 7, %v511
    %v513 = vrot.slane %v478, %v512
    %v514 = vlaneseq
    %v515 = vshrl.u32 %v514, 7
    %v516 = vsub.s32 0, %v515
    %v517 = vrot.slane %v479, %v516
    %527 = vmatprep.subr.mxu0 %v191
    %528 = vmatpush1.msra.mxu0 %v190
    %529 = vmatprep.subr.mxu0 %v200
    %530 = vmatpush1.msra.mxu0 %v199
    %531 = vmatprep.subr.mxu0 %v209
    %532 = vmatpush1.msra.mxu0 %v208
    %533 = vmatprep.subr.mxu0 %v218
    %534 = vmatpush1.msra.mxu0 %v217
    %535 = vmatprep.subr.mxu0 %v227
    %536 = vmatpush1.msra.mxu0 %v226
    %537 = vmatprep.subr.mxu0 %v236
    %538 = vmatpush1.msra.mxu0 %v235
    %539 = vmatprep.subr.mxu0 %v245
    %540 = vmatpush1.msra.mxu0 %v244
    %541 = vmatprep.subr.mxu0 %v254
    %542 = vmatpush1.msra.mxu0 %v253
    %543 = vmatprep.subr.mxu0 %v263
    %544 = vmatpush1.msra.mxu0 %v262
    %545 = vmatprep.subr.mxu0 %v272
    %546 = vmatpush1.msra.mxu0 %v271
    %547 = vmatprep.subr.mxu0 %v281
    %548 = vmatpush1.msra.mxu0 %v280
    %549 = vmatprep.subr.mxu0 %v290
    %550 = vmatpush1.msra.mxu0 %v289
    %551 = vmatprep.subr.mxu0 %v299
    %552 = vmatpush1.msra.mxu0 %v298
    %553 = vmatprep.subr.mxu0 %v308
    %554 = vmatpush1.msra.mxu0 %v307
    %555 = vmatprep.subr.mxu0 %v317
    %556 = vmatpush1.msra.mxu0 %v316
    %557 = vmatprep.subr.mxu0 %v326
    %558 = vmatpush1.msra.mxu0 %v325
    %559 = vmatprep.subr.mxu0 %v335
    %560 = vmatpush1.msra.mxu0 %v334
    %561 = vmatprep.subr.mxu0 %v344
    %562 = vmatpush1.msra.mxu0 %v343
    %563 = vmatprep.subr.mxu0 %v353
    %564 = vmatpush1.msra.mxu0 %v352
    %565 = vmatprep.subr.mxu0 %v362
    %566 = vmatpush1.msra.mxu0 %v361
    %567 = vmatprep.subr.mxu0 %v371
    %568 = vmatpush1.msra.mxu0 %v370
    %569 = vmatprep.subr.mxu0 %v380
    %570 = vmatpush1.msra.mxu0 %v379
    %571 = vmatprep.subr.mxu0 %v389
    %572 = vmatpush1.msra.mxu0 %v388
    %573 = vmatprep.subr.mxu0 %v398
    %574 = vmatpush1.msra.mxu0 %v397
    %575 = vmatprep.subr.mxu0 %v407
    %576 = vmatpush1.msra.mxu0 %v406
    %577 = vmatprep.subr.mxu0 %v416
    %578 = vmatpush1.msra.mxu0 %v415
    %579 = vmatprep.subr.mxu0 %v425
    %580 = vmatpush1.msra.mxu0 %v424
    %581 = vmatprep.subr.mxu0 %v434
    %582 = vmatpush1.msra.mxu0 %v433
    %583 = vmatprep.subr.mxu0 %v443
    %584 = vmatpush1.msra.mxu0 %v442
    %585 = vmatprep.subr.mxu0 %v452
    %586 = vmatpush1.msra.mxu0 %v451
    %587 = vmatprep.subr.mxu0 %v461
    %588 = vmatpush1.msra.mxu0 %v460
    %589 = vmatprep.subr.mxu0 %v470
    %590 = vmatpush1.msra.mxu0 %v469
    %591 = vmatprep.mubr.f32.mxu0 %v186
    %592 = vmatmul.mubr.f32.gmra.mrb[0].mxu0 %v179
    %v593 = vpop.f32.mrb[0].mxu0
    %v594 = vadd.f32 %v485, %v593
    %v595 = vpop.f32.mrb[0].mxu0
    %v596 = vadd.f32 %v489, %v595
    %597 = vmatprep.mubr.f32.mxu0 %v189
    %598 = vmatmul.mubr.f32.gmra.mrb[0].mxu0 %v180
    %v599 = vpop.f32.mrb[0].mxu0
    %v600 = vadd.f32 %v485, %v599
    %v601 = vpop.f32.mrb[0].mxu0
    %v602 = vadd.f32 %v489, %v601
    %603 = vdwg.mxu0
    %604 = vmatprep.subr.mxu0 %v193
    %605 = vmatpush1.msra.mxu0 %v192
    %606 = vmatprep.subr.mxu0 %v202
    %607 = vmatpush1.msra.mxu0 %v201
    %608 = vmatprep.subr.mxu0 %v211
    %609 = vmatpush1.msra.mxu0 %v210
    %610 = vmatprep.subr.mxu0 %v220
    %611 = vmatpush1.msra.mxu0 %v219
    %612 = vmatprep.subr.mxu0 %v229
    %613 = vmatpush1.msra.mxu0 %v228
    %614 = vmatprep.subr.mxu0 %v238
    %615 = vmatpush1.msra.mxu0 %v237
    %616 = vmatprep.subr.mxu0 %v247
    %617 = vmatpush1.msra.mxu0 %v246
    %618 = vmatprep.subr.mxu0 %v256
    %619 = vmatpush1.msra.mxu0 %v255
    %620 = vmatprep.subr.mxu0 %v265
    %621 = vmatpush1.msra.mxu0 %v264
    %622 = vmatprep.subr.mxu0 %v274
    %623 = vmatpush1.msra.mxu0 %v273
    %624 = vmatprep.subr.mxu0 %v283
    %625 = vmatpush1.msra.mxu0 %v282
    %626 = vmatprep.subr.mxu0 %v292
    %627 = vmatpush1.msra.mxu0 %v291
    %628 = vmatprep.subr.mxu0 %v301
    %629 = vmatpush1.msra.mxu0 %v300
    %630 = vmatprep.subr.mxu0 %v310
    %631 = vmatpush1.msra.mxu0 %v309
    %632 = vmatprep.subr.mxu0 %v319
    %633 = vmatpush1.msra.mxu0 %v318
    %634 = vmatprep.subr.mxu0 %v328
    %635 = vmatpush1.msra.mxu0 %v327
    %636 = vmatprep.subr.mxu0 %v337
    %637 = vmatpush1.msra.mxu0 %v336
    %638 = vmatprep.subr.mxu0 %v346
    %639 = vmatpush1.msra.mxu0 %v345
    %640 = vmatprep.subr.mxu0 %v355
    %641 = vmatpush1.msra.mxu0 %v354
    %642 = vmatprep.subr.mxu0 %v364
    %643 = vmatpush1.msra.mxu0 %v363
    %644 = vmatprep.subr.mxu0 %v373
    %645 = vmatpush1.msra.mxu0 %v372
    %646 = vmatprep.subr.mxu0 %v382
    %647 = vmatpush1.msra.mxu0 %v381
    %648 = vmatprep.subr.mxu0 %v391
    %649 = vmatpush1.msra.mxu0 %v390
    %650 = vmatprep.subr.mxu0 %v400
    %651 = vmatpush1.msra.mxu0 %v399
    %652 = vmatprep.subr.mxu0 %v409
    %653 = vmatpush1.msra.mxu0 %v408
    %654 = vmatprep.subr.mxu0 %v418
    %655 = vmatpush1.msra.mxu0 %v417
    %656 = vmatprep.subr.mxu0 %v427
    %657 = vmatpush1.msra.mxu0 %v426
    %658 = vmatprep.subr.mxu0 %v436
    %659 = vmatpush1.msra.mxu0 %v435
    %660 = vmatprep.subr.mxu0 %v445
    %661 = vmatpush1.msra.mxu0 %v444
    %662 = vmatprep.subr.mxu0 %v454
    %663 = vmatpush1.msra.mxu0 %v453
    %664 = vmatprep.subr.mxu0 %v463
    %665 = vmatpush1.msra.mxu0 %v462
    %666 = vmatprep.subr.mxu0 %v472
    %667 = vmatpush1.msra.mxu0 %v471
    %668 = vmatprep.mubr.f32.mxu0 %v186
    %669 = vmatmul.mubr.f32.gmra.mrb[0].mxu0 %v179
    %v670 = vpop.f32.mrb[0].mxu0
    %v671 = vadd.f32 %v493, %v670
    %v672 = vpop.f32.mrb[0].mxu0
    %v673 = vadd.f32 %v497, %v672
    %674 = vmatprep.mubr.f32.mxu0 %v189
    %675 = vmatmul.mubr.f32.gmra.mrb[0].mxu0 %v180
    %v676 = vpop.f32.mrb[0].mxu0
    %v677 = vadd.f32 %v493, %v676
    %v678 = vpop.f32.mrb[0].mxu0
    %v679 = vadd.f32 %v497, %v678
    %680 = vdwg.mxu0
    %681 = vmatprep.subr.mxu0 %v195
    %682 = vmatpush1.msra.mxu0 %v194
    %683 = vmatprep.subr.mxu0 %v204
    %684 = vmatpush1.msra.mxu0 %v203
    %685 = vmatprep.subr.mxu0 %v213
    %686 = vmatpush1.msra.mxu0 %v212
    %687 = vmatprep.subr.mxu0 %v222
    %688 = vmatpush1.msra.mxu0 %v221
    %689 = vmatprep.subr.mxu0 %v231
    %690 = vmatpush1.msra.mxu0 %v230
    %691 = vmatprep.subr.mxu0 %v240
    %692 = vmatpush1.msra.mxu0 %v239
    %693 = vmatprep.subr.mxu0 %v249
    %694 = vmatpush1.msra.mxu0 %v248
    %695 = vmatprep.subr.mxu0 %v258
    %696 = vmatpush1.msra.mxu0 %v257
    %697 = vmatprep.subr.mxu0 %v267
    %698 = vmatpush1.msra.mxu0 %v266
    %699 = vmatprep.subr.mxu0 %v276
    %700 = vmatpush1.msra.mxu0 %v275
    %701 = vmatprep.subr.mxu0 %v285
    %702 = vmatpush1.msra.mxu0 %v284
    %703 = vmatprep.subr.mxu0 %v294
    %704 = vmatpush1.msra.mxu0 %v293
    %705 = vmatprep.subr.mxu0 %v303
    %706 = vmatpush1.msra.mxu0 %v302
    %707 = vmatprep.subr.mxu0 %v312
    %708 = vmatpush1.msra.mxu0 %v311
    %709 = vmatprep.subr.mxu0 %v321
    %710 = vmatpush1.msra.mxu0 %v320
    %711 = vmatprep.subr.mxu0 %v330
    %712 = vmatpush1.msra.mxu0 %v329
    %713 = vmatprep.subr.mxu0 %v339
    %714 = vmatpush1.msra.mxu0 %v338
    %715 = vmatprep.subr.mxu0 %v348
    %716 = vmatpush1.msra.mxu0 %v347
    %717 = vmatprep.subr.mxu0 %v357
    %718 = vmatpush1.msra.mxu0 %v356
    %719 = vmatprep.subr.mxu0 %v366
    %720 = vmatpush1.msra.mxu0 %v365
    %721 = vmatprep.subr.mxu0 %v375
    %722 = vmatpush1.msra.mxu0 %v374
    %723 = vmatprep.subr.mxu0 %v384
    %724 = vmatpush1.msra.mxu0 %v383
    %725 = vmatprep.subr.mxu0 %v393
    %726 = vmatpush1.msra.mxu0 %v392
    %727 = vmatprep.subr.mxu0 %v402
    %728 = vmatpush1.msra.mxu0 %v401
    %729 = vmatprep.subr.mxu0 %v411
    %730 = vmatpush1.msra.mxu0 %v410
    %731 = vmatprep.subr.mxu0 %v420
    %732 = vmatpush1.msra.mxu0 %v419
    %733 = vmatprep.subr.mxu0 %v429
    %734 = vmatpush1.msra.mxu0 %v428
    %735 = vmatprep.subr.mxu0 %v438
    %736 = vmatpush1.msra.mxu0 %v437
    %737 = vmatprep.subr.mxu0 %v447
    %738 = vmatpush1.msra.mxu0 %v446
    %739 = vmatprep.subr.mxu0 %v456
    %740 = vmatpush1.msra.mxu0 %v455
    %741 = vmatprep.subr.mxu0 %v465
    %742 = vmatpush1.msra.mxu0 %v464
    %743 = vmatprep.subr.mxu0 %v474
    %744 = vmatpush1.msra.mxu0 %v473
    %745 = vmatprep.mubr.f32.mxu0 %v186
    %746 = vmatmul.mubr.f32.gmra.mrb[0].mxu0 %v179
    %v747 = vpop.f32.mrb[0].mxu0
    %v748 = vadd.f32 %v501, %v747
    %v749 = vpop.f32.mrb[0].mxu0
    %v750 = vadd.f32 %v505, %v749
    %751 = vmatprep.mubr.f32.mxu0 %v189
    %752 = vmatmul.mubr.f32.gmra.mrb[0].mxu0 %v180
    %v753 = vpop.f32.mrb[0].mxu0
    %v754 = vadd.f32 %v501, %v753
    %v755 = vpop.f32.mrb[0].mxu0
    %v756 = vadd.f32 %v505, %v755
    %757 = vdwg.mxu0
    %758 = vmatprep.subr.mxu0 %v197
    %759 = vmatpush1.msra.mxu0 %v196
    %760 = vmatprep.subr.mxu0 %v206
    %761 = vmatpush1.msra.mxu0 %v205
    %762 = vmatprep.subr.mxu0 %v215
    %763 = vmatpush1.msra.mxu0 %v214
    %764 = vmatprep.subr.mxu0 %v224
    %765 = vmatpush1.msra.mxu0 %v223
    %766 = vmatprep.subr.mxu0 %v233
    %767 = vmatpush1.msra.mxu0 %v232
    %768 = vmatprep.subr.mxu0 %v242
    %769 = vmatpush1.msra.mxu0 %v241
    %770 = vmatprep.subr.mxu0 %v251
    %771 = vmatpush1.msra.mxu0 %v250
    %772 = vmatprep.subr.mxu0 %v260
    %773 = vmatpush1.msra.mxu0 %v259
    %774 = vmatprep.subr.mxu0 %v269
    %775 = vmatpush1.msra.mxu0 %v268
    %776 = vmatprep.subr.mxu0 %v278
    %777 = vmatpush1.msra.mxu0 %v277
    %778 = vmatprep.subr.mxu0 %v287
    %779 = vmatpush1.msra.mxu0 %v286
    %780 = vmatprep.subr.mxu0 %v296
    %781 = vmatpush1.msra.mxu0 %v295
    %782 = vmatprep.subr.mxu0 %v305
    %783 = vmatpush1.msra.mxu0 %v304
    %784 = vmatprep.subr.mxu0 %v314
    %785 = vmatpush1.msra.mxu0 %v313
    %786 = vmatprep.subr.mxu0 %v323
    %787 = vmatpush1.msra.mxu0 %v322
    %788 = vmatprep.subr.mxu0 %v332
    %789 = vmatpush1.msra.mxu0 %v331
    %790 = vmatprep.subr.mxu0 %v341
    %791 = vmatpush1.msra.mxu0 %v340
    %792 = vmatprep.subr.mxu0 %v350
    %793 = vmatpush1.msra.mxu0 %v349
    %794 = vmatprep.subr.mxu0 %v359
    %795 = vmatpush1.msra.mxu0 %v358
    %796 = vmatprep.subr.mxu0 %v368
    %797 = vmatpush1.msra.mxu0 %v367
    %798 = vmatprep.subr.mxu0 %v377
    %799 = vmatpush1.msra.mxu0 %v376
    %800 = vmatprep.subr.mxu0 %v386
    %801 = vmatpush1.msra.mxu0 %v385
    %802 = vmatprep.subr.mxu0 %v395
    %803 = vmatpush1.msra.mxu0 %v394
    %804 = vmatprep.subr.mxu0 %v404
    %805 = vmatpush1.msra.mxu0 %v403
    %806 = vmatprep.subr.mxu0 %v413
    %807 = vmatpush1.msra.mxu0 %v412
    %808 = vmatprep.subr.mxu0 %v422
    %809 = vmatpush1.msra.mxu0 %v421
    %810 = vmatprep.subr.mxu0 %v431
    %811 = vmatpush1.msra.mxu0 %v430
    %812 = vmatprep.subr.mxu0 %v440
    %813 = vmatpush1.msra.mxu0 %v439
    %814 = vmatprep.subr.mxu0 %v449
    %815 = vmatpush1.msra.mxu0 %v448
    %816 = vmatprep.subr.mxu0 %v458
    %817 = vmatpush1.msra.mxu0 %v457
    %818 = vmatprep.subr.mxu0 %v467
    %819 = vmatpush1.msra.mxu0 %v466
    %820 = vmatprep.subr.mxu0 %v476
    %821 = vmatpush1.msra.mxu0 %v475
    %822 = vmatprep.mubr.f32.mxu0 %v186
    %823 = vmatmul.mubr.f32.gmra.mrb[0].mxu0 %v179
    %v824 = vpop.f32.mrb[0].mxu0
    %v825 = vadd.f32 %v509, %v824
    %v826 = vpop.f32.mrb[0].mxu0
    %v827 = vadd.f32 %v513, %v826
    %828 = vmatprep.mubr.f32.mxu0 %v189
    %829 = vmatmul.mubr.f32.gmra.mrb[0].mxu0 %v180
    %v830 = vpop.f32.mrb[0].mxu0
    %v831 = vadd.f32 %v509, %v830
    %v832 = vpop.f32.mrb[0].mxu0
    %v833 = vadd.f32 %v513, %v832
    %834 = vdwg.mxu0
    %835 = vmatprep.subr.mxu0 0.0
    %836 = vmatpush1.msra.mxu0 %v198
    %837 = vmatprep.subr.mxu0 0.0
    %838 = vmatpush1.msra.mxu0 %v207
    %839 = vmatprep.subr.mxu0 0.0
    %840 = vmatpush1.msra.mxu0 %v216
    %841 = vmatprep.subr.mxu0 0.0
    %842 = vmatpush1.msra.mxu0 %v225
    %843 = vmatprep.subr.mxu0 0.0
    %844 = vmatpush1.msra.mxu0 %v234
    %845 = vmatprep.subr.mxu0 0.0
    %846 = vmatpush1.msra.mxu0 %v243
    %847 = vmatprep.subr.mxu0 0.0
    %848 = vmatpush1.msra.mxu0 %v252
    %849 = vmatprep.subr.mxu0 0.0
    %850 = vmatpush1.msra.mxu0 %v261
    %851 = vmatprep.subr.mxu0 0.0
    %852 = vmatpush1.msra.mxu0 %v270
    %853 = vmatprep.subr.mxu0 0.0
    %854 = vmatpush1.msra.mxu0 %v279
    %855 = vmatprep.subr.mxu0 0.0
    %856 = vmatpush1.msra.mxu0 %v288
    %857 = vmatprep.subr.mxu0 0.0
    %858 = vmatpush1.msra.mxu0 %v297
    %859 = vmatprep.subr.mxu0 0.0
    %860 = vmatpush1.msra.mxu0 %v306
    %861 = vmatprep.subr.mxu0 0.0
    %862 = vmatpush1.msra.mxu0 %v315
    %863 = vmatprep.subr.mxu0 0.0
    %864 = vmatpush1.msra.mxu0 %v324
    %865 = vmatprep.subr.mxu0 0.0
    %866 = vmatpush1.msra.mxu0 %v333
    %867 = vmatprep.subr.mxu0 0.0
    %868 = vmatpush1.msra.mxu0 %v342
    %869 = vmatprep.subr.mxu0 0.0
    %870 = vmatpush1.msra.mxu0 %v351
    %871 = vmatprep.subr.mxu0 0.0
    %872 = vmatpush1.msra.mxu0 %v360
    %873 = vmatprep.subr.mxu0 0.0
    %874 = vmatpush1.msra.mxu0 %v369
    %875 = vmatprep.subr.mxu0 0.0
    %876 = vmatpush1.msra.mxu0 %v378
    %877 = vmatprep.subr.mxu0 0.0
    %878 = vmatpush1.msra.mxu0 %v387
    %879 = vmatprep.subr.mxu0 0.0
    %880 = vmatpush1.msra.mxu0 %v396
    %881 = vmatprep.subr.mxu0 0.0
    %882 = vmatpush1.msra.mxu0 %v405
    %883 = vmatprep.subr.mxu0 0.0
    %884 = vmatpush1.msra.mxu0 %v414
    %885 = vmatprep.subr.mxu0 0.0
    %886 = vmatpush1.msra.mxu0 %v423
    %887 = vmatprep.subr.mxu0 0.0
    %888 = vmatpush1.msra.mxu0 %v432
    %889 = vmatprep.subr.mxu0 0.0
    %890 = vmatpush1.msra.mxu0 %v441
    %891 = vmatprep.subr.mxu0 0.0
    %892 = vmatpush1.msra.mxu0 %v450
    %893 = vmatprep.subr.mxu0 0.0
    %894 = vmatpush1.msra.mxu0 %v459
    %895 = vmatprep.subr.mxu0 0.0
    %896 = vmatpush1.msra.mxu0 %v468
    %897 = vmatprep.subr.mxu0 0.0
    %898 = vmatpush1.msra.mxu0 %v477
    %899 = vmatprep.mubr.f32.mxu0 %v186
    %900 = vmatmul.mubr.f32.gmra.mrb[0].mxu0 %v179
    %v901 = vpop.f32.mrb[0].mxu0
    %v902 = vadd.f32 %v517, %v901
    %v903 = vpop.f32.mrb[0].mxu0
    %904 = vmatprep.mubr.f32.mxu0 %v189
    %905 = vmatmul.mubr.f32.gmra.mrb[0].mxu0 %v180
    %v906 = vpop.f32.mrb[0].mxu0
    %v907 = vadd.f32 %v517, %v906
    %v908 = vpop.f32.mrb[0].mxu0
    %909 = vdwg.mxu0
    %vm910 = vcmp.gt.f32.partialorder %v748, 0.0
    %vm911 = vcmp.gt.f32.partialorder %v750, 0.0
    %vm912 = vcmp.gt.f32.partialorder %v825, 0.0
    %vm913 = vcmp.gt.f32.partialorder %v827, 0.0
    %vm914 = vcmp.gt.f32.partialorder %v902, 0.0
    %vm915 = vcmp.gt.f32.partialorder %v754, 0.0
    %vm916 = vcmp.gt.f32.partialorder %v756, 0.0
    %vm917 = vcmp.gt.f32.partialorder %v831, 0.0
    %vm918 = vcmp.gt.f32.partialorder %v833, 0.0
    %vm919 = vcmp.gt.f32.partialorder %v907, 0.0
    %v920 = vmin.f32 %v748, 0.0
    %v921 = vmin.f32 %v750, 0.0
    %v922 = vmin.f32 %v825, 0.0
    %v923 = vmin.f32 %v827, 0.0
    %v924 = vmin.f32 %v902, 0.0
    %v925 = vmin.f32 %v754, 0.0
    %v926 = vmin.f32 %v756, 0.0
    %v927 = vmin.f32 %v831, 0.0
    %v928 = vmin.f32 %v833, 0.0
    %v929 = vmin.f32 %v907, 0.0
    %v930 = vmul.f32 %v920, 1.442695
    %v931 = vpow.pop %v930
    %v932 = vmul.f32 %v921, 1.442695
    %v933 = vpow.pop %v932
    %v934 = vmul.f32 %v922, 1.442695
    %v935 = vpow.pop %v934
    %v936 = vmul.f32 %v923, 1.442695
    %v937 = vpow.pop %v936
    %v938 = vmul.f32 %v924, 1.442695
    %v939 = vpow.pop %v938
    %v940 = vmul.f32 %v925, 1.442695
    %v941 = vpow.pop %v940
    %v942 = vmul.f32 %v926, 1.442695
    %v943 = vpow.pop %v942
    %v944 = vmul.f32 %v927, 1.442695
    %v945 = vpow.pop %v944
    %v946 = vmul.f32 %v928, 1.442695
    %v947 = vpow.pop %v946
    %v948 = vmul.f32 %v929, 1.442695
    %v949 = vpow.pop %v948
    %v950 = vsub.f32 %v931, 1.0
    %v951 = vsub.f32 %v933, 1.0
    %v952 = vsub.f32 %v935, 1.0
    %v953 = vsub.f32 %v937, 1.0
    %v954 = vsub.f32 %v939, 1.0
    %v955 = vsub.f32 %v941, 1.0
    %v956 = vsub.f32 %v943, 1.0
    %v957 = vsub.f32 %v945, 1.0
    %v958 = vsub.f32 %v947, 1.0
    %v959 = vsub.f32 %v949, 1.0
    %v960 = vsel %vm910, %v748, %v950
    %v961 = vsel %vm911, %v750, %v951
    %v962 = vsel %vm912, %v825, %v952
    %v963 = vsel %vm913, %v827, %v953
    %v964 = vsel %vm914, %v902, %v954
    %v965 = vsel %vm915, %v754, %v955
    %v966 = vsel %vm916, %v756, %v956
    %v967 = vsel %vm917, %v831, %v957
    %v968 = vsel %vm918, %v833, %v958
    %v969 = vsel %vm919, %v907, %v959
    %v970 = vadd.f32 %v960, %v965
    %v971 = vrot.slane %v970, 4
    %v972 = vadd.f32 %v970, %v971
    %v973 = vrot.slane %v972, 2
    %v974 = vadd.f32 %v972, %v973
    %v975 = vrot.slane %v974, 1
    %v976 = vadd.f32 %v974, %v975
    %v977 = vadd.f32 %v961, %v966
    %v978 = vrot.slane %v977, 4
    %v979 = vadd.f32 %v977, %v978
    %v980 = vrot.slane %v979, 2
    %v981 = vadd.f32 %v979, %v980
    %v982 = vrot.slane %v981, 1
    %v983 = vadd.f32 %v981, %v982
    %v984 = vadd.f32 %v962, %v967
    %v985 = vrot.slane %v984, 4
    %v986 = vadd.f32 %v984, %v985
    %v987 = vrot.slane %v986, 2
    %v988 = vadd.f32 %v986, %v987
    %v989 = vrot.slane %v988, 1
    %v990 = vadd.f32 %v988, %v989
    %v991 = vadd.f32 %v963, %v968
    %v992 = vrot.slane %v991, 4
    %v993 = vadd.f32 %v991, %v992
    %v994 = vrot.slane %v993, 2
    %v995 = vadd.f32 %v993, %v994
    %v996 = vrot.slane %v995, 1
    %v997 = vadd.f32 %v995, %v996
    %v998 = vsel %vm58, %v964, 0.0
    %v999 = vsel %vm58, %v969, 0.0
    %v1000 = vadd.f32 %v998, %v999
    %v1001 = vrot.slane %v1000, 4
    %v1002 = vadd.f32 %v1000, %v1001
    %v1003 = vrot.slane %v1002, 2
    %v1004 = vadd.f32 %v1002, %v1003
    %v1005 = vrot.slane %v1004, 1
    %v1006 = vadd.f32 %v1004, %v1005
    %v1007 = vmul.f32 %v960, %v960
    %v1008 = vmul.f32 %v961, %v961
    %v1009 = vmul.f32 %v962, %v962
    %v1010 = vmul.f32 %v963, %v963
    %v1011 = vmul.f32 %v964, %v964
    %v1012 = vmul.f32 %v965, %v965
    %v1013 = vmul.f32 %v966, %v966
    %v1014 = vmul.f32 %v967, %v967
    %v1015 = vmul.f32 %v968, %v968
    %v1016 = vmul.f32 %v969, %v969
    %v1017 = vadd.f32 %v1007, %v1012
    %v1018 = vrot.slane %v1017, 4
    %v1019 = vadd.f32 %v1017, %v1018
    %v1020 = vrot.slane %v1019, 2
    %v1021 = vadd.f32 %v1019, %v1020
    %v1022 = vrot.slane %v1021, 1
    %v1023 = vadd.f32 %v1021, %v1022
    %v1024 = vadd.f32 %v1008, %v1013
    %v1025 = vrot.slane %v1024, 4
    %v1026 = vadd.f32 %v1024, %v1025
    %v1027 = vrot.slane %v1026, 2
    %v1028 = vadd.f32 %v1026, %v1027
    %v1029 = vrot.slane %v1028, 1
    %v1030 = vadd.f32 %v1028, %v1029
    %v1031 = vadd.f32 %v1009, %v1014
    %v1032 = vrot.slane %v1031, 4
    %v1033 = vadd.f32 %v1031, %v1032
    %v1034 = vrot.slane %v1033, 2
    %v1035 = vadd.f32 %v1033, %v1034
    %v1036 = vrot.slane %v1035, 1
    %v1037 = vadd.f32 %v1035, %v1036
    %v1038 = vadd.f32 %v1010, %v1015
    %v1039 = vrot.slane %v1038, 4
    %v1040 = vadd.f32 %v1038, %v1039
    %v1041 = vrot.slane %v1040, 2
    %v1042 = vadd.f32 %v1040, %v1041
    %v1043 = vrot.slane %v1042, 1
    %v1044 = vadd.f32 %v1042, %v1043
    %v1045 = vsel %vm58, %v1011, 0.0
    %v1046 = vsel %vm58, %v1016, 0.0
    %v1047 = vadd.f32 %v1045, %v1046
    %v1048 = vrot.slane %v1047, 4
    %v1049 = vadd.f32 %v1047, %v1048
    %v1050 = vrot.slane %v1049, 2
    %v1051 = vadd.f32 %v1049, %v1050
    %v1052 = vrot.slane %v1051, 1
    %v1053 = vadd.f32 %v1051, %v1052
    %vm1054 = vcmask 1040384
    %v1055 = vsel %vm1054, %v976, %v1023
    %v1056 = vsel %vm1054, %v983, %v1030
    %v1057 = vsel %vm1054, %v990, %v1037
    %v1058 = vsel %vm1054, %v997, %v1044
    %v1059 = vsel %vm1054, %v1006, %v1053
    %v1060 = vld [vmem:[%s5] sm:$0xff]
    %v1061 = vld [vmem:[%s5 + $0x8] sm:$0xff]
    %v1062 = vld [vmem:[%s5 + $0x10] sm:$0xff]
    %v1063 = vld [vmem:[%s5 + $0x18] sm:$0xff]
    %v1064 = vld [vmem:[%s5 + $0x20] sm:$0xff]
    %v1065 = vld [vmem:[%s5 + $0x28] sm:$0xff]
    %v1066 = vld [vmem:[%s5 + $0x30] sm:$0xff]
    %v1067 = vld [vmem:[%s5 + $0x38] sm:$0xff]
    %v1068 = vld [vmem:[%s5 + $0x40] sm:$0xff]
    %v1069 = vld [vmem:[%s5 + $0x48] sm:$0xff]
    %v1070 = vld [vmem:[%s5 + $0x50] sm:$0xff]
    %v1071 = vld [vmem:[%s5 + $0x58] sm:$0xff]
    %v1072 = vld [vmem:[%s5 + $0x60] sm:$0xff]
    %v1073 = vld [vmem:[%s5 + $0x68] sm:$0xff]
    %v1074 = vld [vmem:[%s5 + $0x70] sm:$0xff]
    %v1075 = vld [vmem:[%s5 + $0x78] sm:$0xff]
    %v1076 = vld [vmem:[%s5 + $0x80] sm:$0xff]
    %v1077 = vld [vmem:[%s5 + $0x88] sm:$0xff]
    %v1078 = vld [vmem:[%s5 + $0x90] sm:$0xff]
    %v1079 = vld [vmem:[%s5 + $0x98] sm:$0xff]
    %v1080 = vld [vmem:[%s5 + $0xa0] sm:$0xff]
    %v1081 = vld [vmem:[%s5 + $0xa8] sm:$0xff]
    %v1082 = vld [vmem:[%s5 + $0xb0] sm:$0xff]
    %v1083 = vld [vmem:[%s5 + $0xb8] sm:$0xff]
    %v1084 = vld [vmem:[%s5 + $0xc0] sm:$0xff]
    %v1085 = vld [vmem:[%s5 + $0xc8] sm:$0xff]
    %v1086 = vld [vmem:[%s5 + $0xd0] sm:$0xff]
    %v1087 = vld [vmem:[%s5 + $0xd8] sm:$0xff]
    %v1088 = vld [vmem:[%s5 + $0xe0] sm:$0xff]
    %v1089 = vld [vmem:[%s5 + $0xe8] sm:$0xff]
    %v1090 = vld [vmem:[%s5 + $0xf0] sm:$0xff]
    %v1091 = vld [vmem:[%s5 + $0xf8] sm:$0xff]
    %v1092 = vld [vmem:[%s5 + $0x100] sm:$0xff]
    %v1093 = vld [vmem:[%s5 + $0x108] sm:$0xff]
    %v1094 = vld [vmem:[%s5 + $0x110] sm:$0xff]
    %v1095 = vld [vmem:[%s5 + $0x118] sm:$0xff]
    %v1096 = vld [vmem:[%s5 + $0x120] sm:$0xff]
    %v1097 = vld [vmem:[%s5 + $0x128] sm:$0xff]
    %v1098 = vld [vmem:[%s5 + $0x130] sm:$0xff]
    %v1099 = vld [vmem:[%s5 + $0x138] sm:$0xff]
    %v1100 = vld [vmem:[%s5 + $0x140] sm:$0xff]
    %v1101 = vld [vmem:[%s5 + $0x148] sm:$0xff]
    %v1102 = vld [vmem:[%s5 + $0x150] sm:$0xff]
    %v1103 = vld [vmem:[%s5 + $0x158] sm:$0xff]
    %v1104 = vld [vmem:[%s5 + $0x160] sm:$0xff]
    %v1105 = vld [vmem:[%s5 + $0x168] sm:$0xff]
    %v1106 = vld [vmem:[%s5 + $0x170] sm:$0xff]
    %v1107 = vld [vmem:[%s5 + $0x178] sm:$0xff]
    %v1108 = vld [vmem:[%s5 + $0x180] sm:$0xff]
    %v1109 = vld [vmem:[%s5 + $0x188] sm:$0xff]
    %v1110 = vld [vmem:[%s5 + $0x190] sm:$0xff]
    %v1111 = vld [vmem:[%s5 + $0x198] sm:$0xff]
    %v1112 = vld [vmem:[%s5 + $0x1a0] sm:$0xff]
    %v1113 = vld [vmem:[%s5 + $0x1a8] sm:$0xff]
    %v1114 = vld [vmem:[%s5 + $0x1b0] sm:$0xff]
    %v1115 = vld [vmem:[%s5 + $0x1b8] sm:$0xff]
    %v1116 = vld [vmem:[%s5 + $0x1c0] sm:$0xff]
    %v1117 = vld [vmem:[%s5 + $0x1c8] sm:$0xff]
    %v1118 = vld [vmem:[%s5 + $0x1d0] sm:$0xff]
    %v1119 = vld [vmem:[%s5 + $0x1d8] sm:$0xff]
    %v1120 = vld [vmem:[%s5 + $0x1e0] sm:$0xff]
    %v1121 = vld [vmem:[%s5 + $0x1e8] sm:$0xff]
    %v1122 = vld [vmem:[%s5 + $0x1f0] sm:$0xff]
    %v1123 = vld [vmem:[%s5 + $0x1f8] sm:$0xff]
    %v1124 = vld [vmem:[%s5 + $0x200] sm:$0xff]
    %v1125 = vld [vmem:[%s5 + $0x208] sm:$0xff]
    %v1127 = vsel %vm58, %v1059, 0
    %1129 = vmatprep.subr.mxu0 0.0
    %1130 = vmatpush1.msra.mxu0 %v1060
    %1131 = vmatprep.subr.mxu0 0.0
    %1132 = vmatpush1.msra.mxu0 %v1061
    %1133 = vmatprep.subr.mxu0 0.0
    %1134 = vmatpush1.msra.mxu0 %v1062
    %1135 = vmatprep.subr.mxu0 0.0
    %1136 = vmatpush1.msra.mxu0 %v1063
    %1137 = vmatprep.subr.mxu0 0.0
    %1138 = vmatpush1.msra.mxu0 %v1064
    %1139 = vmatprep.subr.mxu0 0.0
    %1140 = vmatpush1.msra.mxu0 %v1065
    %1141 = vmatprep.subr.mxu0 0.0
    %1142 = vmatpush1.msra.mxu0 %v1066
    %1143 = vmatprep.subr.mxu0 0.0
    %1144 = vmatpush1.msra.mxu0 %v1067
    %1145 = vmatprep.subr.mxu0 0.0
    %1146 = vmatpush1.msra.mxu0 %v1068
    %1147 = vmatprep.subr.mxu0 0.0
    %1148 = vmatpush1.msra.mxu0 %v1069
    %1149 = vmatprep.subr.mxu0 0.0
    %1150 = vmatpush1.msra.mxu0 %v1070
    %1151 = vmatprep.subr.mxu0 0.0
    %1152 = vmatpush1.msra.mxu0 %v1071
    %1153 = vmatprep.subr.mxu0 0.0
    %1154 = vmatpush1.msra.mxu0 %v1072
    %1155 = vmatprep.subr.mxu0 0.0
    %1156 = vmatpush1.msra.mxu0 %v1073
    %1157 = vmatprep.subr.mxu0 0.0
    %1158 = vmatpush1.msra.mxu0 %v1074
    %1159 = vmatprep.subr.mxu0 0.0
    %1160 = vmatpush1.msra.mxu0 %v1075
    %1161 = vmatprep.subr.mxu0 0.0
    %1162 = vmatpush1.msra.mxu0 %v1076
    %1163 = vmatprep.subr.mxu0 0.0
    %1164 = vmatpush1.msra.mxu0 %v1077
    %1165 = vmatprep.subr.mxu0 0.0
    %1166 = vmatpush1.msra.mxu0 %v1078
    %1167 = vmatprep.subr.mxu0 0.0
    %1168 = vmatpush1.msra.mxu0 %v1079
    %1169 = vmatprep.subr.mxu0 0.0
    %1170 = vmatpush1.msra.mxu0 %v1080
    %1171 = vmatprep.subr.mxu0 0.0
    %1172 = vmatpush1.msra.mxu0 %v1081
    %1173 = vmatprep.subr.mxu0 0.0
    %1174 = vmatpush1.msra.mxu0 %v1082
    %1175 = vmatprep.subr.mxu0 0.0
    %1176 = vmatpush1.msra.mxu0 %v1083
    %1177 = vmatprep.subr.mxu0 0.0
    %1178 = vmatpush1.msra.mxu0 %v1084
    %1179 = vmatprep.subr.mxu0 0.0
    %1180 = vmatpush1.msra.mxu0 %v1085
    %1181 = vmatprep.subr.mxu0 0.0
    %1182 = vmatpush1.msra.mxu0 %v1086
    %1183 = vmatprep.subr.mxu0 0.0
    %1184 = vmatpush1.msra.mxu0 %v1087
    %1185 = vmatprep.subr.mxu0 0.0
    %1186 = vmatpush1.msra.mxu0 %v1088
    %1187 = vmatprep.subr.mxu0 0.0
    %1188 = vmatpush1.msra.mxu0 %v1089
    %1189 = vmatprep.subr.mxu0 0.0
    %1190 = vmatpush1.msra.mxu0 %v1090
    %1191 = vmatprep.subr.mxu0 0.0
    %1192 = vmatpush1.msra.mxu0 %v1091
    %1193 = vmatprep.mubr.f32.mxu0 %v1056
    %1194 = vmatmul.mubr.f32.gmra.mrb[0].mxu0 %v1055
    %v1195 = vpop.f32.mrb[0].mxu0
    %v1196 = vadd.f32 0.0, %v1195
    %v1197 = vpop.f32.mrb[0].mxu0
    %1198 = vdwg.mxu0
    %1199 = vmatprep.subr.mxu0 0.0
    %1200 = vmatpush1.msra.mxu0 %v1092
    %1201 = vmatprep.subr.mxu0 0.0
    %1202 = vmatpush1.msra.mxu0 %v1093
    %1203 = vmatprep.subr.mxu0 0.0
    %1204 = vmatpush1.msra.mxu0 %v1094
    %1205 = vmatprep.subr.mxu0 0.0
    %1206 = vmatpush1.msra.mxu0 %v1095
    %1207 = vmatprep.subr.mxu0 0.0
    %1208 = vmatpush1.msra.mxu0 %v1096
    %1209 = vmatprep.subr.mxu0 0.0
    %1210 = vmatpush1.msra.mxu0 %v1097
    %1211 = vmatprep.subr.mxu0 0.0
    %1212 = vmatpush1.msra.mxu0 %v1098
    %1213 = vmatprep.subr.mxu0 0.0
    %1214 = vmatpush1.msra.mxu0 %v1099
    %1215 = vmatprep.subr.mxu0 0.0
    %1216 = vmatpush1.msra.mxu0 %v1100
    %1217 = vmatprep.subr.mxu0 0.0
    %1218 = vmatpush1.msra.mxu0 %v1101
    %1219 = vmatprep.subr.mxu0 0.0
    %1220 = vmatpush1.msra.mxu0 %v1102
    %1221 = vmatprep.subr.mxu0 0.0
    %1222 = vmatpush1.msra.mxu0 %v1103
    %1223 = vmatprep.subr.mxu0 0.0
    %1224 = vmatpush1.msra.mxu0 %v1104
    %1225 = vmatprep.subr.mxu0 0.0
    %1226 = vmatpush1.msra.mxu0 %v1105
    %1227 = vmatprep.subr.mxu0 0.0
    %1228 = vmatpush1.msra.mxu0 %v1106
    %1229 = vmatprep.subr.mxu0 0.0
    %1230 = vmatpush1.msra.mxu0 %v1107
    %1231 = vmatprep.subr.mxu0 0.0
    %1232 = vmatpush1.msra.mxu0 %v1108
    %1233 = vmatprep.subr.mxu0 0.0
    %1234 = vmatpush1.msra.mxu0 %v1109
    %1235 = vmatprep.subr.mxu0 0.0
    %1236 = vmatpush1.msra.mxu0 %v1110
    %1237 = vmatprep.subr.mxu0 0.0
    %1238 = vmatpush1.msra.mxu0 %v1111
    %1239 = vmatprep.subr.mxu0 0.0
    %1240 = vmatpush1.msra.mxu0 %v1112
    %1241 = vmatprep.subr.mxu0 0.0
    %1242 = vmatpush1.msra.mxu0 %v1113
    %1243 = vmatprep.subr.mxu0 0.0
    %1244 = vmatpush1.msra.mxu0 %v1114
    %1245 = vmatprep.subr.mxu0 0.0
    %1246 = vmatpush1.msra.mxu0 %v1115
    %1247 = vmatprep.subr.mxu0 0.0
    %1248 = vmatpush1.msra.mxu0 %v1116
    %1249 = vmatprep.subr.mxu0 0.0
    %1250 = vmatpush1.msra.mxu0 %v1117
    %1251 = vmatprep.subr.mxu0 0.0
    %1252 = vmatpush1.msra.mxu0 %v1118
    %1253 = vmatprep.subr.mxu0 0.0
    %1254 = vmatpush1.msra.mxu0 %v1119
    %1255 = vmatprep.subr.mxu0 0.0
    %1256 = vmatpush1.msra.mxu0 %v1120
    %1257 = vmatprep.subr.mxu0 0.0
    %1258 = vmatpush1.msra.mxu0 %v1121
    %1259 = vmatprep.subr.mxu0 0.0
    %1260 = vmatpush1.msra.mxu0 %v1122
    %1261 = vmatprep.subr.mxu0 0.0
    %1262 = vmatpush1.msra.mxu0 %v1123
    %1263 = vmatprep.mubr.f32.mxu0 %v1058
    %1264 = vmatmul.mubr.f32.gmra.mrb[0].mxu0 %v1057
    %v1265 = vpop.f32.mrb[0].mxu0
    %v1266 = vadd.f32 %v1196, %v1265
    %v1267 = vpop.f32.mrb[0].mxu0
    %1268 = vdwg.mxu0
    %1269 = vmatprep.subr.mxu0 0.0
    %1270 = vmatpush1.msra.mxu0 %v1124
    %1271 = vmatprep.subr.mxu0 0.0
    %1272 = vmatpush1.msra.mxu0 %v1125
    %1273 = vmatprep.subr.mxu0 0.0
    %1274 = vmatpush1.msra.mxu0 0.0
    %1275 = vmatprep.subr.mxu0 0.0
    %1276 = vmatpush1.msra.mxu0 0.0
    %1277 = vmatprep.subr.mxu0 0.0
    %1278 = vmatpush1.msra.mxu0 0.0
    %1279 = vmatprep.subr.mxu0 0.0
    %1280 = vmatpush1.msra.mxu0 0.0
    %1281 = vmatprep.subr.mxu0 0.0
    %1282 = vmatpush1.msra.mxu0 0.0
    %1283 = vmatprep.subr.mxu0 0.0
    %1284 = vmatpush1.msra.mxu0 0.0
    %1285 = vmatprep.subr.mxu0 0.0
    %1286 = vmatpush1.msra.mxu0 0.0
    %1287 = vmatprep.subr.mxu0 0.0
    %1288 = vmatpush1.msra.mxu0 0.0
    %1289 = vmatprep.subr.mxu0 0.0
    %1290 = vmatpush1.msra.mxu0 0.0
    %1291 = vmatprep.subr.mxu0 0.0
    %1292 = vmatpush1.msra.mxu0 0.0
    %1293 = vmatprep.subr.mxu0 0.0
    %1294 = vmatpush1.msra.mxu0 0.0
    %1295 = vmatprep.subr.mxu0 0.0
    %1296 = vmatpush1.msra.mxu0 0.0
    %1297 = vmatprep.subr.mxu0 0.0
    %1298 = vmatpush1.msra.mxu0 0.0
    %1299 = vmatprep.subr.mxu0 0.0
    %1300 = vmatpush1.msra.mxu0 0.0
    %1301 = vmatprep.subr.mxu0 0.0
    %1302 = vmatpush1.msra.mxu0 0.0
    %1303 = vmatprep.subr.mxu0 0.0
    %1304 = vmatpush1.msra.mxu0 0.0
    %1305 = vmatprep.subr.mxu0 0.0
    %1306 = vmatpush1.msra.mxu0 0.0
    %1307 = vmatprep.subr.mxu0 0.0
    %1308 = vmatpush1.msra.mxu0 0.0
    %1309 = vmatprep.subr.mxu0 0.0
    %1310 = vmatpush1.msra.mxu0 0.0
    %1311 = vmatprep.subr.mxu0 0.0
    %1312 = vmatpush1.msra.mxu0 0.0
    %1313 = vmatprep.subr.mxu0 0.0
    %1314 = vmatpush1.msra.mxu0 0.0
    %1315 = vmatprep.subr.mxu0 0.0
    %1316 = vmatpush1.msra.mxu0 0.0
    %1317 = vmatprep.subr.mxu0 0.0
    %1318 = vmatpush1.msra.mxu0 0.0
    %1319 = vmatprep.subr.mxu0 0.0
    %1320 = vmatpush1.msra.mxu0 0.0
    %1321 = vmatprep.subr.mxu0 0.0
    %1322 = vmatpush1.msra.mxu0 0.0
    %1323 = vmatprep.subr.mxu0 0.0
    %1324 = vmatpush1.msra.mxu0 0.0
    %1325 = vmatprep.subr.mxu0 0.0
    %1326 = vmatpush1.msra.mxu0 0.0
    %1327 = vmatprep.subr.mxu0 0.0
    %1328 = vmatpush1.msra.mxu0 0.0
    %1329 = vmatprep.subr.mxu0 0.0
    %1330 = vmatpush1.msra.mxu0 0.0
    %1331 = vmatprep.subr.mxu0 0.0
    %1332 = vmatpush1.msra.mxu0 0.0
    %1333 = vmatprep.mubr.f32.mxu0 0.0
    %1334 = vmatmul.mubr.f32.gmra.mrb[0].mxu0 %v1127
    %v1335 = vpop.f32.mrb[0].mxu0
    %v1336 = vadd.f32 %v1266, %v1335
    %v1337 = vpop.f32.mrb[0].mxu0
    %1338 = vdwg.mxu0
    %v1339 = vmul.f32 %v1336, %v1336
    %v1341 = vrot.slane %v1339, 7
    %v1343 = vsub.f32 %v1336, %v1341
    %v1344 = vmax.f32 %v1343, 0.0
    %v1345 = vld [vmem:[%s6] sm:$0x1]
    %v1347 = vlaneseq
    %v1348 = vshrl.u32 %v1347, 7
    %v1349 = vsub.s32 0, %v1348
    %v1350 = vrot.slane %v1345, %v1349
    %v1352 = vadd.f32 %v1344, %v1350
    %v1353 = vrsqrt.pop %v1352
    %v1354 = vmax.f32 %v594, %v671
    %v1355 = vmax.f32 %v600, %v677
    %v1357 = vrot.slane %v1354, 1
    %v1359 = vmax.f32 %v1354, %v1357
    %v1361 = vrot.slane %v1355, 1
    %v1363 = vmax.f32 %v1355, %v1361
    %v1365 = vrot.slane %v1359, 4
    %v1368 = vrot.slane %v1363, 4
    %v1370 = vmax.f32 %v596, %v673
    %v1371 = vmax.f32 %v602, %v679
    %v1373 = vrot.slane %v1370, 1
    %v1375 = vmax.f32 %v1370, %v1373
    %v1377 = vrot.slane %v1371, 1
    %v1379 = vmax.f32 %v1371, %v1377
    %v1381 = vrot.slane %v1375, 4
    %v1383 = vrot.slane %v1379, 4
    %v1384 = vrot.slane %v1375, 7
    %v1385 = vrot.slane %v1381, 7
    %v1386 = vrot.slane %v1379, 7
    %v1387 = vrot.slane %v1383, 7
    %v1392 = vsel %vm1054, %v1359, %v1384
    %v1393 = vsel %vm1054, %v1365, %v1385
    %v1394 = vsel %vm1054, %v1363, %v1386
    %v1395 = vsel %vm1054, %v1368, %v1387
    %vm1396 = vcmp.gt.f32.partialorder %v1392, 0.0
    %vm1397 = vcmp.gt.f32.partialorder %v1393, 0.0
    %vm1398 = vcmp.gt.f32.partialorder %v1394, 0.0
    %vm1399 = vcmp.gt.f32.partialorder %v1395, 0.0
    %v1400 = vmin.f32 %v1392, 0.0
    %v1401 = vmin.f32 %v1393, 0.0
    %v1402 = vmin.f32 %v1394, 0.0
    %v1403 = vmin.f32 %v1395, 0.0
    %v1404 = vmul.f32 %v1400, 1.442695
    %v1405 = vpow.pop %v1404
    %v1406 = vmul.f32 %v1401, 1.442695
    %v1407 = vpow.pop %v1406
    %v1408 = vmul.f32 %v1402, 1.442695
    %v1409 = vpow.pop %v1408
    %v1410 = vmul.f32 %v1403, 1.442695
    %v1411 = vpow.pop %v1410
    %v1412 = vsub.f32 %v1405, 1.0
    %v1413 = vsub.f32 %v1407, 1.0
    %v1414 = vsub.f32 %v1409, 1.0
    %v1415 = vsub.f32 %v1411, 1.0
    %v1416 = vsel %vm1396, %v1392, %v1412
    %v1417 = vsel %vm1397, %v1393, %v1413
    %v1418 = vsel %vm1398, %v1394, %v1414
    %v1419 = vsel %vm1399, %v1395, %v1415
    %v1420 = vlaneseq
    %v1421 = vshrl.u32 %v1420, 7
    %v1422 = vsub.s32 0, %v1421
    %v1423 = vrot.slane %v1336, %v1422
    %v1424 = vsub.f32 %v1416, %v1423
    %v1425 = vsub.f32 %v1417, %v1423
    %v1426 = vsub.f32 %v1418, %v1423
    %v1427 = vsub.f32 %v1419, %v1423
    %v1428 = vlaneseq
    %v1429 = vshrl.u32 %v1428, 7
    %v1430 = vsub.s32 1, %v1429
    %v1431 = vrot.slane %v1353, %v1430
    %v1432 = vmul.f32 %v1424, %v1431
    %v1433 = vmul.f32 %v1425, %v1431
    %v1434 = vmul.f32 %v1426, %v1431
    %v1435 = vmul.f32 %v1427, %v1431
    %v1436 = vld [vmem:[%s7] sm:$0xff]
    %v1437 = vld [vmem:[%s7 + $0x8] sm:$0xff]
    %v1438 = vld [vmem:[%s7 + $0x10] sm:$0xff]
    %v1439 = vld [vmem:[%s7 + $0x18] sm:$0xff]
    %v1440 = vld [vmem:[%s7 + $0x20] sm:$0xff]
    %v1441 = vld [vmem:[%s7 + $0x28] sm:$0xff]
    %v1442 = vld [vmem:[%s7 + $0x30] sm:$0xff]
    %v1443 = vld [vmem:[%s7 + $0x38] sm:$0xff]
    %v1444 = vld [vmem:[%s7 + $0x40] sm:$0xff]
    %v1445 = vld [vmem:[%s7 + $0x48] sm:$0xff]
    %v1446 = vld [vmem:[%s7 + $0x50] sm:$0xff]
    %v1447 = vld [vmem:[%s7 + $0x58] sm:$0xff]
    %v1448 = vld [vmem:[%s7 + $0x60] sm:$0xff]
    %v1449 = vld [vmem:[%s7 + $0x68] sm:$0xff]
    %v1450 = vld [vmem:[%s7 + $0x70] sm:$0xff]
    %v1451 = vld [vmem:[%s7 + $0x78] sm:$0xff]
    %v1452 = vld [vmem:[%s7 + $0x80] sm:$0xff]
    %v1453 = vld [vmem:[%s7 + $0x88] sm:$0xff]
    %v1454 = vld [vmem:[%s7 + $0x90] sm:$0xff]
    %v1455 = vld [vmem:[%s7 + $0x98] sm:$0xff]
    %v1456 = vld [vmem:[%s7 + $0xa0] sm:$0xff]
    %v1457 = vld [vmem:[%s7 + $0xa8] sm:$0xff]
    %v1458 = vld [vmem:[%s7 + $0xb0] sm:$0xff]
    %v1459 = vld [vmem:[%s7 + $0xb8] sm:$0xff]
    %v1460 = vld [vmem:[%s7 + $0xc0] sm:$0xff]
    %v1461 = vld [vmem:[%s7 + $0xc8] sm:$0xff]
    %v1462 = vld [vmem:[%s7 + $0xd0] sm:$0xff]
    %v1463 = vld [vmem:[%s7 + $0xd8] sm:$0xff]
    %v1464 = vld [vmem:[%s7 + $0xe0] sm:$0xff]
    %v1465 = vld [vmem:[%s7 + $0xe8] sm:$0xff]
    %v1466 = vld [vmem:[%s7 + $0xf0] sm:$0xff]
    %v1467 = vld [vmem:[%s7 + $0xf8] sm:$0xff]
    %v1468 = vld [vmem:[%s7 + $0x100] sm:$0xff]
    %v1469 = vld [vmem:[%s7 + $0x108] sm:$0xff]
    %v1470 = vld [vmem:[%s7 + $0x110] sm:$0xff]
    %v1471 = vld [vmem:[%s7 + $0x118] sm:$0xff]
    %v1472 = vld [vmem:[%s7 + $0x120] sm:$0xff]
    %v1473 = vld [vmem:[%s7 + $0x128] sm:$0xff]
    %v1474 = vld [vmem:[%s7 + $0x130] sm:$0xff]
    %v1475 = vld [vmem:[%s7 + $0x138] sm:$0xff]
    %v1476 = vld [vmem:[%s7 + $0x140] sm:$0xff]
    %v1477 = vld [vmem:[%s7 + $0x148] sm:$0xff]
    %v1478 = vld [vmem:[%s7 + $0x150] sm:$0xff]
    %v1479 = vld [vmem:[%s7 + $0x158] sm:$0xff]
    %v1480 = vld [vmem:[%s7 + $0x160] sm:$0xff]
    %v1481 = vld [vmem:[%s7 + $0x168] sm:$0xff]
    %v1482 = vld [vmem:[%s7 + $0x170] sm:$0xff]
    %v1483 = vld [vmem:[%s7 + $0x178] sm:$0xff]
    %v1484 = vld [vmem:[%s7 + $0x180] sm:$0xff]
    %v1485 = vld [vmem:[%s7 + $0x188] sm:$0xff]
    %v1486 = vld [vmem:[%s7 + $0x190] sm:$0xff]
    %v1487 = vld [vmem:[%s7 + $0x198] sm:$0xff]
    %v1488 = vld [vmem:[%s7 + $0x1a0] sm:$0xff]
    %v1489 = vld [vmem:[%s7 + $0x1a8] sm:$0xff]
    %v1490 = vld [vmem:[%s7 + $0x1b0] sm:$0xff]
    %v1491 = vld [vmem:[%s7 + $0x1b8] sm:$0xff]
    %v1492 = vld [vmem:[%s7 + $0x1c0] sm:$0xff]
    %v1493 = vld [vmem:[%s7 + $0x1c8] sm:$0xff]
    %v1494 = vld [vmem:[%s7 + $0x1d0] sm:$0xff]
    %v1495 = vld [vmem:[%s7 + $0x1d8] sm:$0xff]
    %v1496 = vld [vmem:[%s7 + $0x1e0] sm:$0xff]
    %v1497 = vld [vmem:[%s7 + $0x1e8] sm:$0xff]
    %v1498 = vld [vmem:[%s7 + $0x1f0] sm:$0xff]
    %v1499 = vld [vmem:[%s7 + $0x1f8] sm:$0xff]
    %v1500 = vld [vmem:[%s7 + $0x200] sm:$0xff]
    %v1501 = vld [vmem:[%s7 + $0x208] sm:$0xff]
    %v1502 = vld [vmem:[%s7 + $0x210] sm:$0xff]
    %v1503 = vld [vmem:[%s7 + $0x218] sm:$0xff]
    %v1504 = vld [vmem:[%s7 + $0x220] sm:$0xff]
    %v1505 = vld [vmem:[%s7 + $0x228] sm:$0xff]
    %v1506 = vld [vmem:[%s7 + $0x230] sm:$0xff]
    %v1507 = vld [vmem:[%s7 + $0x238] sm:$0xff]
    %v1508 = vld [vmem:[%s7 + $0x240] sm:$0xff]
    %v1509 = vld [vmem:[%s7 + $0x248] sm:$0xff]
    %v1510 = vld [vmem:[%s7 + $0x250] sm:$0xff]
    %v1511 = vld [vmem:[%s7 + $0x258] sm:$0xff]
    %v1512 = vld [vmem:[%s7 + $0x260] sm:$0xff]
    %v1513 = vld [vmem:[%s7 + $0x268] sm:$0xff]
    %v1514 = vld [vmem:[%s7 + $0x270] sm:$0xff]
    %v1515 = vld [vmem:[%s7 + $0x278] sm:$0xff]
    %v1516 = vld [vmem:[%s7 + $0x280] sm:$0xff]
    %v1517 = vld [vmem:[%s7 + $0x288] sm:$0xff]
    %v1518 = vld [vmem:[%s7 + $0x290] sm:$0xff]
    %v1519 = vld [vmem:[%s7 + $0x298] sm:$0xff]
    %v1520 = vld [vmem:[%s7 + $0x2a0] sm:$0xff]
    %v1521 = vld [vmem:[%s7 + $0x2a8] sm:$0xff]
    %v1522 = vld [vmem:[%s7 + $0x2b0] sm:$0xff]
    %v1523 = vld [vmem:[%s7 + $0x2b8] sm:$0xff]
    %v1524 = vld [vmem:[%s7 + $0x2c0] sm:$0xff]
    %v1525 = vld [vmem:[%s7 + $0x2c8] sm:$0xff]
    %v1526 = vld [vmem:[%s7 + $0x2d0] sm:$0xff]
    %v1527 = vld [vmem:[%s7 + $0x2d8] sm:$0xff]
    %v1528 = vld [vmem:[%s7 + $0x2e0] sm:$0xff]
    %v1529 = vld [vmem:[%s7 + $0x2e8] sm:$0xff]
    %v1530 = vld [vmem:[%s7 + $0x2f0] sm:$0xff]
    %v1531 = vld [vmem:[%s7 + $0x2f8] sm:$0xff]
    %v1532 = vld [vmem:[%s7 + $0x300] sm:$0xff]
    %v1533 = vld [vmem:[%s7 + $0x308] sm:$0xff]
    %v1534 = vld [vmem:[%s7 + $0x310] sm:$0xff]
    %v1535 = vld [vmem:[%s7 + $0x318] sm:$0xff]
    %v1536 = vld [vmem:[%s7 + $0x320] sm:$0xff]
    %v1537 = vld [vmem:[%s7 + $0x328] sm:$0xff]
    %v1538 = vld [vmem:[%s7 + $0x330] sm:$0xff]
    %v1539 = vld [vmem:[%s7 + $0x338] sm:$0xff]
    %v1540 = vld [vmem:[%s7 + $0x340] sm:$0xff]
    %v1541 = vld [vmem:[%s7 + $0x348] sm:$0xff]
    %v1542 = vld [vmem:[%s7 + $0x350] sm:$0xff]
    %v1543 = vld [vmem:[%s7 + $0x358] sm:$0xff]
    %v1544 = vld [vmem:[%s7 + $0x360] sm:$0xff]
    %v1545 = vld [vmem:[%s7 + $0x368] sm:$0xff]
    %v1546 = vld [vmem:[%s7 + $0x370] sm:$0xff]
    %v1547 = vld [vmem:[%s7 + $0x378] sm:$0xff]
    %v1548 = vld [vmem:[%s7 + $0x380] sm:$0xff]
    %v1549 = vld [vmem:[%s7 + $0x388] sm:$0xff]
    %v1550 = vld [vmem:[%s7 + $0x390] sm:$0xff]
    %v1551 = vld [vmem:[%s7 + $0x398] sm:$0xff]
    %v1552 = vld [vmem:[%s7 + $0x3a0] sm:$0xff]
    %v1553 = vld [vmem:[%s7 + $0x3a8] sm:$0xff]
    %v1554 = vld [vmem:[%s7 + $0x3b0] sm:$0xff]
    %v1555 = vld [vmem:[%s7 + $0x3b8] sm:$0xff]
    %v1556 = vld [vmem:[%s7 + $0x3c0] sm:$0xff]
    %v1557 = vld [vmem:[%s7 + $0x3c8] sm:$0xff]
    %v1558 = vld [vmem:[%s7 + $0x3d0] sm:$0xff]
    %v1559 = vld [vmem:[%s7 + $0x3d8] sm:$0xff]
    %v1560 = vld [vmem:[%s7 + $0x3e0] sm:$0xff]
    %v1561 = vld [vmem:[%s7 + $0x3e8] sm:$0xff]
    %v1562 = vld [vmem:[%s7 + $0x3f0] sm:$0xff]
    %v1563 = vld [vmem:[%s7 + $0x3f8] sm:$0xff]
    %v1564 = vld [vmem:[%s7 + $0x400] sm:$0xff]
    %v1565 = vld [vmem:[%s7 + $0x408] sm:$0xff]
    %v1566 = vld [vmem:[%s7 + $0x410] sm:$0xff]
    %v1567 = vld [vmem:[%s7 + $0x418] sm:$0xff]
    %v1568 = vld [vmem:[%s7 + $0x420] sm:$0xff]
    %v1569 = vld [vmem:[%s7 + $0x428] sm:$0xff]
    %v1570 = vld [vmem:[%s7 + $0x430] sm:$0xff]
    %v1571 = vld [vmem:[%s7 + $0x438] sm:$0xff]
    %v1572 = vld [vmem:[%s7 + $0x440] sm:$0xff]
    %v1573 = vld [vmem:[%s7 + $0x448] sm:$0xff]
    %v1574 = vld [vmem:[%s7 + $0x450] sm:$0xff]
    %v1575 = vld [vmem:[%s7 + $0x458] sm:$0xff]
    %v1576 = vld [vmem:[%s7 + $0x460] sm:$0xff]
    %v1577 = vld [vmem:[%s7 + $0x468] sm:$0xff]
    %v1578 = vld [vmem:[%s7 + $0x470] sm:$0xff]
    %v1579 = vld [vmem:[%s7 + $0x478] sm:$0xff]
    %v1580 = vld [vmem:[%s7 + $0x480] sm:$0xff]
    %v1581 = vld [vmem:[%s7 + $0x488] sm:$0xff]
    %v1582 = vld [vmem:[%s7 + $0x490] sm:$0xff]
    %v1583 = vld [vmem:[%s7 + $0x498] sm:$0xff]
    %v1584 = vld [vmem:[%s7 + $0x4a0] sm:$0xff]
    %v1585 = vld [vmem:[%s7 + $0x4a8] sm:$0xff]
    %v1586 = vld [vmem:[%s7 + $0x4b0] sm:$0xff]
    %v1587 = vld [vmem:[%s7 + $0x4b8] sm:$0xff]
    %v1588 = vld [vmem:[%s7 + $0x4c0] sm:$0xff]
    %v1589 = vld [vmem:[%s7 + $0x4c8] sm:$0xff]
    %v1590 = vld [vmem:[%s7 + $0x4d0] sm:$0xff]
    %v1591 = vld [vmem:[%s7 + $0x4d8] sm:$0xff]
    %v1592 = vld [vmem:[%s7 + $0x4e0] sm:$0xff]
    %v1593 = vld [vmem:[%s7 + $0x4e8] sm:$0xff]
    %v1594 = vld [vmem:[%s7 + $0x4f0] sm:$0xff]
    %v1595 = vld [vmem:[%s7 + $0x4f8] sm:$0xff]
    %v1596 = vld [vmem:[%s7 + $0x500] sm:$0xff]
    %v1597 = vld [vmem:[%s7 + $0x508] sm:$0xff]
    %v1598 = vld [vmem:[%s7 + $0x510] sm:$0xff]
    %v1599 = vld [vmem:[%s7 + $0x518] sm:$0xff]
    %v1600 = vld [vmem:[%s7 + $0x520] sm:$0xff]
    %v1601 = vld [vmem:[%s7 + $0x528] sm:$0xff]
    %v1602 = vld [vmem:[%s7 + $0x530] sm:$0xff]
    %v1603 = vld [vmem:[%s7 + $0x538] sm:$0xff]
    %v1604 = vld [vmem:[%s7 + $0x540] sm:$0xff]
    %v1605 = vld [vmem:[%s7 + $0x548] sm:$0xff]
    %v1606 = vld [vmem:[%s7 + $0x550] sm:$0xff]
    %v1607 = vld [vmem:[%s7 + $0x558] sm:$0xff]
    %v1608 = vld [vmem:[%s7 + $0x560] sm:$0xff]
    %v1609 = vld [vmem:[%s7 + $0x568] sm:$0xff]
    %v1610 = vld [vmem:[%s7 + $0x570] sm:$0xff]
    %v1611 = vld [vmem:[%s7 + $0x578] sm:$0xff]
    %v1612 = vld [vmem:[%s7 + $0x580] sm:$0xff]
    %v1613 = vld [vmem:[%s7 + $0x588] sm:$0xff]
    %v1614 = vld [vmem:[%s7 + $0x590] sm:$0xff]
    %v1615 = vld [vmem:[%s7 + $0x598] sm:$0xff]
    %v1616 = vld [vmem:[%s7 + $0x5a0] sm:$0xff]
    %v1617 = vld [vmem:[%s7 + $0x5a8] sm:$0xff]
    %v1618 = vld [vmem:[%s7 + $0x5b0] sm:$0xff]
    %v1619 = vld [vmem:[%s7 + $0x5b8] sm:$0xff]
    %v1620 = vld [vmem:[%s7 + $0x5c0] sm:$0xff]
    %v1621 = vld [vmem:[%s7 + $0x5c8] sm:$0xff]
    %v1622 = vld [vmem:[%s7 + $0x5d0] sm:$0xff]
    %v1623 = vld [vmem:[%s7 + $0x5d8] sm:$0xff]
    %v1624 = vld [vmem:[%s7 + $0x5e0] sm:$0xff]
    %v1625 = vld [vmem:[%s7 + $0x5e8] sm:$0xff]
    %v1626 = vld [vmem:[%s7 + $0x5f0] sm:$0xff]
    %v1627 = vld [vmem:[%s7 + $0x5f8] sm:$0xff]
    %v1628 = vld [vmem:[%s7 + $0x600] sm:$0xff]
    %v1629 = vld [vmem:[%s7 + $0x608] sm:$0xff]
    %v1630 = vld [vmem:[%s7 + $0x610] sm:$0xff]
    %v1631 = vld [vmem:[%s7 + $0x618] sm:$0xff]
    %v1632 = vld [vmem:[%s7 + $0x620] sm:$0xff]
    %v1633 = vld [vmem:[%s7 + $0x628] sm:$0xff]
    %v1634 = vld [vmem:[%s7 + $0x630] sm:$0xff]
    %v1635 = vld [vmem:[%s7 + $0x638] sm:$0xff]
    %v1636 = vld [vmem:[%s7 + $0x640] sm:$0xff]
    %v1637 = vld [vmem:[%s7 + $0x648] sm:$0xff]
    %v1638 = vld [vmem:[%s7 + $0x650] sm:$0xff]
    %v1639 = vld [vmem:[%s7 + $0x658] sm:$0xff]
    %v1640 = vld [vmem:[%s7 + $0x660] sm:$0xff]
    %v1641 = vld [vmem:[%s7 + $0x668] sm:$0xff]
    %v1642 = vld [vmem:[%s7 + $0x670] sm:$0xff]
    %v1643 = vld [vmem:[%s7 + $0x678] sm:$0xff]
    %v1644 = vld [vmem:[%s7 + $0x680] sm:$0xff]
    %v1645 = vld [vmem:[%s7 + $0x688] sm:$0xff]
    %v1646 = vld [vmem:[%s7 + $0x690] sm:$0xff]
    %v1647 = vld [vmem:[%s7 + $0x698] sm:$0xff]
    %v1648 = vld [vmem:[%s7 + $0x6a0] sm:$0xff]
    %v1649 = vld [vmem:[%s7 + $0x6a8] sm:$0xff]
    %v1650 = vld [vmem:[%s7 + $0x6b0] sm:$0xff]
    %v1651 = vld [vmem:[%s7 + $0x6b8] sm:$0xff]
    %v1652 = vld [vmem:[%s7 + $0x6c0] sm:$0xff]
    %v1653 = vld [vmem:[%s7 + $0x6c8] sm:$0xff]
    %v1654 = vld [vmem:[%s7 + $0x6d0] sm:$0xff]
    %v1655 = vld [vmem:[%s7 + $0x6d8] sm:$0xff]
    %v1656 = vld [vmem:[%s7 + $0x6e0] sm:$0xff]
    %v1657 = vld [vmem:[%s7 + $0x6e8] sm:$0xff]
    %v1658 = vld [vmem:[%s7 + $0x6f0] sm:$0xff]
    %v1659 = vld [vmem:[%s7 + $0x6f8] sm:$0xff]
    %v1660 = vld [vmem:[%s7 + $0x700] sm:$0xff]
    %v1661 = vld [vmem:[%s7 + $0x708] sm:$0xff]
    %v1662 = vld [vmem:[%s7 + $0x710] sm:$0xff]
    %v1663 = vld [vmem:[%s7 + $0x718] sm:$0xff]
    %v1664 = vld [vmem:[%s7 + $0x720] sm:$0xff]
    %v1665 = vld [vmem:[%s7 + $0x728] sm:$0xff]
    %v1666 = vld [vmem:[%s7 + $0x730] sm:$0xff]
    %v1667 = vld [vmem:[%s7 + $0x738] sm:$0xff]
    %v1668 = vld [vmem:[%s7 + $0x740] sm:$0xff]
    %v1669 = vld [vmem:[%s7 + $0x748] sm:$0xff]
    %v1670 = vld [vmem:[%s7 + $0x750] sm:$0xff]
    %v1671 = vld [vmem:[%s7 + $0x758] sm:$0xff]
    %v1672 = vld [vmem:[%s7 + $0x760] sm:$0xff]
    %v1673 = vld [vmem:[%s7 + $0x768] sm:$0xff]
    %v1674 = vld [vmem:[%s7 + $0x770] sm:$0xff]
    %v1675 = vld [vmem:[%s7 + $0x778] sm:$0xff]
    %v1676 = vld [vmem:[%s7 + $0x780] sm:$0xff]
    %v1677 = vld [vmem:[%s7 + $0x788] sm:$0xff]
    %v1678 = vld [vmem:[%s7 + $0x790] sm:$0xff]
    %v1679 = vld [vmem:[%s7 + $0x798] sm:$0xff]
    %v1680 = vld [vmem:[%s7 + $0x7a0] sm:$0xff]
    %v1681 = vld [vmem:[%s7 + $0x7a8] sm:$0xff]
    %v1682 = vld [vmem:[%s7 + $0x7b0] sm:$0xff]
    %v1683 = vld [vmem:[%s7 + $0x7b8] sm:$0xff]
    %v1684 = vld [vmem:[%s7 + $0x7c0] sm:$0xff]
    %v1685 = vld [vmem:[%s7 + $0x7c8] sm:$0xff]
    %v1686 = vld [vmem:[%s7 + $0x7d0] sm:$0xff]
    %v1687 = vld [vmem:[%s7 + $0x7d8] sm:$0xff]
    %v1688 = vld [vmem:[%s7 + $0x7e0] sm:$0xff]
    %v1689 = vld [vmem:[%s7 + $0x7e8] sm:$0xff]
    %v1690 = vld [vmem:[%s7 + $0x7f0] sm:$0xff]
    %v1691 = vld [vmem:[%s7 + $0x7f8] sm:$0xff]
    %v1692 = vld [vmem:[%s7 + $0x800] sm:$0xff]
    %v1693 = vld [vmem:[%s7 + $0x808] sm:$0xff]
    %v1694 = vld [vmem:[%s7 + $0x810] sm:$0xff]
    %v1695 = vld [vmem:[%s7 + $0x818] sm:$0xff]
    %v1696 = vld [vmem:[%s7 + $0x820] sm:$0xff]
    %v1697 = vld [vmem:[%s7 + $0x828] sm:$0xff]
    %v1698 = vld [vmem:[%s7 + $0x830] sm:$0xff]
    %v1699 = vld [vmem:[%s7 + $0x838] sm:$0xff]
    %v1700 = vld [vmem:[%s7 + $0x840] sm:$0xff]
    %v1701 = vld [vmem:[%s7 + $0x848] sm:$0xff]
    %v1702 = vld [vmem:[%s7 + $0x850] sm:$0xff]
    %v1703 = vld [vmem:[%s7 + $0x858] sm:$0xff]
    %v1704 = vld [vmem:[%s7 + $0x860] sm:$0xff]
    %v1705 = vld [vmem:[%s7 + $0x868] sm:$0xff]
    %v1706 = vld [vmem:[%s7 + $0x870] sm:$0xff]
    %v1707 = vld [vmem:[%s7 + $0x878] sm:$0xff]
    %v1708 = vld [vmem:[%s7 + $0x880] sm:$0xff]
    %v1709 = vld [vmem:[%s7 + $0x888] sm:$0xff]
    %v1710 = vld [vmem:[%s7 + $0x890] sm:$0xff]
    %v1711 = vld [vmem:[%s7 + $0x898] sm:$0xff]
    %v1712 = vld [vmem:[%s7 + $0x8a0] sm:$0xff]
    %v1713 = vld [vmem:[%s7 + $0x8a8] sm:$0xff]
    %v1714 = vld [vmem:[%s7 + $0x8b0] sm:$0xff]
    %v1715 = vld [vmem:[%s7 + $0x8b8] sm:$0xff]
    %v1716 = vld [vmem:[%s7 + $0x8c0] sm:$0xff]
    %v1717 = vld [vmem:[%s7 + $0x8c8] sm:$0xff]
    %v1718 = vld [vmem:[%s7 + $0x8d0] sm:$0xff]
    %v1719 = vld [vmem:[%s7 + $0x8d8] sm:$0xff]
    %v1720 = vld [vmem:[%s7 + $0x8e0] sm:$0xff]
    %v1721 = vld [vmem:[%s7 + $0x8e8] sm:$0xff]
    %v1722 = vld [vmem:[%s7 + $0x8f0] sm:$0xff]
    %v1723 = vld [vmem:[%s7 + $0x8f8] sm:$0xff]
    %v1724 = vld [vmem:[%s7 + $0x900] sm:$0xff]
    %v1725 = vld [vmem:[%s7 + $0x908] sm:$0xff]
    %v1726 = vld [vmem:[%s7 + $0x910] sm:$0xff]
    %v1727 = vld [vmem:[%s7 + $0x918] sm:$0xff]
    %v1728 = vld [vmem:[%s7 + $0x920] sm:$0xff]
    %v1729 = vld [vmem:[%s7 + $0x928] sm:$0xff]
    %v1730 = vld [vmem:[%s7 + $0x930] sm:$0xff]
    %v1731 = vld [vmem:[%s7 + $0x938] sm:$0xff]
    %v1732 = vld [vmem:[%s7 + $0x940] sm:$0xff]
    %v1733 = vld [vmem:[%s7 + $0x948] sm:$0xff]
    %v1734 = vld [vmem:[%s7 + $0x950] sm:$0xff]
    %v1735 = vld [vmem:[%s7 + $0x958] sm:$0xff]
    %v1736 = vld [vmem:[%s7 + $0x960] sm:$0xff]
    %v1737 = vld [vmem:[%s7 + $0x968] sm:$0xff]
    %v1738 = vld [vmem:[%s7 + $0x970] sm:$0xff]
    %v1739 = vld [vmem:[%s7 + $0x978] sm:$0xff]
    %v1740 = vld [vmem:[%s7 + $0x980] sm:$0xff]
    %v1741 = vld [vmem:[%s7 + $0x988] sm:$0xff]
    %v1742 = vld [vmem:[%s7 + $0x990] sm:$0xff]
    %v1743 = vld [vmem:[%s7 + $0x998] sm:$0xff]
    %v1744 = vld [vmem:[%s7 + $0x9a0] sm:$0xff]
    %v1745 = vld [vmem:[%s7 + $0x9a8] sm:$0xff]
    %v1746 = vld [vmem:[%s7 + $0x9b0] sm:$0xff]
    %v1747 = vld [vmem:[%s7 + $0x9b8] sm:$0xff]
    %v1748 = vld [vmem:[%s7 + $0x9c0] sm:$0xff]
    %v1749 = vld [vmem:[%s7 + $0x9c8] sm:$0xff]
    %v1750 = vld [vmem:[%s7 + $0x9d0] sm:$0xff]
    %v1751 = vld [vmem:[%s7 + $0x9d8] sm:$0xff]
    %v1752 = vld [vmem:[%s7 + $0x9e0] sm:$0xff]
    %v1753 = vld [vmem:[%s7 + $0x9e8] sm:$0xff]
    %v1754 = vld [vmem:[%s7 + $0x9f0] sm:$0xff]
    %v1755 = vld [vmem:[%s7 + $0x9f8] sm:$0xff]
    %v1756 = vld [vmem:[%s8] sm:$0x1f]
    %v1758 = vlaneseq
    %v1759 = vshrl.u32 %v1758, 7
    %v1760 = vsub.s32 0, %v1759
    %v1761 = vrot.slane %v1756, %v1760
    %v1762 = vlaneseq
    %v1763 = vshrl.u32 %v1762, 7
    %v1764 = vsub.s32 1, %v1763
    %v1765 = vrot.slane %v1756, %v1764
    %v1766 = vlaneseq
    %v1767 = vshrl.u32 %v1766, 7
    %v1768 = vsub.s32 2, %v1767
    %v1769 = vrot.slane %v1756, %v1768
    %v1770 = vlaneseq
    %v1771 = vshrl.u32 %v1770, 7
    %v1772 = vsub.s32 3, %v1771
    %v1773 = vrot.slane %v1756, %v1772
    %v1774 = vlaneseq
    %v1775 = vshrl.u32 %v1774, 7
    %v1776 = vsub.s32 4, %v1775
    %v1777 = vrot.slane %v1756, %v1776
    %1783 = vmatprep.subr.mxu0 %v1437
    %1784 = vmatpush1.msra.mxu0 %v1436
    %1785 = vmatprep.subr.mxu0 %v1442
    %1786 = vmatpush1.msra.mxu0 %v1441
    %1787 = vmatprep.subr.mxu0 %v1447
    %1788 = vmatpush1.msra.mxu0 %v1446
    %1789 = vmatprep.subr.mxu0 %v1452
    %1790 = vmatpush1.msra.mxu0 %v1451
    %1791 = vmatprep.subr.mxu0 %v1457
    %1792 = vmatpush1.msra.mxu0 %v1456
    %1793 = vmatprep.subr.mxu0 %v1462
    %1794 = vmatpush1.msra.mxu0 %v1461
    %1795 = vmatprep.subr.mxu0 %v1467
    %1796 = vmatpush1.msra.mxu0 %v1466
    %1797 = vmatprep.subr.mxu0 %v1472
    %1798 = vmatpush1.msra.mxu0 %v1471
    %1799 = vmatprep.subr.mxu0 %v1477
    %1800 = vmatpush1.msra.mxu0 %v1476
    %1801 = vmatprep.subr.mxu0 %v1482
    %1802 = vmatpush1.msra.mxu0 %v1481
    %1803 = vmatprep.subr.mxu0 %v1487
    %1804 = vmatpush1.msra.mxu0 %v1486
    %1805 = vmatprep.subr.mxu0 %v1492
    %1806 = vmatpush1.msra.mxu0 %v1491
    %1807 = vmatprep.subr.mxu0 %v1497
    %1808 = vmatpush1.msra.mxu0 %v1496
    %1809 = vmatprep.subr.mxu0 %v1502
    %1810 = vmatpush1.msra.mxu0 %v1501
    %1811 = vmatprep.subr.mxu0 %v1507
    %1812 = vmatpush1.msra.mxu0 %v1506
    %1813 = vmatprep.subr.mxu0 %v1512
    %1814 = vmatpush1.msra.mxu0 %v1511
    %1815 = vmatprep.subr.mxu0 %v1517
    %1816 = vmatpush1.msra.mxu0 %v1516
    %1817 = vmatprep.subr.mxu0 %v1522
    %1818 = vmatpush1.msra.mxu0 %v1521
    %1819 = vmatprep.subr.mxu0 %v1527
    %1820 = vmatpush1.msra.mxu0 %v1526
    %1821 = vmatprep.subr.mxu0 %v1532
    %1822 = vmatpush1.msra.mxu0 %v1531
    %1823 = vmatprep.subr.mxu0 %v1537
    %1824 = vmatpush1.msra.mxu0 %v1536
    %1825 = vmatprep.subr.mxu0 %v1542
    %1826 = vmatpush1.msra.mxu0 %v1541
    %1827 = vmatprep.subr.mxu0 %v1547
    %1828 = vmatpush1.msra.mxu0 %v1546
    %1829 = vmatprep.subr.mxu0 %v1552
    %1830 = vmatpush1.msra.mxu0 %v1551
    %1831 = vmatprep.subr.mxu0 %v1557
    %1832 = vmatpush1.msra.mxu0 %v1556
    %1833 = vmatprep.subr.mxu0 %v1562
    %1834 = vmatpush1.msra.mxu0 %v1561
    %1835 = vmatprep.subr.mxu0 %v1567
    %1836 = vmatpush1.msra.mxu0 %v1566
    %1837 = vmatprep.subr.mxu0 %v1572
    %1838 = vmatpush1.msra.mxu0 %v1571
    %1839 = vmatprep.subr.mxu0 %v1577
    %1840 = vmatpush1.msra.mxu0 %v1576
    %1841 = vmatprep.subr.mxu0 %v1582
    %1842 = vmatpush1.msra.mxu0 %v1581
    %1843 = vmatprep.subr.mxu0 %v1587
    %1844 = vmatpush1.msra.mxu0 %v1586
    %1845 = vmatprep.subr.mxu0 %v1592
    %1846 = vmatpush1.msra.mxu0 %v1591
    %1847 = vmatprep.mubr.f32.mxu0 %v1433
    %1848 = vmatmul.mubr.f32.gmra.mrb[0].mxu0 %v1432
    %v1849 = vpop.f32.mrb[0].mxu0
    %v1850 = vadd.f32 %v1761, %v1849
    %v1851 = vpop.f32.mrb[0].mxu0
    %v1852 = vadd.f32 %v1765, %v1851
    %1853 = vdwg.mxu0
    %1854 = vmatprep.subr.mxu0 %v1597
    %1855 = vmatpush1.msra.mxu0 %v1596
    %1856 = vmatprep.subr.mxu0 %v1602
    %1857 = vmatpush1.msra.mxu0 %v1601
    %1858 = vmatprep.subr.mxu0 %v1607
    %1859 = vmatpush1.msra.mxu0 %v1606
    %1860 = vmatprep.subr.mxu0 %v1612
    %1861 = vmatpush1.msra.mxu0 %v1611
    %1862 = vmatprep.subr.mxu0 %v1617
    %1863 = vmatpush1.msra.mxu0 %v1616
    %1864 = vmatprep.subr.mxu0 %v1622
    %1865 = vmatpush1.msra.mxu0 %v1621
    %1866 = vmatprep.subr.mxu0 %v1627
    %1867 = vmatpush1.msra.mxu0 %v1626
    %1868 = vmatprep.subr.mxu0 %v1632
    %1869 = vmatpush1.msra.mxu0 %v1631
    %1870 = vmatprep.subr.mxu0 %v1637
    %1871 = vmatpush1.msra.mxu0 %v1636
    %1872 = vmatprep.subr.mxu0 %v1642
    %1873 = vmatpush1.msra.mxu0 %v1641
    %1874 = vmatprep.subr.mxu0 %v1647
    %1875 = vmatpush1.msra.mxu0 %v1646
    %1876 = vmatprep.subr.mxu0 %v1652
    %1877 = vmatpush1.msra.mxu0 %v1651
    %1878 = vmatprep.subr.mxu0 %v1657
    %1879 = vmatpush1.msra.mxu0 %v1656
    %1880 = vmatprep.subr.mxu0 %v1662
    %1881 = vmatpush1.msra.mxu0 %v1661
    %1882 = vmatprep.subr.mxu0 %v1667
    %1883 = vmatpush1.msra.mxu0 %v1666
    %1884 = vmatprep.subr.mxu0 %v1672
    %1885 = vmatpush1.msra.mxu0 %v1671
    %1886 = vmatprep.subr.mxu0 %v1677
    %1887 = vmatpush1.msra.mxu0 %v1676
    %1888 = vmatprep.subr.mxu0 %v1682
    %1889 = vmatpush1.msra.mxu0 %v1681
    %1890 = vmatprep.subr.mxu0 %v1687
    %1891 = vmatpush1.msra.mxu0 %v1686
    %1892 = vmatprep.subr.mxu0 %v1692
    %1893 = vmatpush1.msra.mxu0 %v1691
    %1894 = vmatprep.subr.mxu0 %v1697
    %1895 = vmatpush1.msra.mxu0 %v1696
    %1896 = vmatprep.subr.mxu0 %v1702
    %1897 = vmatpush1.msra.mxu0 %v1701
    %1898 = vmatprep.subr.mxu0 %v1707
    %1899 = vmatpush1.msra.mxu0 %v1706
    %1900 = vmatprep.subr.mxu0 %v1712
    %1901 = vmatpush1.msra.mxu0 %v1711
    %1902 = vmatprep.subr.mxu0 %v1717
    %1903 = vmatpush1.msra.mxu0 %v1716
    %1904 = vmatprep.subr.mxu0 %v1722
    %1905 = vmatpush1.msra.mxu0 %v1721
    %1906 = vmatprep.subr.mxu0 %v1727
    %1907 = vmatpush1.msra.mxu0 %v1726
    %1908 = vmatprep.subr.mxu0 %v1732
    %1909 = vmatpush1.msra.mxu0 %v1731
    %1910 = vmatprep.subr.mxu0 %v1737
    %1911 = vmatpush1.msra.mxu0 %v1736
    %1912 = vmatprep.subr.mxu0 %v1742
    %1913 = vmatpush1.msra.mxu0 %v1741
    %1914 = vmatprep.subr.mxu0 %v1747
    %1915 = vmatpush1.msra.mxu0 %v1746
    %1916 = vmatprep.subr.mxu0 %v1752
    %1917 = vmatpush1.msra.mxu0 %v1751
    %1918 = vmatprep.mubr.f32.mxu0 %v1435
    %1919 = vmatmul.mubr.f32.gmra.mrb[0].mxu0 %v1434
    %v1920 = vpop.f32.mrb[0].mxu0
    %v1921 = vadd.f32 %v1850, %v1920
    %v1922 = vpop.f32.mrb[0].mxu0
    %v1923 = vadd.f32 %v1852, %v1922
    %1924 = vdwg.mxu0
    %1925 = vmatprep.subr.mxu0 %v1439
    %1926 = vmatpush1.msra.mxu0 %v1438
    %1927 = vmatprep.subr.mxu0 %v1444
    %1928 = vmatpush1.msra.mxu0 %v1443
    %1929 = vmatprep.subr.mxu0 %v1449
    %1930 = vmatpush1.msra.mxu0 %v1448
    %1931 = vmatprep.subr.mxu0 %v1454
    %1932 = vmatpush1.msra.mxu0 %v1453
    %1933 = vmatprep.subr.mxu0 %v1459
    %1934 = vmatpush1.msra.mxu0 %v1458
    %1935 = vmatprep.subr.mxu0 %v1464
    %1936 = vmatpush1.msra.mxu0 %v1463
    %1937 = vmatprep.subr.mxu0 %v1469
    %1938 = vmatpush1.msra.mxu0 %v1468
    %1939 = vmatprep.subr.mxu0 %v1474
    %1940 = vmatpush1.msra.mxu0 %v1473
    %1941 = vmatprep.subr.mxu0 %v1479
    %1942 = vmatpush1.msra.mxu0 %v1478
    %1943 = vmatprep.subr.mxu0 %v1484
    %1944 = vmatpush1.msra.mxu0 %v1483
    %1945 = vmatprep.subr.mxu0 %v1489
    %1946 = vmatpush1.msra.mxu0 %v1488
    %1947 = vmatprep.subr.mxu0 %v1494
    %1948 = vmatpush1.msra.mxu0 %v1493
    %1949 = vmatprep.subr.mxu0 %v1499
    %1950 = vmatpush1.msra.mxu0 %v1498
    %1951 = vmatprep.subr.mxu0 %v1504
    %1952 = vmatpush1.msra.mxu0 %v1503
    %1953 = vmatprep.subr.mxu0 %v1509
    %1954 = vmatpush1.msra.mxu0 %v1508
    %1955 = vmatprep.subr.mxu0 %v1514
    %1956 = vmatpush1.msra.mxu0 %v1513
    %1957 = vmatprep.subr.mxu0 %v1519
    %1958 = vmatpush1.msra.mxu0 %v1518
    %1959 = vmatprep.subr.mxu0 %v1524
    %1960 = vmatpush1.msra.mxu0 %v1523
    %1961 = vmatprep.subr.mxu0 %v1529
    %1962 = vmatpush1.msra.mxu0 %v1528
    %1963 = vmatprep.subr.mxu0 %v1534
    %1964 = vmatpush1.msra.mxu0 %v1533
    %1965 = vmatprep.subr.mxu0 %v1539
    %1966 = vmatpush1.msra.mxu0 %v1538
    %1967 = vmatprep.subr.mxu0 %v1544
    %1968 = vmatpush1.msra.mxu0 %v1543
    %1969 = vmatprep.subr.mxu0 %v1549
    %1970 = vmatpush1.msra.mxu0 %v1548
    %1971 = vmatprep.subr.mxu0 %v1554
    %1972 = vmatpush1.msra.mxu0 %v1553
    %1973 = vmatprep.subr.mxu0 %v1559
    %1974 = vmatpush1.msra.mxu0 %v1558
    %1975 = vmatprep.subr.mxu0 %v1564
    %1976 = vmatpush1.msra.mxu0 %v1563
    %1977 = vmatprep.subr.mxu0 %v1569
    %1978 = vmatpush1.msra.mxu0 %v1568
    %1979 = vmatprep.subr.mxu0 %v1574
    %1980 = vmatpush1.msra.mxu0 %v1573
    %1981 = vmatprep.subr.mxu0 %v1579
    %1982 = vmatpush1.msra.mxu0 %v1578
    %1983 = vmatprep.subr.mxu0 %v1584
    %1984 = vmatpush1.msra.mxu0 %v1583
    %1985 = vmatprep.subr.mxu0 %v1589
    %1986 = vmatpush1.msra.mxu0 %v1588
    %1987 = vmatprep.subr.mxu0 %v1594
    %1988 = vmatpush1.msra.mxu0 %v1593
    %1989 = vmatprep.mubr.f32.mxu0 %v1433
    %1990 = vmatmul.mubr.f32.gmra.mrb[0].mxu0 %v1432
    %v1991 = vpop.f32.mrb[0].mxu0
    %v1992 = vadd.f32 %v1769, %v1991
    %v1993 = vpop.f32.mrb[0].mxu0
    %v1994 = vadd.f32 %v1773, %v1993
    %1995 = vdwg.mxu0
    %1996 = vmatprep.subr.mxu0 %v1599
    %1997 = vmatpush1.msra.mxu0 %v1598
    %1998 = vmatprep.subr.mxu0 %v1604
    %1999 = vmatpush1.msra.mxu0 %v1603
    %2000 = vmatprep.subr.mxu0 %v1609
    %2001 = vmatpush1.msra.mxu0 %v1608
    %2002 = vmatprep.subr.mxu0 %v1614
    %2003 = vmatpush1.msra.mxu0 %v1613
    %2004 = vmatprep.subr.mxu0 %v1619
    %2005 = vmatpush1.msra.mxu0 %v1618
    %2006 = vmatprep.subr.mxu0 %v1624
    %2007 = vmatpush1.msra.mxu0 %v1623
    %2008 = vmatprep.subr.mxu0 %v1629
    %2009 = vmatpush1.msra.mxu0 %v1628
    %2010 = vmatprep.subr.mxu0 %v1634
    %2011 = vmatpush1.msra.mxu0 %v1633
    %2012 = vmatprep.subr.mxu0 %v1639
    %2013 = vmatpush1.msra.mxu0 %v1638
    %2014 = vmatprep.subr.mxu0 %v1644
    %2015 = vmatpush1.msra.mxu0 %v1643
    %2016 = vmatprep.subr.mxu0 %v1649
    %2017 = vmatpush1.msra.mxu0 %v1648
    %2018 = vmatprep.subr.mxu0 %v1654
    %2019 = vmatpush1.msra.mxu0 %v1653
    %2020 = vmatprep.subr.mxu0 %v1659
    %2021 = vmatpush1.msra.mxu0 %v1658
    %2022 = vmatprep.subr.mxu0 %v1664
    %2023 = vmatpush1.msra.mxu0 %v1663
    %2024 = vmatprep.subr.mxu0 %v1669
    %2025 = vmatpush1.msra.mxu0 %v1668
    %2026 = vmatprep.subr.mxu0 %v1674
    %2027 = vmatpush1.msra.mxu0 %v1673
    %2028 = vmatprep.subr.mxu0 %v1679
    %2029 = vmatpush1.msra.mxu0 %v1678
    %2030 = vmatprep.subr.mxu0 %v1684
    %2031 = vmatpush1.msra.mxu0 %v1683
    %2032 = vmatprep.subr.mxu0 %v1689
    %2033 = vmatpush1.msra.mxu0 %v1688
    %2034 = vmatprep.subr.mxu0 %v1694
    %2035 = vmatpush1.msra.mxu0 %v1693
    %2036 = vmatprep.subr.mxu0 %v1699
    %2037 = vmatpush1.msra.mxu0 %v1698
    %2038 = vmatprep.subr.mxu0 %v1704
    %2039 = vmatpush1.msra.mxu0 %v1703
    %2040 = vmatprep.subr.mxu0 %v1709
    %2041 = vmatpush1.msra.mxu0 %v1708
    %2042 = vmatprep.subr.mxu0 %v1714
    %2043 = vmatpush1.msra.mxu0 %v1713
    %2044 = vmatprep.subr.mxu0 %v1719
    %2045 = vmatpush1.msra.mxu0 %v1718
    %2046 = vmatprep.subr.mxu0 %v1724
    %2047 = vmatpush1.msra.mxu0 %v1723
    %2048 = vmatprep.subr.mxu0 %v1729
    %2049 = vmatpush1.msra.mxu0 %v1728
    %2050 = vmatprep.subr.mxu0 %v1734
    %2051 = vmatpush1.msra.mxu0 %v1733
    %2052 = vmatprep.subr.mxu0 %v1739
    %2053 = vmatpush1.msra.mxu0 %v1738
    %2054 = vmatprep.subr.mxu0 %v1744
    %2055 = vmatpush1.msra.mxu0 %v1743
    %2056 = vmatprep.subr.mxu0 %v1749
    %2057 = vmatpush1.msra.mxu0 %v1748
    %2058 = vmatprep.subr.mxu0 %v1754
    %2059 = vmatpush1.msra.mxu0 %v1753
    %2060 = vmatprep.mubr.f32.mxu0 %v1435
    %2061 = vmatmul.mubr.f32.gmra.mrb[0].mxu0 %v1434
    %v2062 = vpop.f32.mrb[0].mxu0
    %v2063 = vadd.f32 %v1992, %v2062
    %v2064 = vpop.f32.mrb[0].mxu0
    %v2065 = vadd.f32 %v1994, %v2064
    %2066 = vdwg.mxu0
    %2067 = vmatprep.subr.mxu0 0.0
    %2068 = vmatpush1.msra.mxu0 %v1440
    %2069 = vmatprep.subr.mxu0 0.0
    %2070 = vmatpush1.msra.mxu0 %v1445
    %2071 = vmatprep.subr.mxu0 0.0
    %2072 = vmatpush1.msra.mxu0 %v1450
    %2073 = vmatprep.subr.mxu0 0.0
    %2074 = vmatpush1.msra.mxu0 %v1455
    %2075 = vmatprep.subr.mxu0 0.0
    %2076 = vmatpush1.msra.mxu0 %v1460
    %2077 = vmatprep.subr.mxu0 0.0
    %2078 = vmatpush1.msra.mxu0 %v1465
    %2079 = vmatprep.subr.mxu0 0.0
    %2080 = vmatpush1.msra.mxu0 %v1470
    %2081 = vmatprep.subr.mxu0 0.0
    %2082 = vmatpush1.msra.mxu0 %v1475
    %2083 = vmatprep.subr.mxu0 0.0
    %2084 = vmatpush1.msra.mxu0 %v1480
    %2085 = vmatprep.subr.mxu0 0.0
    %2086 = vmatpush1.msra.mxu0 %v1485
    %2087 = vmatprep.subr.mxu0 0.0
    %2088 = vmatpush1.msra.mxu0 %v1490
    %2089 = vmatprep.subr.mxu0 0.0
    %2090 = vmatpush1.msra.mxu0 %v1495
    %2091 = vmatprep.subr.mxu0 0.0
    %2092 = vmatpush1.msra.mxu0 %v1500
    %2093 = vmatprep.subr.mxu0 0.0
    %2094 = vmatpush1.msra.mxu0 %v1505
    %2095 = vmatprep.subr.mxu0 0.0
    %2096 = vmatpush1.msra.mxu0 %v1510
    %2097 = vmatprep.subr.mxu0 0.0
    %2098 = vmatpush1.msra.mxu0 %v1515
    %2099 = vmatprep.subr.mxu0 0.0
    %2100 = vmatpush1.msra.mxu0 %v1520
    %2101 = vmatprep.subr.mxu0 0.0
    %2102 = vmatpush1.msra.mxu0 %v1525
    %2103 = vmatprep.subr.mxu0 0.0
    %2104 = vmatpush1.msra.mxu0 %v1530
    %2105 = vmatprep.subr.mxu0 0.0
    %2106 = vmatpush1.msra.mxu0 %v1535
    %2107 = vmatprep.subr.mxu0 0.0
    %2108 = vmatpush1.msra.mxu0 %v1540
    %2109 = vmatprep.subr.mxu0 0.0
    %2110 = vmatpush1.msra.mxu0 %v1545
    %2111 = vmatprep.subr.mxu0 0.0
    %2112 = vmatpush1.msra.mxu0 %v1550
    %2113 = vmatprep.subr.mxu0 0.0
    %2114 = vmatpush1.msra.mxu0 %v1555
    %2115 = vmatprep.subr.mxu0 0.0
    %2116 = vmatpush1.msra.mxu0 %v1560
    %2117 = vmatprep.subr.mxu0 0.0
    %2118 = vmatpush1.msra.mxu0 %v1565
    %2119 = vmatprep.subr.mxu0 0.0
    %2120 = vmatpush1.msra.mxu0 %v1570
    %2121 = vmatprep.subr.mxu0 0.0
    %2122 = vmatpush1.msra.mxu0 %v1575
    %2123 = vmatprep.subr.mxu0 0.0
    %2124 = vmatpush1.msra.mxu0 %v1580
    %2125 = vmatprep.subr.mxu0 0.0
    %2126 = vmatpush1.msra.mxu0 %v1585
    %2127 = vmatprep.subr.mxu0 0.0
    %2128 = vmatpush1.msra.mxu0 %v1590
    %2129 = vmatprep.subr.mxu0 0.0
    %2130 = vmatpush1.msra.mxu0 %v1595
    %2131 = vmatprep.mubr.f32.mxu0 %v1433
    %2132 = vmatmul.mubr.f32.gmra.mrb[0].mxu0 %v1432
    %v2133 = vpop.f32.mrb[0].mxu0
    %v2134 = vadd.f32 %v1777, %v2133
    %v2135 = vpop.f32.mrb[0].mxu0
    %2136 = vdwg.mxu0
    %2137 = vmatprep.subr.mxu0 0.0
    %2138 = vmatpush1.msra.mxu0 %v1600
    %2139 = vmatprep.subr.mxu0 0.0
    %2140 = vmatpush1.msra.mxu0 %v1605
    %2141 = vmatprep.subr.mxu0 0.0
    %2142 = vmatpush1.msra.mxu0 %v1610
    %2143 = vmatprep.subr.mxu0 0.0
    %2144 = vmatpush1.msra.mxu0 %v1615
    %2145 = vmatprep.subr.mxu0 0.0
    %2146 = vmatpush1.msra.mxu0 %v1620
    %2147 = vmatprep.subr.mxu0 0.0
    %2148 = vmatpush1.msra.mxu0 %v1625
    %2149 = vmatprep.subr.mxu0 0.0
    %2150 = vmatpush1.msra.mxu0 %v1630
    %2151 = vmatprep.subr.mxu0 0.0
    %2152 = vmatpush1.msra.mxu0 %v1635
    %2153 = vmatprep.subr.mxu0 0.0
    %2154 = vmatpush1.msra.mxu0 %v1640
    %2155 = vmatprep.subr.mxu0 0.0
    %2156 = vmatpush1.msra.mxu0 %v1645
    %2157 = vmatprep.subr.mxu0 0.0
    %2158 = vmatpush1.msra.mxu0 %v1650
    %2159 = vmatprep.subr.mxu0 0.0
    %2160 = vmatpush1.msra.mxu0 %v1655
    %2161 = vmatprep.subr.mxu0 0.0
    %2162 = vmatpush1.msra.mxu0 %v1660
    %2163 = vmatprep.subr.mxu0 0.0
    %2164 = vmatpush1.msra.mxu0 %v1665
    %2165 = vmatprep.subr.mxu0 0.0
    %2166 = vmatpush1.msra.mxu0 %v1670
    %2167 = vmatprep.subr.mxu0 0.0
    %2168 = vmatpush1.msra.mxu0 %v1675
    %2169 = vmatprep.subr.mxu0 0.0
    %2170 = vmatpush1.msra.mxu0 %v1680
    %2171 = vmatprep.subr.mxu0 0.0
    %2172 = vmatpush1.msra.mxu0 %v1685
    %2173 = vmatprep.subr.mxu0 0.0
    %2174 = vmatpush1.msra.mxu0 %v1690
    %2175 = vmatprep.subr.mxu0 0.0
    %2176 = vmatpush1.msra.mxu0 %v1695
    %2177 = vmatprep.subr.mxu0 0.0
    %2178 = vmatpush1.msra.mxu0 %v1700
    %2179 = vmatprep.subr.mxu0 0.0
    %2180 = vmatpush1.msra.mxu0 %v1705
    %2181 = vmatprep.subr.mxu0 0.0
    %2182 = vmatpush1.msra.mxu0 %v1710
    %2183 = vmatprep.subr.mxu0 0.0
    %2184 = vmatpush1.msra.mxu0 %v1715
    %2185 = vmatprep.subr.mxu0 0.0
    %2186 = vmatpush1.msra.mxu0 %v1720
    %2187 = vmatprep.subr.mxu0 0.0
    %2188 = vmatpush1.msra.mxu0 %v1725
    %2189 = vmatprep.subr.mxu0 0.0
    %2190 = vmatpush1.msra.mxu0 %v1730
    %2191 = vmatprep.subr.mxu0 0.0
    %2192 = vmatpush1.msra.mxu0 %v1735
    %2193 = vmatprep.subr.mxu0 0.0
    %2194 = vmatpush1.msra.mxu0 %v1740
    %2195 = vmatprep.subr.mxu0 0.0
    %2196 = vmatpush1.msra.mxu0 %v1745
    %2197 = vmatprep.subr.mxu0 0.0
    %2198 = vmatpush1.msra.mxu0 %v1750
    %2199 = vmatprep.subr.mxu0 0.0
    %2200 = vmatpush1.msra.mxu0 %v1755
    %2201 = vmatprep.mubr.f32.mxu0 %v1435
    %2202 = vmatmul.mubr.f32.gmra.mrb[0].mxu0 %v1434
    %v2203 = vpop.f32.mrb[0].mxu0
    %v2204 = vadd.f32 %v2134, %v2203
    %v2205 = vpop.f32.mrb[0].mxu0
    %2206 = vdwg.mxu0
    %vm2207 = vcmp.gt.f32.partialorder %v2063, 0.0
    %vm2208 = vcmp.gt.f32.partialorder %v2065, 0.0
    %vm2209 = vcmp.gt.f32.partialorder %v2204, 0.0
    %v2210 = vmin.f32 %v2063, 0.0
    %v2211 = vmin.f32 %v2065, 0.0
    %v2212 = vmin.f32 %v2204, 0.0
    %v2213 = vmul.f32 %v2210, 1.442695
    %v2214 = vpow.pop %v2213
    %v2215 = vmul.f32 %v2211, 1.442695
    %v2216 = vpow.pop %v2215
    %v2217 = vmul.f32 %v2212, 1.442695
    %v2218 = vpow.pop %v2217
    %v2219 = vsub.f32 %v2214, 1.0
    %v2220 = vsub.f32 %v2216, 1.0
    %v2221 = vsub.f32 %v2218, 1.0
    %v2222 = vsel %vm2207, %v2063, %v2219
    %v2223 = vsel %vm2208, %v2065, %v2220
    %v2224 = vsel %vm2209, %v2204, %v2221
    %vm2225 = vcmask 1041408
    %v2226 = vsel %vm2225, %v2222, 0.0
    %v2227 = vrot.slane %v2226, 4
    %v2228 = vadd.f32 %v2226, %v2227
    %v2229 = vrot.slane %v2228, 2
    %v2230 = vadd.f32 %v2228, %v2229
    %v2231 = vrot.slane %v2230, 1
    %v2232 = vadd.f32 %v2230, %v2231
    %v2233 = vsel %vm2225, %v2223, 0.0
    %v2234 = vrot.slane %v2233, 4
    %v2235 = vadd.f32 %v2233, %v2234
    %v2236 = vrot.slane %v2235, 2
    %v2237 = vadd.f32 %v2235, %v2236
    %v2238 = vrot.slane %v2237, 1
    %v2239 = vadd.f32 %v2237, %v2238
    %vm2240 = vcmask 123904
    %v2241 = vsel %vm2240, %v2224, 0.0
    %v2242 = vrot.slane %v2241, 4
    %v2243 = vadd.f32 %v2241, %v2242
    %v2244 = vrot.slane %v2243, 2
    %v2245 = vadd.f32 %v2243, %v2244
    %v2246 = vrot.slane %v2245, 1
    %v2247 = vadd.f32 %v2245, %v2246
    %v2248 = vmul.f32 %v2222, %v2222
    %v2249 = vmul.f32 %v2223, %v2223
    %v2250 = vmul.f32 %v2224, %v2224
    %v2251 = vsel %vm2225, %v2248, 0.0
    %v2252 = vrot.slane %v2251, 4
    %v2253 = vadd.f32 %v2251, %v2252
    %v2254 = vrot.slane %v2253, 2
    %v2255 = vadd.f32 %v2253, %v2254
    %v2256 = vrot.slane %v2255, 1
    %v2257 = vadd.f32 %v2255, %v2256
    %v2258 = vsel %vm2225, %v2249, 0.0
    %v2259 = vrot.slane %v2258, 4
    %v2260 = vadd.f32 %v2258, %v2259
    %v2261 = vrot.slane %v2260, 2
    %v2262 = vadd.f32 %v2260, %v2261
    %v2263 = vrot.slane %v2262, 1
    %v2264 = vadd.f32 %v2262, %v2263
    %v2265 = vsel %vm2240, %v2250, 0.0
    %v2266 = vrot.slane %v2265, 4
    %v2267 = vadd.f32 %v2265, %v2266
    %v2268 = vrot.slane %v2267, 2
    %v2269 = vadd.f32 %v2267, %v2268
    %v2270 = vrot.slane %v2269, 1
    %v2271 = vadd.f32 %v2269, %v2270
    %v2272 = vsel %vm1054, %v2232, %v2257
    %v2273 = vsel %vm1054, %v2239, %v2264
    %v2274 = vsel %vm1054, %v2247, %v2271
    %v2275 = vld [vmem:[%s9] sm:$0xff]
    %v2276 = vld [vmem:[%s9 + $0x8] sm:$0xff]
    %v2277 = vld [vmem:[%s9 + $0x10] sm:$0xff]
    %v2278 = vld [vmem:[%s9 + $0x18] sm:$0xff]
    %v2279 = vld [vmem:[%s9 + $0x20] sm:$0xff]
    %v2280 = vld [vmem:[%s9 + $0x28] sm:$0xff]
    %v2281 = vld [vmem:[%s9 + $0x30] sm:$0xff]
    %v2282 = vld [vmem:[%s9 + $0x38] sm:$0xff]
    %v2283 = vld [vmem:[%s9 + $0x40] sm:$0xff]
    %v2284 = vld [vmem:[%s9 + $0x48] sm:$0xff]
    %v2285 = vld [vmem:[%s9 + $0x50] sm:$0xff]
    %v2286 = vld [vmem:[%s9 + $0x58] sm:$0xff]
    %v2287 = vld [vmem:[%s9 + $0x60] sm:$0xff]
    %v2288 = vld [vmem:[%s9 + $0x68] sm:$0xff]
    %v2289 = vld [vmem:[%s9 + $0x70] sm:$0xff]
    %v2290 = vld [vmem:[%s9 + $0x78] sm:$0xff]
    %v2291 = vld [vmem:[%s9 + $0x80] sm:$0xff]
    %v2292 = vld [vmem:[%s9 + $0x88] sm:$0xff]
    %v2293 = vld [vmem:[%s9 + $0x90] sm:$0xff]
    %v2294 = vld [vmem:[%s9 + $0x98] sm:$0xff]
    %v2295 = vld [vmem:[%s9 + $0xa0] sm:$0xff]
    %v2296 = vld [vmem:[%s9 + $0xa8] sm:$0xff]
    %v2297 = vld [vmem:[%s9 + $0xb0] sm:$0xff]
    %v2298 = vld [vmem:[%s9 + $0xb8] sm:$0xff]
    %v2299 = vld [vmem:[%s9 + $0xc0] sm:$0xff]
    %v2300 = vld [vmem:[%s9 + $0xc8] sm:$0xff]
    %v2301 = vld [vmem:[%s9 + $0xd0] sm:$0xff]
    %v2302 = vld [vmem:[%s9 + $0xd8] sm:$0xff]
    %v2303 = vld [vmem:[%s9 + $0xe0] sm:$0xff]
    %v2304 = vld [vmem:[%s9 + $0xe8] sm:$0xff]
    %v2305 = vld [vmem:[%s9 + $0xf0] sm:$0xff]
    %v2306 = vld [vmem:[%s9 + $0xf8] sm:$0xff]
    %v2307 = vld [vmem:[%s9 + $0x100] sm:$0xff]
    %v2308 = vld [vmem:[%s9 + $0x108] sm:$0xff]
    %v2310 = vsel %vm58, %v2274, 0
    %2312 = vmatprep.subr.mxu0 0.0
    %2313 = vmatpush1.msra.mxu0 %v2275
    %2314 = vmatprep.subr.mxu0 0.0
    %2315 = vmatpush1.msra.mxu0 %v2276
    %2316 = vmatprep.subr.mxu0 0.0
    %2317 = vmatpush1.msra.mxu0 %v2277
    %2318 = vmatprep.subr.mxu0 0.0
    %2319 = vmatpush1.msra.mxu0 %v2278
    %2320 = vmatprep.subr.mxu0 0.0
    %2321 = vmatpush1.msra.mxu0 %v2279
    %2322 = vmatprep.subr.mxu0 0.0
    %2323 = vmatpush1.msra.mxu0 %v2280
    %2324 = vmatprep.subr.mxu0 0.0
    %2325 = vmatpush1.msra.mxu0 %v2281
    %2326 = vmatprep.subr.mxu0 0.0
    %2327 = vmatpush1.msra.mxu0 %v2282
    %2328 = vmatprep.subr.mxu0 0.0
    %2329 = vmatpush1.msra.mxu0 %v2283
    %2330 = vmatprep.subr.mxu0 0.0
    %2331 = vmatpush1.msra.mxu0 %v2284
    %2332 = vmatprep.subr.mxu0 0.0
    %2333 = vmatpush1.msra.mxu0 %v2285
    %2334 = vmatprep.subr.mxu0 0.0
    %2335 = vmatpush1.msra.mxu0 %v2286
    %2336 = vmatprep.subr.mxu0 0.0
    %2337 = vmatpush1.msra.mxu0 %v2287
    %2338 = vmatprep.subr.mxu0 0.0
    %2339 = vmatpush1.msra.mxu0 %v2288
    %2340 = vmatprep.subr.mxu0 0.0
    %2341 = vmatpush1.msra.mxu0 %v2289
    %2342 = vmatprep.subr.mxu0 0.0
    %2343 = vmatpush1.msra.mxu0 %v2290
    %2344 = vmatprep.subr.mxu0 0.0
    %2345 = vmatpush1.msra.mxu0 %v2291
    %2346 = vmatprep.subr.mxu0 0.0
    %2347 = vmatpush1.msra.mxu0 %v2292
    %2348 = vmatprep.subr.mxu0 0.0
    %2349 = vmatpush1.msra.mxu0 %v2293
    %2350 = vmatprep.subr.mxu0 0.0
    %2351 = vmatpush1.msra.mxu0 %v2294
    %2352 = vmatprep.subr.mxu0 0.0
    %2353 = vmatpush1.msra.mxu0 %v2295
    %2354 = vmatprep.subr.mxu0 0.0
    %2355 = vmatpush1.msra.mxu0 %v2296
    %2356 = vmatprep.subr.mxu0 0.0
    %2357 = vmatpush1.msra.mxu0 %v2297
    %2358 = vmatprep.subr.mxu0 0.0
    %2359 = vmatpush1.msra.mxu0 %v2298
    %2360 = vmatprep.subr.mxu0 0.0
    %2361 = vmatpush1.msra.mxu0 %v2299
    %2362 = vmatprep.subr.mxu0 0.0
    %2363 = vmatpush1.msra.mxu0 %v2300
    %2364 = vmatprep.subr.mxu0 0.0
    %2365 = vmatpush1.msra.mxu0 %v2301
    %2366 = vmatprep.subr.mxu0 0.0
    %2367 = vmatpush1.msra.mxu0 %v2302
    %2368 = vmatprep.subr.mxu0 0.0
    %2369 = vmatpush1.msra.mxu0 %v2303
    %2370 = vmatprep.subr.mxu0 0.0
    %2371 = vmatpush1.msra.mxu0 %v2304
    %2372 = vmatprep.subr.mxu0 0.0
    %2373 = vmatpush1.msra.mxu0 %v2305
    %2374 = vmatprep.subr.mxu0 0.0
    %2375 = vmatpush1.msra.mxu0 %v2306
    %2376 = vmatprep.mubr.f32.mxu0 %v2273
    %2377 = vmatmul.mubr.f32.gmra.mrb[0].mxu0 %v2272
    %v2378 = vpop.f32.mrb[0].mxu0
    %v2379 = vadd.f32 0.0, %v2378
    %v2380 = vpop.f32.mrb[0].mxu0
    %2381 = vdwg.mxu0
    %2382 = vmatprep.subr.mxu0 0.0
    %2383 = vmatpush1.msra.mxu0 %v2307
    %2384 = vmatprep.subr.mxu0 0.0
    %2385 = vmatpush1.msra.mxu0 %v2308
    %2386 = vmatprep.subr.mxu0 0.0
    %2387 = vmatpush1.msra.mxu0 0.0
    %2388 = vmatprep.subr.mxu0 0.0
    %2389 = vmatpush1.msra.mxu0 0.0
    %2390 = vmatprep.subr.mxu0 0.0
    %2391 = vmatpush1.msra.mxu0 0.0
    %2392 = vmatprep.subr.mxu0 0.0
    %2393 = vmatpush1.msra.mxu0 0.0
    %2394 = vmatprep.subr.mxu0 0.0
    %2395 = vmatpush1.msra.mxu0 0.0
    %2396 = vmatprep.subr.mxu0 0.0
    %2397 = vmatpush1.msra.mxu0 0.0
    %2398 = vmatprep.subr.mxu0 0.0
    %2399 = vmatpush1.msra.mxu0 0.0
    %2400 = vmatprep.subr.mxu0 0.0
    %2401 = vmatpush1.msra.mxu0 0.0
    %2402 = vmatprep.subr.mxu0 0.0
    %2403 = vmatpush1.msra.mxu0 0.0
    %2404 = vmatprep.subr.mxu0 0.0
    %2405 = vmatpush1.msra.mxu0 0.0
    %2406 = vmatprep.subr.mxu0 0.0
    %2407 = vmatpush1.msra.mxu0 0.0
    %2408 = vmatprep.subr.mxu0 0.0
    %2409 = vmatpush1.msra.mxu0 0.0
    %2410 = vmatprep.subr.mxu0 0.0
    %2411 = vmatpush1.msra.mxu0 0.0
    %2412 = vmatprep.subr.mxu0 0.0
    %2413 = vmatpush1.msra.mxu0 0.0
    %2414 = vmatprep.subr.mxu0 0.0
    %2415 = vmatpush1.msra.mxu0 0.0
    %2416 = vmatprep.subr.mxu0 0.0
    %2417 = vmatpush1.msra.mxu0 0.0
    %2418 = vmatprep.subr.mxu0 0.0
    %2419 = vmatpush1.msra.mxu0 0.0
    %2420 = vmatprep.subr.mxu0 0.0
    %2421 = vmatpush1.msra.mxu0 0.0
    %2422 = vmatprep.subr.mxu0 0.0
    %2423 = vmatpush1.msra.mxu0 0.0
    %2424 = vmatprep.subr.mxu0 0.0
    %2425 = vmatpush1.msra.mxu0 0.0
    %2426 = vmatprep.subr.mxu0 0.0
    %2427 = vmatpush1.msra.mxu0 0.0
    %2428 = vmatprep.subr.mxu0 0.0
    %2429 = vmatpush1.msra.mxu0 0.0
    %2430 = vmatprep.subr.mxu0 0.0
    %2431 = vmatpush1.msra.mxu0 0.0
    %2432 = vmatprep.subr.mxu0 0.0
    %2433 = vmatpush1.msra.mxu0 0.0
    %2434 = vmatprep.subr.mxu0 0.0
    %2435 = vmatpush1.msra.mxu0 0.0
    %2436 = vmatprep.subr.mxu0 0.0
    %2437 = vmatpush1.msra.mxu0 0.0
    %2438 = vmatprep.subr.mxu0 0.0
    %2439 = vmatpush1.msra.mxu0 0.0
    %2440 = vmatprep.subr.mxu0 0.0
    %2441 = vmatpush1.msra.mxu0 0.0
    %2442 = vmatprep.subr.mxu0 0.0
    %2443 = vmatpush1.msra.mxu0 0.0
    %2444 = vmatprep.subr.mxu0 0.0
    %2445 = vmatpush1.msra.mxu0 0.0
    %2446 = vmatprep.mubr.f32.mxu0 0.0
    %2447 = vmatmul.mubr.f32.gmra.mrb[0].mxu0 %v2310
    %v2448 = vpop.f32.mrb[0].mxu0
    %v2449 = vadd.f32 %v2379, %v2448
    %v2450 = vpop.f32.mrb[0].mxu0
    %2451 = vdwg.mxu0
    %v2452 = vmul.f32 %v2449, %v2449
    %v2454 = vrot.slane %v2452, 7
    %v2456 = vsub.f32 %v2449, %v2454
    %v2457 = vmax.f32 %v2456, 0.0
    %v2458 = vadd.f32 %v2457, 0.0
    %v2459 = vrsqrt.pop %v2458
    %2461 = vrot.lane.b32.xlu0 %v1921, 96
    %v2462 = vpop.permute.xlu0 %2461
    %v2464 = vmax.f32 %v1921, %v2462
    %2465 = vrot.lane.b32.xlu0 %v1921, 64
    %v2466 = vpop.permute.xlu0 %2465
    %v2468 = vmax.f32 %v2464, %v2466
    %2469 = vrot.lane.b32.xlu0 %v1921, 32
    %v2470 = vpop.permute.xlu0 %2469
    %v2472 = vmax.f32 %v2468, %v2470
    %v2473 = vmax.f32 %v2472, %v1923
    %2475 = vrot.lane.b32.xlu0 %v1923, 96
    %v2476 = vpop.permute.xlu0 %2475
    %v2478 = vmax.f32 %v2473, %v2476
    %2479 = vrot.lane.b32.xlu0 %v1923, 64
    %v2480 = vpop.permute.xlu0 %2479
    %v2482 = vmax.f32 %v2478, %v2480
    %2483 = vrot.lane.b32.xlu0 %v1923, 32
    %v2484 = vpop.permute.xlu0 %2483
    %v2486 = vmax.f32 %v2482, %v2484
    %vm2487 = vcmp.gt.f32.partialorder %v2486, 0.0
    %v2488 = vmin.f32 %v2486, 0.0
    %v2489 = vmul.f32 %v2488, 1.442695
    %v2490 = vpow.pop %v2489
    %v2491 = vsub.f32 %v2490, 1.0
    %v2492 = vsel %vm2487, %v2486, %v2491
    %v2493 = vlaneseq
    %v2494 = vshrl.u32 %v2493, 7
    %v2495 = vsub.s32 0, %v2494
    %v2496 = vrot.slane %v2449, %v2495
    %v2497 = vsub.f32 %v2492, %v2496
    %v2498 = vlaneseq
    %v2499 = vshrl.u32 %v2498, 7
    %v2500 = vsub.s32 1, %v2499
    %v2501 = vrot.slane %v2459, %v2500
    %v2502 = vmul.f32 %v2497, %v2501
    %v2503 = vld [vmem:[%s10] sm:$0xff]
    %v2504 = vld [vmem:[%s10 + $0x8] sm:$0xff]
    %v2505 = vld [vmem:[%s10 + $0x10] sm:$0xff]
    %v2506 = vld [vmem:[%s10 + $0x18] sm:$0xff]
    %v2507 = vld [vmem:[%s11] sm:$0x1]
    %v2509 = vlaneseq
    %v2510 = vshrl.u32 %v2509, 7
    %v2511 = vsub.s32 0, %v2510
    %v2512 = vrot.slane %v2507, %v2511
    %vm2514 = vcmask 261120
    %v2516 = vsel %vm2514, %v2502, 0
    %2518 = vmatprep.subr.mxu0 0.0
    %2519 = vmatpush1.msra.mxu0 %v2503
    %2520 = vmatprep.subr.mxu0 0.0
    %2521 = vmatpush1.msra.mxu0 %v2504
    %2522 = vmatprep.subr.mxu0 0.0
    %2523 = vmatpush1.msra.mxu0 %v2505
    %2524 = vmatprep.subr.mxu0 0.0
    %2525 = vmatpush1.msra.mxu0 %v2506
    %2526 = vmatprep.subr.mxu0 0.0
    %2527 = vmatpush1.msra.mxu0 0.0
    %2528 = vmatprep.subr.mxu0 0.0
    %2529 = vmatpush1.msra.mxu0 0.0
    %2530 = vmatprep.subr.mxu0 0.0
    %2531 = vmatpush1.msra.mxu0 0.0
    %2532 = vmatprep.subr.mxu0 0.0
    %2533 = vmatpush1.msra.mxu0 0.0
    %2534 = vmatprep.subr.mxu0 0.0
    %2535 = vmatpush1.msra.mxu0 0.0
    %2536 = vmatprep.subr.mxu0 0.0
    %2537 = vmatpush1.msra.mxu0 0.0
    %2538 = vmatprep.subr.mxu0 0.0
    %2539 = vmatpush1.msra.mxu0 0.0
    %2540 = vmatprep.subr.mxu0 0.0
    %2541 = vmatpush1.msra.mxu0 0.0
    %2542 = vmatprep.subr.mxu0 0.0
    %2543 = vmatpush1.msra.mxu0 0.0
    %2544 = vmatprep.subr.mxu0 0.0
    %2545 = vmatpush1.msra.mxu0 0.0
    %2546 = vmatprep.subr.mxu0 0.0
    %2547 = vmatpush1.msra.mxu0 0.0
    %2548 = vmatprep.subr.mxu0 0.0
    %2549 = vmatpush1.msra.mxu0 0.0
    %2550 = vmatprep.subr.mxu0 0.0
    %2551 = vmatpush1.msra.mxu0 0.0
    %2552 = vmatprep.subr.mxu0 0.0
    %2553 = vmatpush1.msra.mxu0 0.0
    %2554 = vmatprep.subr.mxu0 0.0
    %2555 = vmatpush1.msra.mxu0 0.0
    %2556 = vmatprep.subr.mxu0 0.0
    %2557 = vmatpush1.msra.mxu0 0.0
    %2558 = vmatprep.subr.mxu0 0.0
    %2559 = vmatpush1.msra.mxu0 0.0
    %2560 = vmatprep.subr.mxu0 0.0
    %2561 = vmatpush1.msra.mxu0 0.0
    %2562 = vmatprep.subr.mxu0 0.0
    %2563 = vmatpush1.msra.mxu0 0.0
    %2564 = vmatprep.subr.mxu0 0.0
    %2565 = vmatpush1.msra.mxu0 0.0
    %2566 = vmatprep.subr.mxu0 0.0
    %2567 = vmatpush1.msra.mxu0 0.0
    %2568 = vmatprep.subr.mxu0 0.0
    %2569 = vmatpush1.msra.mxu0 0.0
    %2570 = vmatprep.subr.mxu0 0.0
    %2571 = vmatpush1.msra.mxu0 0.0
    %2572 = vmatprep.subr.mxu0 0.0
    %2573 = vmatpush1.msra.mxu0 0.0
    %2574 = vmatprep.subr.mxu0 0.0
    %2575 = vmatpush1.msra.mxu0 0.0
    %2576 = vmatprep.subr.mxu0 0.0
    %2577 = vmatpush1.msra.mxu0 0.0
    %2578 = vmatprep.subr.mxu0 0.0
    %2579 = vmatpush1.msra.mxu0 0.0
    %2580 = vmatprep.subr.mxu0 0.0
    %2581 = vmatpush1.msra.mxu0 0.0
    %2582 = vmatprep.mubr.f32.mxu0 0.0
    %2583 = vmatmul.mubr.f32.gmra.mrb[0].mxu0 %v2516
    %v2584 = vpop.f32.mrb[0].mxu0
    %v2585 = vadd.f32 %v2512, %v2584
    %v2586 = vpop.f32.mrb[0].mxu0
    %2587 = vdwg.mxu0
    %vm2588 = vcmask 25600
    %2589 = vst.msk [vmem:[#allocation2] sm:$0x3] %vm2588, %v2585
    // Predicated region
    $region50: #{eegnet_forward.1} parent=1 // pred_check
      _
    $region51: #{eegnet_forward.1} parent=1 // pred_check_branch
      %2591 = sbr.rel (0) target = $region53
    $region52: #{eegnet_forward.1} parent=1 // pred_region
      %s2593 = ssub.s32 32, 32
      %2594 = vsyncadd [#allocation3], %s2593
      %s2596 = sshll.u32 [#allocation2], 4
      %s2597 = int_to_ptr.vmem [resolvable:$true] %s2596
      %2599 = dma.vmem_to_hbm [thread:$0]  %s2597, 32, %s12, [#allocation3]
    $region53: #{eegnet_forward.1} parent=1 // pred_fallthru
      _
    // Predicated region
    $region54: #{eegnet_forward.1} parent=1 // pred_check
      _
    $region55: #{eegnet_forward.1} parent=1 // pred_check_branch
      %2601 = sbr.rel (0) target = $region57
    $region56: #{eegnet_forward.1} parent=1 // pred_region
      %2602 = dma.done [#allocation3], 32
    $region57: #{eegnet_forward.1} parent=1 // pred_fallthru
      _
    %2603 = vsyncpa [#allocation3], 1

</llo_original>
